<compile_context>
chip_gen: v7x
topology: tpu7x:2x2x1
jax: 0.10.0
libtpu: 0.0.40
codegen_flags: <defaults>
</compile_context>

<pallas_src>
import jax
import jax.numpy as jnp
from jax.experimental import pallas as pl
from jax.experimental.pallas import tpu as pltpu

_EPS = 1e-5  # PyTorch LayerNorm default


def _vmem_limit_bytes():
    """Generation-gated scoped-VMEM budget (safe fallback: 32 MiB)."""
    try:
        cap = int(pltpu.get_tpu_info().vmem_capacity_bytes)
        return max(32 * 1024 * 1024, min(cap * 3 // 4, 96 * 1024 * 1024))
    except Exception:
        return 32 * 1024 * 1024


# -----------------------------------------------------------------------------
# Fused kernel: one grid step = one image.  Working buffer is the (R, T) slab
# with rows r = p*C + c (P-major) and lanes = T (token pixels).
#   stage 1: channel mix (contract C)  -> block-diagonal expanded weights
#   stage 2: patch   mix (contract P)  -> block-expanded weights
#   stage 3: token   mix (contract T)  -> plain right-matmul on the lane axis
# LayerNorm stats for stages 1/2 are computed with tiny f32 matmuls against
# precomputed averaging (m*) and expansion (e*) matrices.
# -----------------------------------------------------------------------------
def _fused_mixer_kernel(
        x_ref,
        m1_ref, e1_ref, g1_ref, a1_ref, w1c_ref, b1c_ref, w2c_ref, b2c_ref,
        m2_ref, e2_ref, g2_ref, a2_ref, w1p_ref, b1p_ref, w2p_ref, b2p_ref,
        g3_ref, a3_ref, w1t_ref, b1t_ref, w2t_ref, b2t_ref,
        o_ref):
    f32 = jnp.float32
    bf16 = jnp.bfloat16

    x = x_ref[0].astype(f32)                                   # (R, T)

    def grouped_stage(x, m_ref, e_ref, g_ref, a_ref,
                      w1_ref, b1_ref, w2_ref, b2_ref):
        # LayerNorm over a row-group (exact f32 stats via 0/1 / averaging mats)
        mu = jnp.dot(m_ref[...], x, preferred_element_type=f32)        # (G, T)
        xc = x - jnp.dot(e_ref[...], mu, preferred_element_type=f32)   # (R, T)
        var = jnp.dot(m_ref[...], xc * xc, preferred_element_type=f32)
        rstd = jnp.dot(e_ref[...], jax.lax.rsqrt(var + _EPS),
                       preferred_element_type=f32)                     # (R, T)
        ln = xc * rstd * g_ref[...] + a_ref[...]                        # (R, T)
        # MLP (bf16 MXU matmuls, f32 accumulation, f32 bias/ReLU/residual)
        h = jnp.dot(w1_ref[...], ln.astype(bf16),
                    preferred_element_type=f32)                         # (H, T)
        h = jnp.maximum(h + b1_ref[...], 0.0)
        y = jnp.dot(w2_ref[...], h.astype(bf16),
                    preferred_element_type=f32)                         # (R, T)
        return x + y + b2_ref[...]

    # stage 1: channel mixing (mix over C within each patch's C rows)
    x = grouped_stage(x, m1_ref, e1_ref, g1_ref, a1_ref,
                      w1c_ref, b1c_ref, w2c_ref, b2c_ref)
    # stage 2: patch mixing (mix over P for each channel)
    x = grouped_stage(x, m2_ref, e2_ref, g2_ref, a2_ref,
                      w1p_ref, b1p_ref, w2p_ref, b2p_ref)

    # stage 3: token mixing (mix over the lane axis T)
    mu = jnp.mean(x, axis=-1, keepdims=True)
    xc = x - mu
    var = jnp.mean(xc * xc, axis=-1, keepdims=True)
    ln = xc * jax.lax.rsqrt(var + _EPS) * g3_ref[...] + a3_ref[...]
    h = jnp.dot(ln.astype(bf16), w1t_ref[...], preferred_element_type=f32)
    h = jnp.maximum(h + b1t_ref[...], 0.0)
    y = jnp.dot(h.astype(bf16), w2t_ref[...], preferred_element_type=f32)

    o_ref[0] = (x + y + b2t_ref[...]).astype(o_ref.dtype)


def fused_mixer_forward(xp, params):
    """xp: (B, R, T) f32 patched activation (rows = p*C + c). Returns same."""
    B, R, T = xp.shape
    in_specs = [pl.BlockSpec((1, R, T), lambda b: (b, 0, 0))]
    in_specs += [pl.BlockSpec(a.shape, lambda b, n=a.ndim: (0,) * n)
                 for a in params]
    return pl.pallas_call(
        _fused_mixer_kernel,
        out_shape=jax.ShapeDtypeStruct((B, R, T), jnp.float32),
        grid=(B,),
        in_specs=in_specs,
        out_specs=pl.BlockSpec((1, R, T), lambda b: (b, 0, 0)),
        compiler_params=pltpu.CompilerParams(
            dimension_semantics=("parallel",),
            vmem_limit_bytes=_vmem_limit_bytes()),
    )(xp, *params)


# -----------------------------------------------------------------------------
# Pure-JAX torch-faithful reference (for the in-script correctness check).
# -----------------------------------------------------------------------------
def _mlp_mix_last(x, p, bf16):
    xf = x.astype(jnp.float32)
    mu = xf.mean(-1, keepdims=True)
    var = ((xf - mu) ** 2).mean(-1, keepdims=True)
    ln = (xf - mu) * jax.lax.rsqrt(var + _EPS) * p['gamma'] + p['beta']
    cast = (lambda a: a.astype(jnp.bfloat16)) if bf16 else (lambda a: a)
    h = jnp.einsum('...d,de->...e', cast(ln), cast(p['w1']),
                   preferred_element_type=jnp.float32)
    h = jnp.maximum(h + p['b1'], 0.0)
    y = jnp.einsum('...e,ed->...d', cast(h), cast(p['w2']),
                   preferred_element_type=jnp.float32)
    return y + p['b2']


# -----------------------------------------------------------------------------
# MLPMixerLayer: glue (patchify / unpatchify) in JAX, hot path in Pallas.
# -----------------------------------------------------------------------------
class MLPMixerLayerPallas:

    def __init__(self, embed_dims, patch_size=16, chw=(10, 64, 64),
                 expansion=2, key=jax.random.PRNGKey(0)):
        assert embed_dims == chw[0], "forward requires embed_dims == chw[0]"
        self.embed_dims = embed_dims
        self.patch_size = patch_size
        self.chw = chw
        self.expansion = expansion
        self.nph = chw[1] // patch_size
        self.npw = chw[2] // patch_size
        self.num_patches = self.nph * self.npw
        self.tokens = round(chw[1] * chw[2] / self.num_patches)
        assert self.tokens == patch_size * patch_size

        def make_params(k, d, e):
            k1, k2, k3, k4, k5, k6 = jax.random.split(k, 6)
            return dict(
                gamma=1.0 + 0.1 * jax.random.normal(k5, (d,), jnp.float32),
                beta=0.01 * jax.random.normal(k6, (d,), jnp.float32),
                w1=jax.random.normal(k1, (d, e), jnp.float32) * 0.05,
                b1=jax.random.normal(k2, (e,), jnp.float32) * 0.01,
                w2=jax.random.normal(k3, (e, d), jnp.float32) * 0.05,
                b2=jax.random.normal(k4, (d,), jnp.float32) * 0.01,
            )

        C, P, T = embed_dims, self.num_patches, self.tokens
        Ec, F, Et = int(C * expansion), int(P * expansion), int(T * expansion)
        kc, kp, kt = jax.random.split(key, 3)
        self.p_channel = make_params(kc, C, Ec)
        self.p_patch = make_params(kp, P, F)
        self.p_token = make_params(kt, T, Et)

        # ---- precompute block-expanded / fused kernel parameters (host side) ----
        f32, bf16 = jnp.float32, jnp.bfloat16
        R = P * C
        eyeP = jnp.eye(P, dtype=f32)
        eyeC = jnp.eye(C, dtype=f32)
        pc, pp, pt = self.p_channel, self.p_patch, self.p_token

        # stage 1 (channel mix): rows grouped per patch (contiguous C rows)
        m1 = jnp.kron(eyeP, jnp.full((1, C), 1.0 / C, f32))          # (P, R)
        e1 = jnp.kron(eyeP, jnp.ones((C, 1), f32))                   # (R, P)
        g1 = jnp.tile(pc['gamma'], P).reshape(R, 1)
        a1 = jnp.tile(pc['beta'], P).reshape(R, 1)
        w1c = jnp.kron(eyeP, pc['w1'].T).astype(bf16)                # (P*Ec, R)
        b1c = jnp.tile(pc['b1'], P).reshape(P * Ec, 1)
        w2c = jnp.kron(eyeP, pc['w2'].T).astype(bf16)                # (R, P*Ec)
        b2c = jnp.tile(pc['b2'], P).reshape(R, 1)

        # stage 2 (patch mix): rows of the same channel are strided -> handled
        # entirely by the block-expanded weight layout (no strided access).
        m2 = jnp.tile(eyeC, (1, P)) / P                              # (C, R)
        e2 = jnp.tile(eyeC, (P, 1))                                  # (R, C)
        g2 = jnp.repeat(pp['gamma'], C).reshape(R, 1)
        a2 = jnp.repeat(pp['beta'], C).reshape(R, 1)
        w1p = jnp.einsum('cd,pf->cfpd', eyeC, pp['w1']
                         ).reshape(C * F, R).astype(bf16)            # (C*F, R)
        b1p = jnp.tile(pp['b1'], C).reshape(C * F, 1)
        w2p = jnp.einsum('fp,cd->pcdf', pp['w2'], eyeC
                         ).reshape(R, C * F).astype(bf16)            # (R, C*F)
        b2p = jnp.repeat(pp['b2'], C).reshape(R, 1)

        # stage 3 (token mix): plain lane-axis MLP
        g3 = pt['gamma'].reshape(1, T)
        a3 = pt['beta'].reshape(1, T)
        w1t = pt['w1'].astype(bf16)                                  # (T, Et)
        b1t = pt['b1'].reshape(1, Et)
        w2t = pt['w2'].astype(bf16)                                  # (Et, T)
        b2t = pt['b2'].reshape(1, T)

        self.fused_params = (
            m1, e1, g1, a1, w1c, b1c, w2c, b2c,
            m2, e2, g2, a2, w1p, b1p, w2p, b2p,
            g3, a3, w1t, b1t, w2t, b2t)

    # ---- patchify / unpatchify (inherent to the module spec) -----------------
    def patchify(self, x):
        B, C, _H, _W = x.shape
        ps = self.patch_size
        x = x.reshape(B, C, self.nph, ps, self.npw, ps)
        x = jnp.transpose(x, (0, 2, 4, 1, 3, 5))
        return x.reshape(B, self.num_patches, C, ps * ps)

    def unpatchify(self, p):
        B = p.shape[0]
        ps = self.patch_size
        _, H, W = self.chw
        p = p.reshape(B, self.nph, self.npw, self.embed_dims, ps, ps)
        p = jnp.transpose(p, (0, 3, 1, 4, 2, 5))
        return p.reshape(B, self.embed_dims, H, W)

    # ---- forward (Pallas) -----------------------------------------------------
    def __call__(self, x):
        B = x.shape[0]
        C, P, T = self.embed_dims, self.num_patches, self.tokens
        xp = self.patchify(x).reshape(B, P * C, T)        # contiguous reshape
        out = fused_mixer_forward(xp, self.fused_params)  # (B, P*C, T) f32
        out = out.reshape(B, P, C, T)
        return self.unpatchify(out)

    # ---- torch-faithful JAX reference ------------------------------------------
    def reference(self, x, bf16=True):
        x = self.patchify(x).astype(jnp.float32)                       # (B,P,C,T)
        mc = _mlp_mix_last(jnp.swapaxes(x, 2, 3), self.p_channel, bf16)
        x = x + jnp.swapaxes(mc, 2, 3)
        mp = _mlp_mix_last(jnp.swapaxes(x, 1, 3), self.p_patch, bf16)
        x = x + jnp.swapaxes(mp, 1, 3)
        x = x + _mlp_mix_last(x, self.p_token, bf16)
        return self.unpatchify(x)


if __name__ == "__main__":
    # Small shapes consistent with the module (embed_dims must equal chw[0]).
    embed_dims = 4
    patch_size = 4
    chw = (4, 16, 16)
    B = 2  # even batch -> balanced 2-TensorCore split on v7x

    layer = MLPMixerLayerPallas(embed_dims, patch_size=patch_size, chw=chw,
                                expansion=2, key=jax.random.PRNGKey(0))
    x = jax.random.normal(jax.random.PRNGKey(0), (B,) + chw, jnp.float32)

    out = jax.block_until_ready(jax.jit(layer.__call__)(x))           # Pallas
    ref_bf16 = jax.block_until_ready(layer.reference(x, bf16=True))   # matched
    ref_f32 = jax.block_until_ready(layer.reference(x, bf16=False))   # full f32

    assert out.shape == (B,) + chw, out.shape
    err_matched = float(jnp.max(jnp.abs(out - ref_bf16)))
    err_f32 = float(jnp.max(jnp.abs(out - ref_f32)))
    assert err_matched < 5e-3, err_matched   # kernel vs bf16-matched reference
    assert err_f32 < 5e-2, err_f32           # kernel vs full-f32 reference

    print("KERNEL_OK")
</pallas_src>

<mosaic_0001>
module attributes {stable_mosaic.version = 11 : i64} {
  func.func @_fused_mixer_kernel(%arg0: i32, %arg1: memref<1x64x16xf32, #tpu.memory_space<vmem>>, %arg2: memref<16x64xf32, #tpu.memory_space<vmem>>, %arg3: memref<64x16xf32, #tpu.memory_space<vmem>>, %arg4: memref<64x1xf32, #tpu.memory_space<vmem>>, %arg5: memref<64x1xf32, #tpu.memory_space<vmem>>, %arg6: memref<128x64xbf16, #tpu.memory_space<vmem>>, %arg7: memref<128x1xf32, #tpu.memory_space<vmem>>, %arg8: memref<64x128xbf16, #tpu.memory_space<vmem>>, %arg9: memref<64x1xf32, #tpu.memory_space<vmem>>, %arg10: memref<4x64xf32, #tpu.memory_space<vmem>>, %arg11: memref<64x4xf32, #tpu.memory_space<vmem>>, %arg12: memref<64x1xf32, #tpu.memory_space<vmem>>, %arg13: memref<64x1xf32, #tpu.memory_space<vmem>>, %arg14: memref<128x64xbf16, #tpu.memory_space<vmem>>, %arg15: memref<128x1xf32, #tpu.memory_space<vmem>>, %arg16: memref<64x128xbf16, #tpu.memory_space<vmem>>, %arg17: memref<64x1xf32, #tpu.memory_space<vmem>>, %arg18: memref<1x16xf32, #tpu.memory_space<vmem>>, %arg19: memref<1x16xf32, #tpu.memory_space<vmem>>, %arg20: memref<16x32xbf16, #tpu.memory_space<vmem>>, %arg21: memref<1x32xf32, #tpu.memory_space<vmem>>, %arg22: memref<32x16xbf16, #tpu.memory_space<vmem>>, %arg23: memref<1x16xf32, #tpu.memory_space<vmem>>, %arg24: memref<1x64x16xf32, #tpu.memory_space<vmem>>) attributes {dimension_semantics = [#tpu.dimension_semantics<parallel>], iteration_bounds = array<i64: 2>, scalar_prefetch = 0 : i64, scratch_operands = 0 : i64, tpu.core_type = #tpu.core_type<tc>, window_params = [{transform_indices = @transform_0, window_bounds = array<i64: 1, 64, 16>}, {pipeline_mode = #tpu.pipeline_mode<synchronous>, transform_indices = @transform_1, window_bounds = array<i64: 16, 64>}, {pipeline_mode = #tpu.pipeline_mode<synchronous>, transform_indices = @transform_2, window_bounds = array<i64: 64, 16>}, {pipeline_mode = #tpu.pipeline_mode<synchronous>, transform_indices = @transform_3, window_bounds = array<i64: 64, 1>}, {pipeline_mode = #tpu.pipeline_mode<synchronous>, transform_indices = @transform_4, window_bounds = array<i64: 64, 1>}, {pipeline_mode = #tpu.pipeline_mode<synchronous>, transform_indices = @transform_5, window_bounds = array<i64: 128, 64>}, {pipeline_mode = #tpu.pipeline_mode<synchronous>, transform_indices = @transform_6, window_bounds = array<i64: 128, 1>}, {pipeline_mode = #tpu.pipeline_mode<synchronous>, transform_indices = @transform_7, window_bounds = array<i64: 64, 128>}, {pipeline_mode = #tpu.pipeline_mode<synchronous>, transform_indices = @transform_8, window_bounds = array<i64: 64, 1>}, {pipeline_mode = #tpu.pipeline_mode<synchronous>, transform_indices = @transform_9, window_bounds = array<i64: 4, 64>}, {pipeline_mode = #tpu.pipeline_mode<synchronous>, transform_indices = @transform_10, window_bounds = array<i64: 64, 4>}, {pipeline_mode = #tpu.pipeline_mode<synchronous>, transform_indices = @transform_11, window_bounds = array<i64: 64, 1>}, {pipeline_mode = #tpu.pipeline_mode<synchronous>, transform_indices = @transform_12, window_bounds = array<i64: 64, 1>}, {pipeline_mode = #tpu.pipeline_mode<synchronous>, transform_indices = @transform_13, window_bounds = array<i64: 128, 64>}, {pipeline_mode = #tpu.pipeline_mode<synchronous>, transform_indices = @transform_14, window_bounds = array<i64: 128, 1>}, {pipeline_mode = #tpu.pipeline_mode<synchronous>, transform_indices = @transform_15, window_bounds = array<i64: 64, 128>}, {pipeline_mode = #tpu.pipeline_mode<synchronous>, transform_indices = @transform_16, window_bounds = array<i64: 64, 1>}, {pipeline_mode = #tpu.pipeline_mode<synchronous>, transform_indices = @transform_17, window_bounds = array<i64: 1, 16>}, {pipeline_mode = #tpu.pipeline_mode<synchronous>, transform_indices = @transform_18, window_bounds = array<i64: 1, 16>}, {pipeline_mode = #tpu.pipeline_mode<synchronous>, transform_indices = @transform_19, window_bounds = array<i64: 16, 32>}, {pipeline_mode = #tpu.pipeline_mode<synchronous>, transform_indices = @transform_20, window_bounds = array<i64: 1, 32>}, {pipeline_mode = #tpu.pipeline_mode<synchronous>, transform_indices = @transform_21, window_bounds = array<i64: 32, 16>}, {pipeline_mode = #tpu.pipeline_mode<synchronous>, transform_indices = @transform_22, window_bounds = array<i64: 1, 16>}, {transform_indices = @transform_23, window_bounds = array<i64: 1, 64, 16>}]} {
    %c0 = arith.constant 0 : index
    %c0_0 = arith.constant 0 : index
    %c0_1 = arith.constant 0 : index
    %0 = vector.load %arg1[%c0, %c0_0, %c0_1] : memref<1x64x16xf32, #tpu.memory_space<vmem>>, vector<1x64x16xf32>
    %1 = vector.shape_cast %0 : vector<1x64x16xf32> to vector<64x16xf32>
    %c0_2 = arith.constant 0 : index
    %c0_3 = arith.constant 0 : index
    %2 = vector.load %arg2[%c0_2, %c0_3] : memref<16x64xf32, #tpu.memory_space<vmem>>, vector<16x64xf32>
    %cst = arith.constant dense<0.000000e+00> : vector<16x16xf32>
    %3 = tpu.matmul %2, %1, %cst {dimension_numbers = #tpu.dot_dimension_numbers<[1], [0], [0], [1], [0, 0, 1, 1], [], []>} : vector<16x64xf32>, vector<64x16xf32>, vector<16x16xf32> -> vector<16x16xf32>
    %c0_4 = arith.constant 0 : index
    %c0_5 = arith.constant 0 : index
    %4 = vector.load %arg3[%c0_4, %c0_5] : memref<64x16xf32, #tpu.memory_space<vmem>>, vector<64x16xf32>
    %cst_6 = arith.constant dense<0.000000e+00> : vector<64x16xf32>
    %5 = tpu.matmul %4, %3, %cst_6 {dimension_numbers = #tpu.dot_dimension_numbers<[1], [0], [0], [1], [0, 0, 1, 1], [], []>} : vector<64x16xf32>, vector<16x16xf32>, vector<64x16xf32> -> vector<64x16xf32>
    %6 = arith.subf %1, %5 : vector<64x16xf32>
    %c0_7 = arith.constant 0 : index
    %c0_8 = arith.constant 0 : index
    %7 = vector.load %arg2[%c0_7, %c0_8] : memref<16x64xf32, #tpu.memory_space<vmem>>, vector<16x64xf32>
    %8 = arith.mulf %6, %6 : vector<64x16xf32>
    %cst_9 = arith.constant dense<0.000000e+00> : vector<16x16xf32>
    %9 = tpu.matmul %7, %8, %cst_9 {dimension_numbers = #tpu.dot_dimension_numbers<[1], [0], [0], [1], [0, 0, 1, 1], [], []>} : vector<16x64xf32>, vector<64x16xf32>, vector<16x16xf32> -> vector<16x16xf32>
    %c0_10 = arith.constant 0 : index
    %c0_11 = arith.constant 0 : index
    %10 = vector.load %arg3[%c0_10, %c0_11] : memref<64x16xf32, #tpu.memory_space<vmem>>, vector<64x16xf32>
    %cst_12 = arith.constant 9.99999974E-6 : f32
    %11 = vector.broadcast %cst_12 : f32 to vector<16x16xf32>
    %12 = arith.addf %9, %11 : vector<16x16xf32>
    %13 = math.rsqrt %12 : vector<16x16xf32>
    %cst_13 = arith.constant dense<0.000000e+00> : vector<64x16xf32>
    %14 = tpu.matmul %10, %13, %cst_13 {dimension_numbers = #tpu.dot_dimension_numbers<[1], [0], [0], [1], [0, 0, 1, 1], [], []>} : vector<64x16xf32>, vector<16x16xf32>, vector<64x16xf32> -> vector<64x16xf32>
    %15 = arith.mulf %6, %14 : vector<64x16xf32>
    %c0_14 = arith.constant 0 : index
    %c0_15 = arith.constant 0 : index
    %16 = vector.load %arg4[%c0_14, %c0_15] : memref<64x1xf32, #tpu.memory_space<vmem>>, vector<64x1xf32>
    %17 = vector.broadcast %16 : vector<64x1xf32> to vector<64x16xf32>
    %18 = arith.mulf %15, %17 : vector<64x16xf32>
    %c0_16 = arith.constant 0 : index
    %c0_17 = arith.constant 0 : index
    %19 = vector.load %arg5[%c0_16, %c0_17] : memref<64x1xf32, #tpu.memory_space<vmem>>, vector<64x1xf32>
    %20 = vector.broadcast %19 : vector<64x1xf32> to vector<64x16xf32>
    %21 = arith.addf %18, %20 : vector<64x16xf32>
    %c0_18 = arith.constant 0 : index
    %c0_19 = arith.constant 0 : index
    %22 = vector.load %arg6[%c0_18, %c0_19] : memref<128x64xbf16, #tpu.memory_space<vmem>>, vector<128x64xbf16>
    %23 = arith.truncf %21 : vector<64x16xf32> to vector<64x16xbf16>
    %cst_20 = arith.constant dense<0.000000e+00> : vector<128x16xf32>
    %24 = tpu.matmul %22, %23, %cst_20 {dimension_numbers = #tpu.dot_dimension_numbers<[1], [0], [0], [1], [0, 0, 1, 1], [], []>} : vector<128x64xbf16>, vector<64x16xbf16>, vector<128x16xf32> -> vector<128x16xf32>
    %c0_21 = arith.constant 0 : index
    %c0_22 = arith.constant 0 : index
    %25 = vector.load %arg7[%c0_21, %c0_22] : memref<128x1xf32, #tpu.memory_space<vmem>>, vector<128x1xf32>
    %26 = vector.broadcast %25 : vector<128x1xf32> to vector<128x16xf32>
    %27 = arith.addf %24, %26 : vector<128x16xf32>
    %cst_23 = arith.constant 0.000000e+00 : f32
    %28 = vector.broadcast %cst_23 : f32 to vector<128x16xf32>
    %29 = arith.maximumf %27, %28 : vector<128x16xf32>
    %c0_24 = arith.constant 0 : index
    %c0_25 = arith.constant 0 : index
    %30 = vector.load %arg8[%c0_24, %c0_25] : memref<64x128xbf16, #tpu.memory_space<vmem>>, vector<64x128xbf16>
    %31 = arith.truncf %29 : vector<128x16xf32> to vector<128x16xbf16>
    %cst_26 = arith.constant dense<0.000000e+00> : vector<64x16xf32>
    %32 = tpu.matmul %30, %31, %cst_26 {dimension_numbers = #tpu.dot_dimension_numbers<[1], [0], [0], [1], [0, 0, 1, 1], [], []>} : vector<64x128xbf16>, vector<128x16xbf16>, vector<64x16xf32> -> vector<64x16xf32>
    %33 = arith.addf %1, %32 : vector<64x16xf32>
    %c0_27 = arith.constant 0 : index
    %c0_28 = arith.constant 0 : index
    %34 = vector.load %arg9[%c0_27, %c0_28] : memref<64x1xf32, #tpu.memory_space<vmem>>, vector<64x1xf32>
    %35 = vector.broadcast %34 : vector<64x1xf32> to vector<64x16xf32>
    %36 = arith.addf %33, %35 : vector<64x16xf32>
    %c0_29 = arith.constant 0 : index
    %c0_30 = arith.constant 0 : index
    %37 = vector.load %arg10[%c0_29, %c0_30] : memref<4x64xf32, #tpu.memory_space<vmem>>, vector<4x64xf32>
    %cst_31 = arith.constant dense<0.000000e+00> : vector<4x16xf32>
    %38 = tpu.matmul %37, %36, %cst_31 {dimension_numbers = #tpu.dot_dimension_numbers<[1], [0], [0], [1], [0, 0, 1, 1], [], []>} : vector<4x64xf32>, vector<64x16xf32>, vector<4x16xf32> -> vector<4x16xf32>
    %c0_32 = arith.constant 0 : index
    %c0_33 = arith.constant 0 : index
    %39 = vector.load %arg11[%c0_32, %c0_33] : memref<64x4xf32, #tpu.memory_space<vmem>>, vector<64x4xf32>
    %cst_34 = arith.constant dense<0.000000e+00> : vector<64x16xf32>
    %40 = tpu.matmul %39, %38, %cst_34 {dimension_numbers = #tpu.dot_dimension_numbers<[1], [0], [0], [1], [0, 0, 1, 1], [], []>} : vector<64x4xf32>, vector<4x16xf32>, vector<64x16xf32> -> vector<64x16xf32>
    %41 = arith.subf %36, %40 : vector<64x16xf32>
    %c0_35 = arith.constant 0 : index
    %c0_36 = arith.constant 0 : index
    %42 = vector.load %arg10[%c0_35, %c0_36] : memref<4x64xf32, #tpu.memory_space<vmem>>, vector<4x64xf32>
    %43 = arith.mulf %41, %41 : vector<64x16xf32>
    %cst_37 = arith.constant dense<0.000000e+00> : vector<4x16xf32>
    %44 = tpu.matmul %42, %43, %cst_37 {dimension_numbers = #tpu.dot_dimension_numbers<[1], [0], [0], [1], [0, 0, 1, 1], [], []>} : vector<4x64xf32>, vector<64x16xf32>, vector<4x16xf32> -> vector<4x16xf32>
    %c0_38 = arith.constant 0 : index
    %c0_39 = arith.constant 0 : index
    %45 = vector.load %arg11[%c0_38, %c0_39] : memref<64x4xf32, #tpu.memory_space<vmem>>, vector<64x4xf32>
    %cst_40 = arith.constant 9.99999974E-6 : f32
    %46 = vector.broadcast %cst_40 : f32 to vector<4x16xf32>
    %47 = arith.addf %44, %46 : vector<4x16xf32>
    %48 = math.rsqrt %47 : vector<4x16xf32>
    %cst_41 = arith.constant dense<0.000000e+00> : vector<64x16xf32>
    %49 = tpu.matmul %45, %48, %cst_41 {dimension_numbers = #tpu.dot_dimension_numbers<[1], [0], [0], [1], [0, 0, 1, 1], [], []>} : vector<64x4xf32>, vector<4x16xf32>, vector<64x16xf32> -> vector<64x16xf32>
    %50 = arith.mulf %41, %49 : vector<64x16xf32>
    %c0_42 = arith.constant 0 : index
    %c0_43 = arith.constant 0 : index
    %51 = vector.load %arg12[%c0_42, %c0_43] : memref<64x1xf32, #tpu.memory_space<vmem>>, vector<64x1xf32>
    %52 = vector.broadcast %51 : vector<64x1xf32> to vector<64x16xf32>
    %53 = arith.mulf %50, %52 : vector<64x16xf32>
    %c0_44 = arith.constant 0 : index
    %c0_45 = arith.constant 0 : index
    %54 = vector.load %arg13[%c0_44, %c0_45] : memref<64x1xf32, #tpu.memory_space<vmem>>, vector<64x1xf32>
    %55 = vector.broadcast %54 : vector<64x1xf32> to vector<64x16xf32>
    %56 = arith.addf %53, %55 : vector<64x16xf32>
    %c0_46 = arith.constant 0 : index
    %c0_47 = arith.constant 0 : index
    %57 = vector.load %arg14[%c0_46, %c0_47] : memref<128x64xbf16, #tpu.memory_space<vmem>>, vector<128x64xbf16>
    %58 = arith.truncf %56 : vector<64x16xf32> to vector<64x16xbf16>
    %cst_48 = arith.constant dense<0.000000e+00> : vector<128x16xf32>
    %59 = tpu.matmul %57, %58, %cst_48 {dimension_numbers = #tpu.dot_dimension_numbers<[1], [0], [0], [1], [0, 0, 1, 1], [], []>} : vector<128x64xbf16>, vector<64x16xbf16>, vector<128x16xf32> -> vector<128x16xf32>
    %c0_49 = arith.constant 0 : index
    %c0_50 = arith.constant 0 : index
    %60 = vector.load %arg15[%c0_49, %c0_50] : memref<128x1xf32, #tpu.memory_space<vmem>>, vector<128x1xf32>
    %61 = vector.broadcast %60 : vector<128x1xf32> to vector<128x16xf32>
    %62 = arith.addf %59, %61 : vector<128x16xf32>
    %cst_51 = arith.constant 0.000000e+00 : f32
    %63 = vector.broadcast %cst_51 : f32 to vector<128x16xf32>
    %64 = arith.maximumf %62, %63 : vector<128x16xf32>
    %c0_52 = arith.constant 0 : index
    %c0_53 = arith.constant 0 : index
    %65 = vector.load %arg16[%c0_52, %c0_53] : memref<64x128xbf16, #tpu.memory_space<vmem>>, vector<64x128xbf16>
    %66 = arith.truncf %64 : vector<128x16xf32> to vector<128x16xbf16>
    %cst_54 = arith.constant dense<0.000000e+00> : vector<64x16xf32>
    %67 = tpu.matmul %65, %66, %cst_54 {dimension_numbers = #tpu.dot_dimension_numbers<[1], [0], [0], [1], [0, 0, 1, 1], [], []>} : vector<64x128xbf16>, vector<128x16xbf16>, vector<64x16xf32> -> vector<64x16xf32>
    %68 = arith.addf %36, %67 : vector<64x16xf32>
    %c0_55 = arith.constant 0 : index
    %c0_56 = arith.constant 0 : index
    %69 = vector.load %arg17[%c0_55, %c0_56] : memref<64x1xf32, #tpu.memory_space<vmem>>, vector<64x1xf32>
    %70 = vector.broadcast %69 : vector<64x1xf32> to vector<64x16xf32>
    %71 = arith.addf %68, %70 : vector<64x16xf32>
    %cst_57 = arith.constant dense<0.000000e+00> : vector<64xf32>
    %72 = vector.multi_reduction <add>, %71, %cst_57 [1] : vector<64x16xf32> to vector<64xf32>
    %73 = vector.shape_cast %72 : vector<64xf32> to vector<64x1xf32>
    %cst_58 = arith.constant 1.600000e+01 : f32
    %74 = vector.broadcast %cst_58 : f32 to vector<64x1xf32>
    %75 = arith.divf %73, %74 : vector<64x1xf32>
    %76 = vector.broadcast %75 : vector<64x1xf32> to vector<64x16xf32>
    %77 = arith.subf %71, %76 : vector<64x16xf32>
    %78 = arith.mulf %77, %77 : vector<64x16xf32>
    %cst_59 = arith.constant dense<0.000000e+00> : vector<64xf32>
    %79 = vector.multi_reduction <add>, %78, %cst_59 [1] : vector<64x16xf32> to vector<64xf32>
    %80 = vector.shape_cast %79 : vector<64xf32> to vector<64x1xf32>
    %cst_60 = arith.constant 1.600000e+01 : f32
    %81 = vector.broadcast %cst_60 : f32 to vector<64x1xf32>
    %82 = arith.divf %80, %81 : vector<64x1xf32>
    %cst_61 = arith.constant 9.99999974E-6 : f32
    %83 = vector.broadcast %cst_61 : f32 to vector<64x1xf32>
    %84 = arith.addf %82, %83 : vector<64x1xf32>
    %85 = math.rsqrt %84 : vector<64x1xf32>
    %86 = vector.broadcast %85 : vector<64x1xf32> to vector<64x16xf32>
    %87 = arith.mulf %77, %86 : vector<64x16xf32>
    %c0_62 = arith.constant 0 : index
    %c0_63 = arith.constant 0 : index
    %88 = vector.load %arg18[%c0_62, %c0_63] : memref<1x16xf32, #tpu.memory_space<vmem>>, vector<1x16xf32>
    %89 = vector.broadcast %88 : vector<1x16xf32> to vector<64x16xf32>
    %90 = arith.mulf %87, %89 : vector<64x16xf32>
    %c0_64 = arith.constant 0 : index
    %c0_65 = arith.constant 0 : index
    %91 = vector.load %arg19[%c0_64, %c0_65] : memref<1x16xf32, #tpu.memory_space<vmem>>, vector<1x16xf32>
    %92 = vector.broadcast %91 : vector<1x16xf32> to vector<64x16xf32>
    %93 = arith.addf %90, %92 : vector<64x16xf32>
    %94 = arith.truncf %93 : vector<64x16xf32> to vector<64x16xbf16>
    %c0_66 = arith.constant 0 : index
    %c0_67 = arith.constant 0 : index
    %95 = vector.load %arg20[%c0_66, %c0_67] : memref<16x32xbf16, #tpu.memory_space<vmem>>, vector<16x32xbf16>
    %cst_68 = arith.constant dense<0.000000e+00> : vector<64x32xf32>
    %96 = tpu.matmul %94, %95, %cst_68 {dimension_numbers = #tpu.dot_dimension_numbers<[1], [0], [0], [1], [0, 0, 1, 1], [], []>} : vector<64x16xbf16>, vector<16x32xbf16>, vector<64x32xf32> -> vector<64x32xf32>
    %c0_69 = arith.constant 0 : index
    %c0_70 = arith.constant 0 : index
    %97 = vector.load %arg21[%c0_69, %c0_70] : memref<1x32xf32, #tpu.memory_space<vmem>>, vector<1x32xf32>
    %98 = vector.broadcast %97 : vector<1x32xf32> to vector<64x32xf32>
    %99 = arith.addf %96, %98 : vector<64x32xf32>
    %cst_71 = arith.constant 0.000000e+00 : f32
    %100 = vector.broadcast %cst_71 : f32 to vector<64x32xf32>
    %101 = arith.maximumf %99, %100 : vector<64x32xf32>
    %102 = arith.truncf %101 : vector<64x32xf32> to vector<64x32xbf16>
    %c0_72 = arith.constant 0 : index
    %c0_73 = arith.constant 0 : index
    %103 = vector.load %arg22[%c0_72, %c0_73] : memref<32x16xbf16, #tpu.memory_space<vmem>>, vector<32x16xbf16>
    %cst_74 = arith.constant dense<0.000000e+00> : vector<64x16xf32>
    %104 = tpu.matmul %102, %103, %cst_74 {dimension_numbers = #tpu.dot_dimension_numbers<[1], [0], [0], [1], [0, 0, 1, 1], [], []>} : vector<64x32xbf16>, vector<32x16xbf16>, vector<64x16xf32> -> vector<64x16xf32>
    %105 = arith.addf %71, %104 : vector<64x16xf32>
    %c0_75 = arith.constant 0 : index
    %c0_76 = arith.constant 0 : index
    %106 = vector.load %arg23[%c0_75, %c0_76] : memref<1x16xf32, #tpu.memory_space<vmem>>, vector<1x16xf32>
    %107 = vector.broadcast %106 : vector<1x16xf32> to vector<64x16xf32>
    %108 = arith.addf %105, %107 : vector<64x16xf32>
    %c0_77 = arith.constant 0 : index
    %c0_78 = arith.constant 0 : index
    %c0_79 = arith.constant 0 : index
    %109 = vector.load %arg24[%c0_77, %c0_78, %c0_79] : memref<1x64x16xf32, #tpu.memory_space<vmem>>, vector<1x64x16xf32>
    %110 = vector.shape_cast %109 : vector<1x64x16xf32> to vector<64x16xf32>
    %111 = vector.shape_cast %108 : vector<64x16xf32> to vector<1x64x16xf32>
    tpu.vector_store %arg24[%c0_77, %c0_78, %c0_79], %111 {strides = array<i32>} : memref<1x64x16xf32, #tpu.memory_space<vmem>>, vector<1x64x16xf32>,
    return
  }
  func.func @transform_0(%arg0: i32) -> (i32, i32, i32) {
    %c0_i32 = arith.constant 0 : i32
    %c0_i32_0 = arith.constant 0 : i32
    %c0_i32_1 = arith.constant 0 : i32
    return %arg0, %c0_i32, %c0_i32_0 : i32, i32, i32
  }
  func.func @transform_1(%arg0: i32) -> (i32, i32) {
    %c0_i32 = arith.constant 0 : i32
    %c0_i32_0 = arith.constant 0 : i32
    %c0_i32_1 = arith.constant 0 : i32
    return %c0_i32, %c0_i32_0 : i32, i32
  }
  func.func @transform_2(%arg0: i32) -> (i32, i32) {
    %c0_i32 = arith.constant 0 : i32
    %c0_i32_0 = arith.constant 0 : i32
    %c0_i32_1 = arith.constant 0 : i32
    return %c0_i32, %c0_i32_0 : i32, i32
  }
  func.func @transform_3(%arg0: i32) -> (i32, i32) {
    %c0_i32 = arith.constant 0 : i32
    %c0_i32_0 = arith.constant 0 : i32
    %c0_i32_1 = arith.constant 0 : i32
    return %c0_i32, %c0_i32_0 : i32, i32
  }
  func.func @transform_4(%arg0: i32) -> (i32, i32) {
    %c0_i32 = arith.constant 0 : i32
    %c0_i32_0 = arith.constant 0 : i32
    %c0_i32_1 = arith.constant 0 : i32
    return %c0_i32, %c0_i32_0 : i32, i32
  }
  func.func @transform_5(%arg0: i32) -> (i32, i32) {
    %c0_i32 = arith.constant 0 : i32
    %c0_i32_0 = arith.constant 0 : i32
    %c0_i32_1 = arith.constant 0 : i32
    return %c0_i32, %c0_i32_0 : i32, i32
  }
  func.func @transform_6(%arg0: i32) -> (i32, i32) {
    %c0_i32 = arith.constant 0 : i32
    %c0_i32_0 = arith.constant 0 : i32
    %c0_i32_1 = arith.constant 0 : i32
    return %c0_i32, %c0_i32_0 : i32, i32
  }
  func.func @transform_7(%arg0: i32) -> (i32, i32) {
    %c0_i32 = arith.constant 0 : i32
    %c0_i32_0 = arith.constant 0 : i32
    %c0_i32_1 = arith.constant 0 : i32
    return %c0_i32, %c0_i32_0 : i32, i32
  }
  func.func @transform_8(%arg0: i32) -> (i32, i32) {
    %c0_i32 = arith.constant 0 : i32
    %c0_i32_0 = arith.constant 0 : i32
    %c0_i32_1 = arith.constant 0 : i32
    return %c0_i32, %c0_i32_0 : i32, i32
  }
  func.func @transform_9(%arg0: i32) -> (i32, i32) {
    %c0_i32 = arith.constant 0 : i32
    %c0_i32_0 = arith.constant 0 : i32
    %c0_i32_1 = arith.constant 0 : i32
    return %c0_i32, %c0_i32_0 : i32, i32
  }
  func.func @transform_10(%arg0: i32) -> (i32, i32) {
    %c0_i32 = arith.constant 0 : i32
    %c0_i32_0 = arith.constant 0 : i32
    %c0_i32_1 = arith.constant 0 : i32
    return %c0_i32, %c0_i32_0 : i32, i32
  }
  func.func @transform_11(%arg0: i32) -> (i32, i32) {
    %c0_i32 = arith.constant 0 : i32
    %c0_i32_0 = arith.constant 0 : i32
    %c0_i32_1 = arith.constant 0 : i32
    return %c0_i32, %c0_i32_0 : i32, i32
  }
  func.func @transform_12(%arg0: i32) -> (i32, i32) {
    %c0_i32 = arith.constant 0 : i32
    %c0_i32_0 = arith.constant 0 : i32
    %c0_i32_1 = arith.constant 0 : i32
    return %c0_i32, %c0_i32_0 : i32, i32
  }
  func.func @transform_13(%arg0: i32) -> (i32, i32) {
    %c0_i32 = arith.constant 0 : i32
    %c0_i32_0 = arith.constant 0 : i32
    %c0_i32_1 = arith.constant 0 : i32
    return %c0_i32, %c0_i32_0 : i32, i32
  }
  func.func @transform_14(%arg0: i32) -> (i32, i32) {
    %c0_i32 = arith.constant 0 : i32
    %c0_i32_0 = arith.constant 0 : i32
    %c0_i32_1 = arith.constant 0 : i32
    return %c0_i32, %c0_i32_0 : i32, i32
  }
  func.func @transform_15(%arg0: i32) -> (i32, i32) {
    %c0_i32 = arith.constant 0 : i32
    %c0_i32_0 = arith.constant 0 : i32
    %c0_i32_1 = arith.constant 0 : i32
    return %c0_i32, %c0_i32_0 : i32, i32
  }
  func.func @transform_16(%arg0: i32) -> (i32, i32) {
    %c0_i32 = arith.constant 0 : i32
    %c0_i32_0 = arith.constant 0 : i32
    %c0_i32_1 = arith.constant 0 : i32
    return %c0_i32, %c0_i32_0 : i32, i32
  }
  func.func @transform_17(%arg0: i32) -> (i32, i32) {
    %c0_i32 = arith.constant 0 : i32
    %c0_i32_0 = arith.constant 0 : i32
    %c0_i32_1 = arith.constant 0 : i32
    return %c0_i32, %c0_i32_0 : i32, i32
  }
  func.func @transform_18(%arg0: i32) -> (i32, i32) {
    %c0_i32 = arith.constant 0 : i32
    %c0_i32_0 = arith.constant 0 : i32
    %c0_i32_1 = arith.constant 0 : i32
    return %c0_i32, %c0_i32_0 : i32, i32
  }
  func.func @transform_19(%arg0: i32) -> (i32, i32) {
    %c0_i32 = arith.constant 0 : i32
    %c0_i32_0 = arith.constant 0 : i32
    %c0_i32_1 = arith.constant 0 : i32
    return %c0_i32, %c0_i32_0 : i32, i32
  }
  func.func @transform_20(%arg0: i32) -> (i32, i32) {
    %c0_i32 = arith.constant 0 : i32
    %c0_i32_0 = arith.constant 0 : i32
    %c0_i32_1 = arith.constant 0 : i32
    return %c0_i32, %c0_i32_0 : i32, i32
  }
  func.func @transform_21(%arg0: i32) -> (i32, i32) {
    %c0_i32 = arith.constant 0 : i32
    %c0_i32_0 = arith.constant 0 : i32
    %c0_i32_1 = arith.constant 0 : i32
    return %c0_i32, %c0_i32_0 : i32, i32
  }
  func.func @transform_22(%arg0: i32) -> (i32, i32) {
    %c0_i32 = arith.constant 0 : i32
    %c0_i32_0 = arith.constant 0 : i32
    %c0_i32_1 = arith.constant 0 : i32
    return %c0_i32, %c0_i32_0 : i32, i32
  }
  func.func @transform_23(%arg0: i32) -> (i32, i32, i32) {
    %c0_i32 = arith.constant 0 : i32
    %c0_i32_0 = arith.constant 0 : i32
    %c0_i32_1 = arith.constant 0 : i32
    return %arg0, %c0_i32, %c0_i32_0 : i32, i32, i32
  }
}

</mosaic_0001>

<llo_original>
// kernel: a_call__.1
$region0: #{a_call__.1}
  #allocation0 [shape = 'u32[]', space=smem, size = 0x4, offset = 0x4, fixed_abs, tag = 'smem constant byte address 0x4 - core index']
  #allocation1 [shape = 'u32[144,128]{1,0:T(1,128)}', space=vmem, size = 0x12000, scoped, tag = 'internal scratch']
  %s0 = inlined_call_operand.vmem [shape: f32[2,64,16], index: 0, kind: input, shape index: {}]
  %s1 = inlined_call_operand.vmem [shape: f32[16,64], index: 1, kind: input, shape index: {}]
  %s2 = inlined_call_operand.vmem [shape: f32[64,16], index: 2, kind: input, shape index: {}]
  %s3 = inlined_call_operand.vmem [shape: f32[64,1], index: 3, kind: input, shape index: {}]
  %s4 = inlined_call_operand.vmem [shape: f32[64,1], index: 4, kind: input, shape index: {}]
  %s5 = inlined_call_operand.vmem [shape: bf16[128,64], index: 5, kind: input, shape index: {}]
  %s6 = inlined_call_operand.vmem [shape: f32[128,1], index: 6, kind: input, shape index: {}]
  %s7 = inlined_call_operand.vmem [shape: bf16[64,128], index: 7, kind: input, shape index: {}]
  %s8 = inlined_call_operand.vmem [shape: f32[64,1], index: 8, kind: input, shape index: {}]
  %s9 = inlined_call_operand.vmem [shape: f32[4,64], index: 9, kind: input, shape index: {}]
  %s10 = inlined_call_operand.vmem [shape: f32[64,4], index: 10, kind: input, shape index: {}]
  %s11 = inlined_call_operand.vmem [shape: f32[64,1], index: 11, kind: input, shape index: {}]
  %s12 = inlined_call_operand.vmem [shape: f32[64,1], index: 12, kind: input, shape index: {}]
  %s13 = inlined_call_operand.vmem [shape: bf16[128,64], index: 13, kind: input, shape index: {}]
  %s14 = inlined_call_operand.vmem [shape: f32[128,1], index: 14, kind: input, shape index: {}]
  %s15 = inlined_call_operand.vmem [shape: bf16[64,128], index: 15, kind: input, shape index: {}]
  %s16 = inlined_call_operand.vmem [shape: f32[64,1], index: 16, kind: input, shape index: {}]
  %s17 = inlined_call_operand.vmem [shape: f32[1,16], index: 17, kind: input, shape index: {}]
  %s18 = inlined_call_operand.vmem [shape: f32[1,16], index: 18, kind: input, shape index: {}]
  %s19 = inlined_call_operand.vmem [shape: bf16[16,32], index: 19, kind: input, shape index: {}]
  %s20 = inlined_call_operand.vmem [shape: f32[1,32], index: 20, kind: input, shape index: {}]
  %s21 = inlined_call_operand.vmem [shape: bf16[32,16], index: 21, kind: input, shape index: {}]
  %s22 = inlined_call_operand.vmem [shape: f32[1,16], index: 22, kind: input, shape index: {}]
  %s23 = inlined_call_operand.vmem [shape: f32[2,64,16], index: 23, kind: output, shape index: {}]
  %s24 = sld [smem:[#allocation0]]
  $region125: #{a_call__.1} parent=0
    _
  %s26 = ssub.s32 1, %s24
  %s27 = scalar_select 0, %s26, %s24
  loop: start=0, step=1, limit=4
  $region2: #{a_call__.1} parent=0 // loop_pre_header
    _
  $region3: #{a_call__.1} parent=0 // loop_header
    %s29 = sphi 0, %s33
    %p30 = scmp.ge.s32.totalorder %s29, 4
    %s39 = sphi 0, %s41
    %s42 = sphi 0, %s39
    %s43 = sphi 0, %s42
    %s59 = sphi 0, %s43
    %s63 = sphi 0, %s63
    %s65 = sphi 0, %s63
    %s66 = sphi 0, %s65
    %s80 = sphi 0, %s66
    %s84 = sphi 0, %s84
    %s86 = sphi 0, %s84
    %s87 = sphi 0, %s86
    %s101 = sphi 0, %s87
    %s105 = sphi 0, %s105
    %s107 = sphi 0, %s105
    %s108 = sphi 0, %s107
    %s122 = sphi 0, %s108
    %s126 = sphi 0, %s126
    %s128 = sphi 0, %s126
    %s129 = sphi 0, %s128
    %s143 = sphi 0, %s129
    %s147 = sphi 0, %s147
    %s149 = sphi 0, %s147
    %s150 = sphi 0, %s149
    %s164 = sphi 0, %s150
    %s168 = sphi 0, %s168
    %s170 = sphi 0, %s168
    %s171 = sphi 0, %s170
    %s185 = sphi 0, %s171
    %s189 = sphi 0, %s189
    %s191 = sphi 0, %s189
    %s192 = sphi 0, %s191
    %s206 = sphi 0, %s192
    %s210 = sphi 0, %s210
    %s212 = sphi 0, %s210
    %s213 = sphi 0, %s212
    %s227 = sphi 0, %s213
    %s231 = sphi 0, %s231
    %s233 = sphi 0, %s231
    %s234 = sphi 0, %s233
    %s248 = sphi 0, %s234
    %s252 = sphi 0, %s252
    %s254 = sphi 0, %s252
    %s255 = sphi 0, %s254
    %s269 = sphi 0, %s255
    %s273 = sphi 0, %s273
    %s275 = sphi 0, %s273
    %s276 = sphi 0, %s275
    %s290 = sphi 0, %s276
    %s294 = sphi 0, %s294
    %s296 = sphi 0, %s294
    %s297 = sphi 0, %s296
    %s311 = sphi 0, %s297
    %s315 = sphi 0, %s315
    %s317 = sphi 0, %s315
    %s318 = sphi 0, %s317
    %s332 = sphi 0, %s318
    %s336 = sphi 0, %s336
    %s338 = sphi 0, %s336
    %s339 = sphi 0, %s338
    %s353 = sphi 0, %s339
    %s357 = sphi 0, %s357
    %s359 = sphi 0, %s357
    %s360 = sphi 0, %s359
    %s374 = sphi 0, %s360
    %s378 = sphi 0, %s378
    %s380 = sphi 0, %s378
    %s381 = sphi 0, %s380
    %s395 = sphi 0, %s381
    %s399 = sphi 0, %s399
    %s401 = sphi 0, %s399
    %s402 = sphi 0, %s401
    %s416 = sphi 0, %s402
    %s420 = sphi 0, %s420
    %s422 = sphi 0, %s420
    %s423 = sphi 0, %s422
    %s437 = sphi 0, %s423
    %s441 = sphi 0, %s441
    %s443 = sphi 0, %s441
    %s444 = sphi 0, %s443
    %s458 = sphi 0, %s444
    %s462 = sphi 0, %s462
    %s464 = sphi 0, %s462
    %s465 = sphi 0, %s464
    %s479 = sphi 0, %s465
    %s483 = sphi 0, %s483
    %s485 = sphi 0, %s483
    %s486 = sphi 0, %s485
    %s500 = sphi 0, %s486
    %s504 = sphi 0, %s504
    %s506 = sphi 0, %s504
    %s507 = sphi 0, %s506
    %s521 = sphi 0, %s507
    %s527 = sphi 0, %s529
    %s530 = sphi 0, %s527
    %s531 = sphi 0, %s530
    %s547 = sphi 0, %s531
  $region4: #{a_call__.1} parent=0 // loop_header_branch
    %32 = sbr.rel (%p30) target = $region8
  $region5: #{a_call__.1} parent=0 // loop_body
    %s34 = ssub.s32 %s29, 1
    %s35 = ssub.s32 %s29, 2
    %s36 = sadd.s32 %s29, 1
    %s37 = ssub.s32 %s29, %s36
    %p38 = scmp.eq.s32.totalorder %s37, 0
    %s40 = sadd.s32 %s39, 1
    %s41 = scalar_select %p38, %s39, %s40
    %p44 = pneg %p38
    %p45 = scmp.eq.s32.totalorder %s29, 1
    %p46 = por %p44, %p45
    %p47 = scmp.ne.s32.totalorder %s39, %s42
    %p48 = scmp.eq.s32.totalorder %s29, 0
    %p49 = por %p47, %p48
    %p50 = scmp.ne.s32.totalorder %s39, %s42
    %p51 = scmp.eq.s32.totalorder %s34, 1
    %p52 = por %p50, %p51
    %p53 = scmp.ne.s32.totalorder %s42, %s43
    %p54 = scmp.eq.s32.totalorder %s34, 0
    %p55 = por %p53, %p54
    %p56 = scmp.ne.s32.totalorder %s42, %s43
    %p57 = scmp.eq.s32.totalorder %s35, 1
    %p58 = por %p56, %p57
    %p60 = scmp.ne.s32.totalorder %s43, %s59
    %p61 = scmp.eq.s32.totalorder %s35, 0
    %p62 = por %p60, %p61
    %s64 = sadd.s32 %s63, 1
    %p67 = scmp.eq.s32.totalorder %s29, 1
    %p68 = scmp.ne.s32.totalorder %s63, %s65
    %p69 = scmp.eq.s32.totalorder %s29, 0
    %p70 = por %p68, %p69
    %p71 = scmp.ne.s32.totalorder %s63, %s65
    %p72 = scmp.eq.s32.totalorder %s34, 1
    %p73 = por %p71, %p72
    %p74 = scmp.ne.s32.totalorder %s65, %s66
    %p75 = scmp.eq.s32.totalorder %s34, 0
    %p76 = por %p74, %p75
    %p77 = scmp.ne.s32.totalorder %s65, %s66
    %p78 = scmp.eq.s32.totalorder %s35, 1
    %p79 = por %p77, %p78
    %p81 = scmp.ne.s32.totalorder %s66, %s80
    %p82 = scmp.eq.s32.totalorder %s35, 0
    %p83 = por %p81, %p82
    %s85 = sadd.s32 %s84, 1
    %p88 = scmp.eq.s32.totalorder %s29, 1
    %p89 = scmp.ne.s32.totalorder %s84, %s86
    %p90 = scmp.eq.s32.totalorder %s29, 0
    %p91 = por %p89, %p90
    %p92 = scmp.ne.s32.totalorder %s84, %s86
    %p93 = scmp.eq.s32.totalorder %s34, 1
    %p94 = por %p92, %p93
    %p95 = scmp.ne.s32.totalorder %s86, %s87
    %p96 = scmp.eq.s32.totalorder %s34, 0
    %p97 = por %p95, %p96
    %p98 = scmp.ne.s32.totalorder %s86, %s87
    %p99 = scmp.eq.s32.totalorder %s35, 1
    %p100 = por %p98, %p99
    %p102 = scmp.ne.s32.totalorder %s87, %s101
    %p103 = scmp.eq.s32.totalorder %s35, 0
    %p104 = por %p102, %p103
    %s106 = sadd.s32 %s105, 1
    %p109 = scmp.eq.s32.totalorder %s29, 1
    %p110 = scmp.ne.s32.totalorder %s105, %s107
    %p111 = scmp.eq.s32.totalorder %s29, 0
    %p112 = por %p110, %p111
    %p113 = scmp.ne.s32.totalorder %s105, %s107
    %p114 = scmp.eq.s32.totalorder %s34, 1
    %p115 = por %p113, %p114
    %p116 = scmp.ne.s32.totalorder %s107, %s108
    %p117 = scmp.eq.s32.totalorder %s34, 0
    %p118 = por %p116, %p117
    %p119 = scmp.ne.s32.totalorder %s107, %s108
    %p120 = scmp.eq.s32.totalorder %s35, 1
    %p121 = por %p119, %p120
    %p123 = scmp.ne.s32.totalorder %s108, %s122
    %p124 = scmp.eq.s32.totalorder %s35, 0
    %p125 = por %p123, %p124
    %s127 = sadd.s32 %s126, 1
    %p130 = scmp.eq.s32.totalorder %s29, 1
    %p131 = scmp.ne.s32.totalorder %s126, %s128
    %p132 = scmp.eq.s32.totalorder %s29, 0
    %p133 = por %p131, %p132
    %p134 = scmp.ne.s32.totalorder %s126, %s128
    %p135 = scmp.eq.s32.totalorder %s34, 1
    %p136 = por %p134, %p135
    %p137 = scmp.ne.s32.totalorder %s128, %s129
    %p138 = scmp.eq.s32.totalorder %s34, 0
    %p139 = por %p137, %p138
    %p140 = scmp.ne.s32.totalorder %s128, %s129
    %p141 = scmp.eq.s32.totalorder %s35, 1
    %p142 = por %p140, %p141
    %p144 = scmp.ne.s32.totalorder %s129, %s143
    %p145 = scmp.eq.s32.totalorder %s35, 0
    %p146 = por %p144, %p145
    %s148 = sadd.s32 %s147, 1
    %p151 = scmp.eq.s32.totalorder %s29, 1
    %p152 = scmp.ne.s32.totalorder %s147, %s149
    %p153 = scmp.eq.s32.totalorder %s29, 0
    %p154 = por %p152, %p153
    %p155 = scmp.ne.s32.totalorder %s147, %s149
    %p156 = scmp.eq.s32.totalorder %s34, 1
    %p157 = por %p155, %p156
    %p158 = scmp.ne.s32.totalorder %s149, %s150
    %p159 = scmp.eq.s32.totalorder %s34, 0
    %p160 = por %p158, %p159
    %p161 = scmp.ne.s32.totalorder %s149, %s150
    %p162 = scmp.eq.s32.totalorder %s35, 1
    %p163 = por %p161, %p162
    %p165 = scmp.ne.s32.totalorder %s150, %s164
    %p166 = scmp.eq.s32.totalorder %s35, 0
    %p167 = por %p165, %p166
    %s169 = sadd.s32 %s168, 1
    %p172 = scmp.eq.s32.totalorder %s29, 1
    %p173 = scmp.ne.s32.totalorder %s168, %s170
    %p174 = scmp.eq.s32.totalorder %s29, 0
    %p175 = por %p173, %p174
    %p176 = scmp.ne.s32.totalorder %s168, %s170
    %p177 = scmp.eq.s32.totalorder %s34, 1
    %p178 = por %p176, %p177
    %p179 = scmp.ne.s32.totalorder %s170, %s171
    %p180 = scmp.eq.s32.totalorder %s34, 0
    %p181 = por %p179, %p180
    %p182 = scmp.ne.s32.totalorder %s170, %s171
    %p183 = scmp.eq.s32.totalorder %s35, 1
    %p184 = por %p182, %p183
    %p186 = scmp.ne.s32.totalorder %s171, %s185
    %p187 = scmp.eq.s32.totalorder %s35, 0
    %p188 = por %p186, %p187
    %s190 = sadd.s32 %s189, 1
    %p193 = scmp.eq.s32.totalorder %s29, 1
    %p194 = scmp.ne.s32.totalorder %s189, %s191
    %p195 = scmp.eq.s32.totalorder %s29, 0
    %p196 = por %p194, %p195
    %p197 = scmp.ne.s32.totalorder %s189, %s191
    %p198 = scmp.eq.s32.totalorder %s34, 1
    %p199 = por %p197, %p198
    %p200 = scmp.ne.s32.totalorder %s191, %s192
    %p201 = scmp.eq.s32.totalorder %s34, 0
    %p202 = por %p200, %p201
    %p203 = scmp.ne.s32.totalorder %s191, %s192
    %p204 = scmp.eq.s32.totalorder %s35, 1
    %p205 = por %p203, %p204
    %p207 = scmp.ne.s32.totalorder %s192, %s206
    %p208 = scmp.eq.s32.totalorder %s35, 0
    %p209 = por %p207, %p208
    %s211 = sadd.s32 %s210, 1
    %p214 = scmp.eq.s32.totalorder %s29, 1
    %p215 = scmp.ne.s32.totalorder %s210, %s212
    %p216 = scmp.eq.s32.totalorder %s29, 0
    %p217 = por %p215, %p216
    %p218 = scmp.ne.s32.totalorder %s210, %s212
    %p219 = scmp.eq.s32.totalorder %s34, 1
    %p220 = por %p218, %p219
    %p221 = scmp.ne.s32.totalorder %s212, %s213
    %p222 = scmp.eq.s32.totalorder %s34, 0
    %p223 = por %p221, %p222
    %p224 = scmp.ne.s32.totalorder %s212, %s213
    %p225 = scmp.eq.s32.totalorder %s35, 1
    %p226 = por %p224, %p225
    %p228 = scmp.ne.s32.totalorder %s213, %s227
    %p229 = scmp.eq.s32.totalorder %s35, 0
    %p230 = por %p228, %p229
    %s232 = sadd.s32 %s231, 1
    %p235 = scmp.eq.s32.totalorder %s29, 1
    %p236 = scmp.ne.s32.totalorder %s231, %s233
    %p237 = scmp.eq.s32.totalorder %s29, 0
    %p238 = por %p236, %p237
    %p239 = scmp.ne.s32.totalorder %s231, %s233
    %p240 = scmp.eq.s32.totalorder %s34, 1
    %p241 = por %p239, %p240
    %p242 = scmp.ne.s32.totalorder %s233, %s234
    %p243 = scmp.eq.s32.totalorder %s34, 0
    %p244 = por %p242, %p243
    %p245 = scmp.ne.s32.totalorder %s233, %s234
    %p246 = scmp.eq.s32.totalorder %s35, 1
    %p247 = por %p245, %p246
    %p249 = scmp.ne.s32.totalorder %s234, %s248
    %p250 = scmp.eq.s32.totalorder %s35, 0
    %p251 = por %p249, %p250
    %s253 = sadd.s32 %s252, 1
    %p256 = scmp.eq.s32.totalorder %s29, 1
    %p257 = scmp.ne.s32.totalorder %s252, %s254
    %p258 = scmp.eq.s32.totalorder %s29, 0
    %p259 = por %p257, %p258
    %p260 = scmp.ne.s32.totalorder %s252, %s254
    %p261 = scmp.eq.s32.totalorder %s34, 1
    %p262 = por %p260, %p261
    %p263 = scmp.ne.s32.totalorder %s254, %s255
    %p264 = scmp.eq.s32.totalorder %s34, 0
    %p265 = por %p263, %p264
    %p266 = scmp.ne.s32.totalorder %s254, %s255
    %p267 = scmp.eq.s32.totalorder %s35, 1
    %p268 = por %p266, %p267
    %p270 = scmp.ne.s32.totalorder %s255, %s269
    %p271 = scmp.eq.s32.totalorder %s35, 0
    %p272 = por %p270, %p271
    %s274 = sadd.s32 %s273, 1
    %p277 = scmp.eq.s32.totalorder %s29, 1
    %p278 = scmp.ne.s32.totalorder %s273, %s275
    %p279 = scmp.eq.s32.totalorder %s29, 0
    %p280 = por %p278, %p279
    %p281 = scmp.ne.s32.totalorder %s273, %s275
    %p282 = scmp.eq.s32.totalorder %s34, 1
    %p283 = por %p281, %p282
    %p284 = scmp.ne.s32.totalorder %s275, %s276
    %p285 = scmp.eq.s32.totalorder %s34, 0
    %p286 = por %p284, %p285
    %p287 = scmp.ne.s32.totalorder %s275, %s276
    %p288 = scmp.eq.s32.totalorder %s35, 1
    %p289 = por %p287, %p288
    %p291 = scmp.ne.s32.totalorder %s276, %s290
    %p292 = scmp.eq.s32.totalorder %s35, 0
    %p293 = por %p291, %p292
    %s295 = sadd.s32 %s294, 1
    %p298 = scmp.eq.s32.totalorder %s29, 1
    %p299 = scmp.ne.s32.totalorder %s294, %s296
    %p300 = scmp.eq.s32.totalorder %s29, 0
    %p301 = por %p299, %p300
    %p302 = scmp.ne.s32.totalorder %s294, %s296
    %p303 = scmp.eq.s32.totalorder %s34, 1
    %p304 = por %p302, %p303
    %p305 = scmp.ne.s32.totalorder %s296, %s297
    %p306 = scmp.eq.s32.totalorder %s34, 0
    %p307 = por %p305, %p306
    %p308 = scmp.ne.s32.totalorder %s296, %s297
    %p309 = scmp.eq.s32.totalorder %s35, 1
    %p310 = por %p308, %p309
    %p312 = scmp.ne.s32.totalorder %s297, %s311
    %p313 = scmp.eq.s32.totalorder %s35, 0
    %p314 = por %p312, %p313
    %s316 = sadd.s32 %s315, 1
    %p319 = scmp.eq.s32.totalorder %s29, 1
    %p320 = scmp.ne.s32.totalorder %s315, %s317
    %p321 = scmp.eq.s32.totalorder %s29, 0
    %p322 = por %p320, %p321
    %p323 = scmp.ne.s32.totalorder %s315, %s317
    %p324 = scmp.eq.s32.totalorder %s34, 1
    %p325 = por %p323, %p324
    %p326 = scmp.ne.s32.totalorder %s317, %s318
    %p327 = scmp.eq.s32.totalorder %s34, 0
    %p328 = por %p326, %p327
    %p329 = scmp.ne.s32.totalorder %s317, %s318
    %p330 = scmp.eq.s32.totalorder %s35, 1
    %p331 = por %p329, %p330
    %p333 = scmp.ne.s32.totalorder %s318, %s332
    %p334 = scmp.eq.s32.totalorder %s35, 0
    %p335 = por %p333, %p334
    %s337 = sadd.s32 %s336, 1
    %p340 = scmp.eq.s32.totalorder %s29, 1
    %p341 = scmp.ne.s32.totalorder %s336, %s338
    %p342 = scmp.eq.s32.totalorder %s29, 0
    %p343 = por %p341, %p342
    %p344 = scmp.ne.s32.totalorder %s336, %s338
    %p345 = scmp.eq.s32.totalorder %s34, 1
    %p346 = por %p344, %p345
    %p347 = scmp.ne.s32.totalorder %s338, %s339
    %p348 = scmp.eq.s32.totalorder %s34, 0
    %p349 = por %p347, %p348
    %p350 = scmp.ne.s32.totalorder %s338, %s339
    %p351 = scmp.eq.s32.totalorder %s35, 1
    %p352 = por %p350, %p351
    %p354 = scmp.ne.s32.totalorder %s339, %s353
    %p355 = scmp.eq.s32.totalorder %s35, 0
    %p356 = por %p354, %p355
    %s358 = sadd.s32 %s357, 1
    %p361 = scmp.eq.s32.totalorder %s29, 1
    %p362 = scmp.ne.s32.totalorder %s357, %s359
    %p363 = scmp.eq.s32.totalorder %s29, 0
    %p364 = por %p362, %p363
    %p365 = scmp.ne.s32.totalorder %s357, %s359
    %p366 = scmp.eq.s32.totalorder %s34, 1
    %p367 = por %p365, %p366
    %p368 = scmp.ne.s32.totalorder %s359, %s360
    %p369 = scmp.eq.s32.totalorder %s34, 0
    %p370 = por %p368, %p369
    %p371 = scmp.ne.s32.totalorder %s359, %s360
    %p372 = scmp.eq.s32.totalorder %s35, 1
    %p373 = por %p371, %p372
    %p375 = scmp.ne.s32.totalorder %s360, %s374
    %p376 = scmp.eq.s32.totalorder %s35, 0
    %p377 = por %p375, %p376
    %s379 = sadd.s32 %s378, 1
    %p382 = scmp.eq.s32.totalorder %s29, 1
    %p383 = scmp.ne.s32.totalorder %s378, %s380
    %p384 = scmp.eq.s32.totalorder %s29, 0
    %p385 = por %p383, %p384
    %p386 = scmp.ne.s32.totalorder %s378, %s380
    %p387 = scmp.eq.s32.totalorder %s34, 1
    %p388 = por %p386, %p387
    %p389 = scmp.ne.s32.totalorder %s380, %s381
    %p390 = scmp.eq.s32.totalorder %s34, 0
    %p391 = por %p389, %p390
    %p392 = scmp.ne.s32.totalorder %s380, %s381
    %p393 = scmp.eq.s32.totalorder %s35, 1
    %p394 = por %p392, %p393
    %p396 = scmp.ne.s32.totalorder %s381, %s395
    %p397 = scmp.eq.s32.totalorder %s35, 0
    %p398 = por %p396, %p397
    %s400 = sadd.s32 %s399, 1
    %p403 = scmp.eq.s32.totalorder %s29, 1
    %p404 = scmp.ne.s32.totalorder %s399, %s401
    %p405 = scmp.eq.s32.totalorder %s29, 0
    %p406 = por %p404, %p405
    %p407 = scmp.ne.s32.totalorder %s399, %s401
    %p408 = scmp.eq.s32.totalorder %s34, 1
    %p409 = por %p407, %p408
    %p410 = scmp.ne.s32.totalorder %s401, %s402
    %p411 = scmp.eq.s32.totalorder %s34, 0
    %p412 = por %p410, %p411
    %p413 = scmp.ne.s32.totalorder %s401, %s402
    %p414 = scmp.eq.s32.totalorder %s35, 1
    %p415 = por %p413, %p414
    %p417 = scmp.ne.s32.totalorder %s402, %s416
    %p418 = scmp.eq.s32.totalorder %s35, 0
    %p419 = por %p417, %p418
    %s421 = sadd.s32 %s420, 1
    %p424 = scmp.eq.s32.totalorder %s29, 1
    %p425 = scmp.ne.s32.totalorder %s420, %s422
    %p426 = scmp.eq.s32.totalorder %s29, 0
    %p427 = por %p425, %p426
    %p428 = scmp.ne.s32.totalorder %s420, %s422
    %p429 = scmp.eq.s32.totalorder %s34, 1
    %p430 = por %p428, %p429
    %p431 = scmp.ne.s32.totalorder %s422, %s423
    %p432 = scmp.eq.s32.totalorder %s34, 0
    %p433 = por %p431, %p432
    %p434 = scmp.ne.s32.totalorder %s422, %s423
    %p435 = scmp.eq.s32.totalorder %s35, 1
    %p436 = por %p434, %p435
    %p438 = scmp.ne.s32.totalorder %s423, %s437
    %p439 = scmp.eq.s32.totalorder %s35, 0
    %p440 = por %p438, %p439
    %s442 = sadd.s32 %s441, 1
    %p445 = scmp.eq.s32.totalorder %s29, 1
    %p446 = scmp.ne.s32.totalorder %s441, %s443
    %p447 = scmp.eq.s32.totalorder %s29, 0
    %p448 = por %p446, %p447
    %p449 = scmp.ne.s32.totalorder %s441, %s443
    %p450 = scmp.eq.s32.totalorder %s34, 1
    %p451 = por %p449, %p450
    %p452 = scmp.ne.s32.totalorder %s443, %s444
    %p453 = scmp.eq.s32.totalorder %s34, 0
    %p454 = por %p452, %p453
    %p455 = scmp.ne.s32.totalorder %s443, %s444
    %p456 = scmp.eq.s32.totalorder %s35, 1
    %p457 = por %p455, %p456
    %p459 = scmp.ne.s32.totalorder %s444, %s458
    %p460 = scmp.eq.s32.totalorder %s35, 0
    %p461 = por %p459, %p460
    %s463 = sadd.s32 %s462, 1
    %p466 = scmp.eq.s32.totalorder %s29, 1
    %p467 = scmp.ne.s32.totalorder %s462, %s464
    %p468 = scmp.eq.s32.totalorder %s29, 0
    %p469 = por %p467, %p468
    %p470 = scmp.ne.s32.totalorder %s462, %s464
    %p471 = scmp.eq.s32.totalorder %s34, 1
    %p472 = por %p470, %p471
    %p473 = scmp.ne.s32.totalorder %s464, %s465
    %p474 = scmp.eq.s32.totalorder %s34, 0
    %p475 = por %p473, %p474
    %p476 = scmp.ne.s32.totalorder %s464, %s465
    %p477 = scmp.eq.s32.totalorder %s35, 1
    %p478 = por %p476, %p477
    %p480 = scmp.ne.s32.totalorder %s465, %s479
    %p481 = scmp.eq.s32.totalorder %s35, 0
    %p482 = por %p480, %p481
    %s484 = sadd.s32 %s483, 1
    %p487 = scmp.eq.s32.totalorder %s29, 1
    %p488 = scmp.ne.s32.totalorder %s483, %s485
    %p489 = scmp.eq.s32.totalorder %s29, 0
    %p490 = por %p488, %p489
    %p491 = scmp.ne.s32.totalorder %s483, %s485
    %p492 = scmp.eq.s32.totalorder %s34, 1
    %p493 = por %p491, %p492
    %p494 = scmp.ne.s32.totalorder %s485, %s486
    %p495 = scmp.eq.s32.totalorder %s34, 0
    %p496 = por %p494, %p495
    %p497 = scmp.ne.s32.totalorder %s485, %s486
    %p498 = scmp.eq.s32.totalorder %s35, 1
    %p499 = por %p497, %p498
    %p501 = scmp.ne.s32.totalorder %s486, %s500
    %p502 = scmp.eq.s32.totalorder %s35, 0
    %p503 = por %p501, %p502
    %s505 = sadd.s32 %s504, 1
    %p508 = scmp.eq.s32.totalorder %s29, 1
    %p509 = scmp.ne.s32.totalorder %s504, %s506
    %p510 = scmp.eq.s32.totalorder %s29, 0
    %p511 = por %p509, %p510
    %p512 = scmp.ne.s32.totalorder %s504, %s506
    %p513 = scmp.eq.s32.totalorder %s34, 1
    %p514 = por %p512, %p513
    %p515 = scmp.ne.s32.totalorder %s506, %s507
    %p516 = scmp.eq.s32.totalorder %s34, 0
    %p517 = por %p515, %p516
    %p518 = scmp.ne.s32.totalorder %s506, %s507
    %p519 = scmp.eq.s32.totalorder %s35, 1
    %p520 = por %p518, %p519
    %p522 = scmp.ne.s32.totalorder %s507, %s521
    %p523 = scmp.eq.s32.totalorder %s35, 0
    %p524 = por %p522, %p523
    %s525 = ssub.s32 %s29, %s36
    %p526 = scmp.eq.s32.totalorder %s525, 0
    %s528 = sadd.s32 %s527, 1
    %s529 = scalar_select %p526, %s527, %s528
    %p532 = pneg %p526
    %p533 = scmp.eq.s32.totalorder %s29, 1
    %p534 = por %p532, %p533
    %p535 = scmp.ne.s32.totalorder %s527, %s530
    %p536 = scmp.eq.s32.totalorder %s29, 0
    %p537 = por %p535, %p536
    %p538 = scmp.ne.s32.totalorder %s527, %s530
    %p539 = scmp.eq.s32.totalorder %s34, 1
    %p540 = por %p538, %p539
    %p541 = scmp.ne.s32.totalorder %s530, %s531
    %p542 = scmp.eq.s32.totalorder %s34, 0
    %p543 = por %p541, %p542
    %p544 = scmp.ne.s32.totalorder %s530, %s531
    %p545 = scmp.eq.s32.totalorder %s35, 1
    %p546 = por %p544, %p545
    %p548 = scmp.ne.s32.totalorder %s531, %s547
    %p549 = scmp.eq.s32.totalorder %s35, 0
    %p550 = por %p548, %p549
    %p551 = scmp.le.s32.totalorder 1, %s29
    %p552 = scmp.lt.s32.totalorder %s29, 3
    %p553 = pnand %p551, %p552
    %p554 = pneg %p553
    // Predicated region
    $region9: #{a_call__.1} parent=5 // pred_check
      _
    $region10: #{a_call__.1} parent=5 // pred_check_branch
      %556 = sbr.rel (%p553) target = $region12
    $region11: #{a_call__.1} parent=5 // pred_region
      %s557 = ssub.s32 %s29, 1
      // Predicated region
      $region13: #{a_call__.1} parent=11 // pred_check
        %p558 = pneg %p76
      $region14: #{a_call__.1} parent=11 // pred_check_branch
        %560 = sbr.rel (%p558) target = $region16
      $region15: #{a_call__.1} parent=11 // pred_region
        _
      $region16: #{a_call__.1} parent=11 // pred_fallthru
        _
      // Predicated region
      $region17: #{a_call__.1} parent=11 // pred_check
        %p561 = pneg %p97
      $region18: #{a_call__.1} parent=11 // pred_check_branch
        %563 = sbr.rel (%p561) target = $region20
      $region19: #{a_call__.1} parent=11 // pred_region
        _
      $region20: #{a_call__.1} parent=11 // pred_fallthru
        _
      // Predicated region
      $region21: #{a_call__.1} parent=11 // pred_check
        %p564 = pneg %p118
      $region22: #{a_call__.1} parent=11 // pred_check_branch
        %566 = sbr.rel (%p564) target = $region24
      $region23: #{a_call__.1} parent=11 // pred_region
        _
      $region24: #{a_call__.1} parent=11 // pred_fallthru
        _
      // Predicated region
      $region25: #{a_call__.1} parent=11 // pred_check
        %p567 = pneg %p139
      $region26: #{a_call__.1} parent=11 // pred_check_branch
        %569 = sbr.rel (%p567) target = $region28
      $region27: #{a_call__.1} parent=11 // pred_region
        _
      $region28: #{a_call__.1} parent=11 // pred_fallthru
        _
      // Predicated region
      $region29: #{a_call__.1} parent=11 // pred_check
        %p570 = pneg %p160
      $region30: #{a_call__.1} parent=11 // pred_check_branch
        %572 = sbr.rel (%p570) target = $region32
      $region31: #{a_call__.1} parent=11 // pred_region
        _
      $region32: #{a_call__.1} parent=11 // pred_fallthru
        _
      // Predicated region
      $region33: #{a_call__.1} parent=11 // pred_check
        %p573 = pneg %p181
      $region34: #{a_call__.1} parent=11 // pred_check_branch
        %575 = sbr.rel (%p573) target = $region36
      $region35: #{a_call__.1} parent=11 // pred_region
        _
      $region36: #{a_call__.1} parent=11 // pred_fallthru
        _
      // Predicated region
      $region37: #{a_call__.1} parent=11 // pred_check
        %p576 = pneg %p202
      $region38: #{a_call__.1} parent=11 // pred_check_branch
        %578 = sbr.rel (%p576) target = $region40
      $region39: #{a_call__.1} parent=11 // pred_region
        _
      $region40: #{a_call__.1} parent=11 // pred_fallthru
        _
      // Predicated region
      $region41: #{a_call__.1} parent=11 // pred_check
        %p579 = pneg %p223
      $region42: #{a_call__.1} parent=11 // pred_check_branch
        %581 = sbr.rel (%p579) target = $region44
      $region43: #{a_call__.1} parent=11 // pred_region
        _
      $region44: #{a_call__.1} parent=11 // pred_fallthru
        _
      // Predicated region
      $region45: #{a_call__.1} parent=11 // pred_check
        %p582 = pneg %p244
      $region46: #{a_call__.1} parent=11 // pred_check_branch
        %584 = sbr.rel (%p582) target = $region48
      $region47: #{a_call__.1} parent=11 // pred_region
        _
      $region48: #{a_call__.1} parent=11 // pred_fallthru
        _
      // Predicated region
      $region49: #{a_call__.1} parent=11 // pred_check
        %p585 = pneg %p265
      $region50: #{a_call__.1} parent=11 // pred_check_branch
        %587 = sbr.rel (%p585) target = $region52
      $region51: #{a_call__.1} parent=11 // pred_region
        _
      $region52: #{a_call__.1} parent=11 // pred_fallthru
        _
      // Predicated region
      $region53: #{a_call__.1} parent=11 // pred_check
        %p588 = pneg %p286
      $region54: #{a_call__.1} parent=11 // pred_check_branch
        %590 = sbr.rel (%p588) target = $region56
      $region55: #{a_call__.1} parent=11 // pred_region
        _
      $region56: #{a_call__.1} parent=11 // pred_fallthru
        _
      // Predicated region
      $region57: #{a_call__.1} parent=11 // pred_check
        %p591 = pneg %p307
      $region58: #{a_call__.1} parent=11 // pred_check_branch
        %593 = sbr.rel (%p591) target = $region60
      $region59: #{a_call__.1} parent=11 // pred_region
        _
      $region60: #{a_call__.1} parent=11 // pred_fallthru
        _
      // Predicated region
      $region61: #{a_call__.1} parent=11 // pred_check
        %p594 = pneg %p328
      $region62: #{a_call__.1} parent=11 // pred_check_branch
        %596 = sbr.rel (%p594) target = $region64
      $region63: #{a_call__.1} parent=11 // pred_region
        _
      $region64: #{a_call__.1} parent=11 // pred_fallthru
        _
      // Predicated region
      $region65: #{a_call__.1} parent=11 // pred_check
        %p597 = pneg %p349
      $region66: #{a_call__.1} parent=11 // pred_check_branch
        %599 = sbr.rel (%p597) target = $region68
      $region67: #{a_call__.1} parent=11 // pred_region
        _
      $region68: #{a_call__.1} parent=11 // pred_fallthru
        _
      // Predicated region
      $region69: #{a_call__.1} parent=11 // pred_check
        %p600 = pneg %p370
      $region70: #{a_call__.1} parent=11 // pred_check_branch
        %602 = sbr.rel (%p600) target = $region72
      $region71: #{a_call__.1} parent=11 // pred_region
        _
      $region72: #{a_call__.1} parent=11 // pred_fallthru
        _
      // Predicated region
      $region73: #{a_call__.1} parent=11 // pred_check
        %p603 = pneg %p391
      $region74: #{a_call__.1} parent=11 // pred_check_branch
        %605 = sbr.rel (%p603) target = $region76
      $region75: #{a_call__.1} parent=11 // pred_region
        _
      $region76: #{a_call__.1} parent=11 // pred_fallthru
        _
      // Predicated region
      $region77: #{a_call__.1} parent=11 // pred_check
        %p606 = pneg %p412
      $region78: #{a_call__.1} parent=11 // pred_check_branch
        %608 = sbr.rel (%p606) target = $region80
      $region79: #{a_call__.1} parent=11 // pred_region
        _
      $region80: #{a_call__.1} parent=11 // pred_fallthru
        _
      // Predicated region
      $region81: #{a_call__.1} parent=11 // pred_check
        %p609 = pneg %p433
      $region82: #{a_call__.1} parent=11 // pred_check_branch
        %611 = sbr.rel (%p609) target = $region84
      $region83: #{a_call__.1} parent=11 // pred_region
        _
      $region84: #{a_call__.1} parent=11 // pred_fallthru
        _
      // Predicated region
      $region85: #{a_call__.1} parent=11 // pred_check
        %p612 = pneg %p454
      $region86: #{a_call__.1} parent=11 // pred_check_branch
        %614 = sbr.rel (%p612) target = $region88
      $region87: #{a_call__.1} parent=11 // pred_region
        _
      $region88: #{a_call__.1} parent=11 // pred_fallthru
        _
      // Predicated region
      $region89: #{a_call__.1} parent=11 // pred_check
        %p615 = pneg %p475
      $region90: #{a_call__.1} parent=11 // pred_check_branch
        %617 = sbr.rel (%p615) target = $region92
      $region91: #{a_call__.1} parent=11 // pred_region
        _
      $region92: #{a_call__.1} parent=11 // pred_fallthru
        _
      // Predicated region
      $region93: #{a_call__.1} parent=11 // pred_check
        %p618 = pneg %p496
      $region94: #{a_call__.1} parent=11 // pred_check_branch
        %620 = sbr.rel (%p618) target = $region96
      $region95: #{a_call__.1} parent=11 // pred_region
        _
      $region96: #{a_call__.1} parent=11 // pred_fallthru
        _
      // Predicated region
      $region97: #{a_call__.1} parent=11 // pred_check
        %p621 = pneg %p517
      $region98: #{a_call__.1} parent=11 // pred_check_branch
        %623 = sbr.rel (%p621) target = $region100
      $region99: #{a_call__.1} parent=11 // pred_region
        _
      $region100: #{a_call__.1} parent=11 // pred_fallthru
        _
    $region12: #{a_call__.1} parent=5 // pred_fallthru
      _
    %p624 = scmp.lt.s32.totalorder %s29, 2
    // Predicated region
    $region101: #{a_call__.1} parent=5 // pred_check
      %p625 = pneg %p624
    $region102: #{a_call__.1} parent=5 // pred_check_branch
      %627 = sbr.rel (%p625) target = $region104
    $region103: #{a_call__.1} parent=5 // pred_region
      // Predicated region
      $region105: #{a_call__.1} parent=103 // pred_check
        %p628 = pneg %p49
      $region106: #{a_call__.1} parent=103 // pred_check_branch
        %630 = sbr.rel (%p628) target = $region108
      $region107: #{a_call__.1} parent=103 // pred_region
        %p631 = scmp.lt.s32.totalorder %s29, 1
        %s632 = scalar_select %p631, %s29, 1
        %s633 = smul.addr %s632, 8
        %s634 = smul.addr %s633, 8
        %s635 = scalar_lea.vmem %s0, %s634
      $region108: #{a_call__.1} parent=103 // pred_fallthru
        _
    $region104: #{a_call__.1} parent=5 // pred_fallthru
      _
    %p636 = scmp.le.s32.totalorder 1, %s29
    %p637 = scmp.lt.s32.totalorder %s29, 3
    %p638 = pnand %p636, %p637
    %p639 = pneg %p638
    // Predicated region
    $region109: #{a_call__.1} parent=5 // pred_check
      _
    $region110: #{a_call__.1} parent=5 // pred_check_branch
      %641 = sbr.rel (%p638) target = $region112
    $region111: #{a_call__.1} parent=5 // pred_region
      %s642 = ssub.s32 %s29, 1
      %p643 = scmp.lt.s32.totalorder %s34, 1
      %s644 = scalar_select %p643, %s34, 1
      %s645 = smul.addr %s644, 8
      %s646 = smul.addr %s645, 8
      %s647 = scalar_lea.vmem %s0, %s646
      %p648 = pneg %p55
      %p649 = pneg %p52
      %p650 = pneg %p76
      %p651 = pneg %p73
      %p652 = pneg %p97
      %p653 = pneg %p94
      %p654 = pneg %p118
      %p655 = pneg %p115
      %p656 = pneg %p139
      %p657 = pneg %p136
      %p658 = pneg %p160
      %p659 = pneg %p157
      %p660 = pneg %p181
      %p661 = pneg %p178
      %p662 = pneg %p202
      %p663 = pneg %p199
      %p664 = pneg %p223
      %p665 = pneg %p220
      %p666 = pneg %p244
      %p667 = pneg %p241
      %p668 = pneg %p265
      %p669 = pneg %p262
      %p670 = pneg %p286
      %p671 = pneg %p283
      %p672 = pneg %p307
      %p673 = pneg %p304
      %p674 = pneg %p328
      %p675 = pneg %p325
      %p676 = pneg %p349
      %p677 = pneg %p346
      %p678 = pneg %p370
      %p679 = pneg %p367
      %p680 = pneg %p391
      %p681 = pneg %p388
      %p682 = pneg %p412
      %p683 = pneg %p409
      %p684 = pneg %p433
      %p685 = pneg %p430
      %p686 = pneg %p454
      %p687 = pneg %p451
      %p688 = pneg %p475
      %p689 = pneg %p472
      %p690 = pneg %p496
      %p691 = pneg %p493
      %p692 = pneg %p517
      %p693 = pneg %p514
      %p694 = pneg %p543
      %p695 = pneg %p540
      %p696 = scmp.lt.s32.totalorder %s34, 1
      %s697 = scalar_select %p696, %s34, 1
      %s698 = smul.addr %s697, 8
      %s699 = smul.addr %s698, 8
      %s700 = scalar_lea.vmem %s23, %s699
      %p701 = scmp.lt.s32.totalorder %s34, 1
      %s702 = scalar_select %p701, %s34, 1
      %s703 = smul.addr %s702, 8
      %s704 = smul.addr %s703, 8
      %s705 = scalar_lea.vmem %s0, %s704
      %p706 = scmp.lt.s32.totalorder %s34, 1
      %s707 = scalar_select %p706, %s34, 1
      %s708 = smul.addr %s707, 8
      %s709 = smul.addr %s708, 8
      %s710 = scalar_lea.vmem %s23, %s709
      %v712 = vld [vmem:[%s705] sm:$0xff]
      %v713 = vld [vmem:[%s705 + $0x8] sm:$0xff]
      %v714 = vld [vmem:[%s705 + $0x10] sm:$0xff]
      %v715 = vld [vmem:[%s705 + $0x18] sm:$0xff]
      %v716 = vld [vmem:[%s705 + $0x20] sm:$0xff]
      %v717 = vld [vmem:[%s705 + $0x28] sm:$0xff]
      %v718 = vld [vmem:[%s705 + $0x30] sm:$0xff]
      %v719 = vld [vmem:[%s705 + $0x38] sm:$0xff]
      %v720 = vld [vmem:[%s1] sm:$0xff]
      %v721 = vld [vmem:[%s1 + $0x8] sm:$0xff]
      %vm722 = vcmask 523264
      %v724 = vsel %vm722, %v720, 0
      %v727 = vsel %vm722, %v721, 0
      %729 = vmatprep.subr.mxu0 0.0
      %730 = vmatpush1.msra.mxu0 %v712
      %731 = vmatprep.subr.mxu0 0.0
      %732 = vmatpush1.msra.mxu0 %v713
      %733 = vmatprep.subr.mxu0 0.0
      %734 = vmatpush1.msra.mxu0 %v714
      %735 = vmatprep.subr.mxu0 0.0
      %736 = vmatpush1.msra.mxu0 %v715
      %737 = vmatprep.subr.mxu0 0.0
      %738 = vmatpush1.msra.mxu0 %v716
      %739 = vmatprep.subr.mxu0 0.0
      %740 = vmatpush1.msra.mxu0 %v717
      %741 = vmatprep.subr.mxu0 0.0
      %742 = vmatpush1.msra.mxu0 %v718
      %743 = vmatprep.subr.mxu0 0.0
      %744 = vmatpush1.msra.mxu0 %v719
      %745 = vmatprep.subr.mxu0 0.0
      %746 = vmatpush1.msra.mxu0 0.0
      %747 = vmatprep.subr.mxu0 0.0
      %748 = vmatpush1.msra.mxu0 0.0
      %749 = vmatprep.subr.mxu0 0.0
      %750 = vmatpush1.msra.mxu0 0.0
      %751 = vmatprep.subr.mxu0 0.0
      %752 = vmatpush1.msra.mxu0 0.0
      %753 = vmatprep.subr.mxu0 0.0
      %754 = vmatpush1.msra.mxu0 0.0
      %755 = vmatprep.subr.mxu0 0.0
      %756 = vmatpush1.msra.mxu0 0.0
      %757 = vmatprep.subr.mxu0 0.0
      %758 = vmatpush1.msra.mxu0 0.0
      %759 = vmatprep.subr.mxu0 0.0
      %760 = vmatpush1.msra.mxu0 0.0
      %761 = vmatprep.subr.mxu0 0.0
      %762 = vmatpush1.msra.mxu0 0.0
      %763 = vmatprep.subr.mxu0 0.0
      %764 = vmatpush1.msra.mxu0 0.0
      %765 = vmatprep.subr.mxu0 0.0
      %766 = vmatpush1.msra.mxu0 0.0
      %767 = vmatprep.subr.mxu0 0.0
      %768 = vmatpush1.msra.mxu0 0.0
      %769 = vmatprep.subr.mxu0 0.0
      %770 = vmatpush1.msra.mxu0 0.0
      %771 = vmatprep.subr.mxu0 0.0
      %772 = vmatpush1.msra.mxu0 0.0
      %773 = vmatprep.subr.mxu0 0.0
      %774 = vmatpush1.msra.mxu0 0.0
      %775 = vmatprep.subr.mxu0 0.0
      %776 = vmatpush1.msra.mxu0 0.0
      %777 = vmatprep.subr.mxu0 0.0
      %778 = vmatpush1.msra.mxu0 0.0
      %779 = vmatprep.subr.mxu0 0.0
      %780 = vmatpush1.msra.mxu0 0.0
      %781 = vmatprep.subr.mxu0 0.0
      %782 = vmatpush1.msra.mxu0 0.0
      %783 = vmatprep.subr.mxu0 0.0
      %784 = vmatpush1.msra.mxu0 0.0
      %785 = vmatprep.subr.mxu0 0.0
      %786 = vmatpush1.msra.mxu0 0.0
      %787 = vmatprep.subr.mxu0 0.0
      %788 = vmatpush1.msra.mxu0 0.0
      %789 = vmatprep.subr.mxu0 0.0
      %790 = vmatpush1.msra.mxu0 0.0
      %791 = vmatprep.subr.mxu0 0.0
      %792 = vmatpush1.msra.mxu0 0.0
      %793 = vmatprep.mubr.f32.mxu0 0.0
      %794 = vmatmul.mubr.f32.gmra.mrb[0].mxu0 %v724
      %v795 = vpop.f32.mrb[0].mxu0
      %v796 = vadd.f32 0.0, %v795
      %v797 = vpop.f32.mrb[0].mxu0
      %798 = vmatprep.mubr.f32.mxu0 0.0
      %799 = vmatmul.mubr.f32.gmra.mrb[0].mxu0 %v727
      %v800 = vpop.f32.mrb[0].mxu0
      %v801 = vadd.f32 0.0, %v800
      %v802 = vpop.f32.mrb[0].mxu0
      %803 = vdwg.mxu0
      %v804 = vld [vmem:[%s2] sm:$0xff]
      %v805 = vld [vmem:[%s2 + $0x8] sm:$0xff]
      %v806 = vld [vmem:[%s2 + $0x10] sm:$0xff]
      %v807 = vld [vmem:[%s2 + $0x18] sm:$0xff]
      %v808 = vld [vmem:[%s2 + $0x20] sm:$0xff]
      %v809 = vld [vmem:[%s2 + $0x28] sm:$0xff]
      %v810 = vld [vmem:[%s2 + $0x30] sm:$0xff]
      %v811 = vld [vmem:[%s2 + $0x38] sm:$0xff]
      %vm812 = vcmask 130048
      %v814 = vsel %vm812, %v804, 0
      %v817 = vsel %vm812, %v805, 0
      %v820 = vsel %vm812, %v806, 0
      %v823 = vsel %vm812, %v807, 0
      %v826 = vsel %vm812, %v808, 0
      %v829 = vsel %vm812, %v809, 0
      %v832 = vsel %vm812, %v810, 0
      %v835 = vsel %vm812, %v811, 0
      %837 = vmatprep.subr.mxu0 0.0
      %838 = vmatpush1.msra.mxu0 %v796
      %839 = vmatprep.subr.mxu0 0.0
      %840 = vmatpush1.msra.mxu0 %v801
      %841 = vmatprep.subr.mxu0 0.0
      %842 = vmatpush1.msra.mxu0 0.0
      %843 = vmatprep.subr.mxu0 0.0
      %844 = vmatpush1.msra.mxu0 0.0
      %845 = vmatprep.subr.mxu0 0.0
      %846 = vmatpush1.msra.mxu0 0.0
      %847 = vmatprep.subr.mxu0 0.0
      %848 = vmatpush1.msra.mxu0 0.0
      %849 = vmatprep.subr.mxu0 0.0
      %850 = vmatpush1.msra.mxu0 0.0
      %851 = vmatprep.subr.mxu0 0.0
      %852 = vmatpush1.msra.mxu0 0.0
      %853 = vmatprep.subr.mxu0 0.0
      %854 = vmatpush1.msra.mxu0 0.0
      %855 = vmatprep.subr.mxu0 0.0
      %856 = vmatpush1.msra.mxu0 0.0
      %857 = vmatprep.subr.mxu0 0.0
      %858 = vmatpush1.msra.mxu0 0.0
      %859 = vmatprep.subr.mxu0 0.0
      %860 = vmatpush1.msra.mxu0 0.0
      %861 = vmatprep.subr.mxu0 0.0
      %862 = vmatpush1.msra.mxu0 0.0
      %863 = vmatprep.subr.mxu0 0.0
      %864 = vmatpush1.msra.mxu0 0.0
      %865 = vmatprep.subr.mxu0 0.0
      %866 = vmatpush1.msra.mxu0 0.0
      %867 = vmatprep.subr.mxu0 0.0
      %868 = vmatpush1.msra.mxu0 0.0
      %869 = vmatprep.subr.mxu0 0.0
      %870 = vmatpush1.msra.mxu0 0.0
      %871 = vmatprep.subr.mxu0 0.0
      %872 = vmatpush1.msra.mxu0 0.0
      %873 = vmatprep.subr.mxu0 0.0
      %874 = vmatpush1.msra.mxu0 0.0
      %875 = vmatprep.subr.mxu0 0.0
      %876 = vmatpush1.msra.mxu0 0.0
      %877 = vmatprep.subr.mxu0 0.0
      %878 = vmatpush1.msra.mxu0 0.0
      %879 = vmatprep.subr.mxu0 0.0
      %880 = vmatpush1.msra.mxu0 0.0
      %881 = vmatprep.subr.mxu0 0.0
      %882 = vmatpush1.msra.mxu0 0.0
      %883 = vmatprep.subr.mxu0 0.0
      %884 = vmatpush1.msra.mxu0 0.0
      %885 = vmatprep.subr.mxu0 0.0
      %886 = vmatpush1.msra.mxu0 0.0
      %887 = vmatprep.subr.mxu0 0.0
      %888 = vmatpush1.msra.mxu0 0.0
      %889 = vmatprep.subr.mxu0 0.0
      %890 = vmatpush1.msra.mxu0 0.0
      %891 = vmatprep.subr.mxu0 0.0
      %892 = vmatpush1.msra.mxu0 0.0
      %893 = vmatprep.subr.mxu0 0.0
      %894 = vmatpush1.msra.mxu0 0.0
      %895 = vmatprep.subr.mxu0 0.0
      %896 = vmatpush1.msra.mxu0 0.0
      %897 = vmatprep.subr.mxu0 0.0
      %898 = vmatpush1.msra.mxu0 0.0
      %899 = vmatprep.subr.mxu0 0.0
      %900 = vmatpush1.msra.mxu0 0.0
      %901 = vmatprep.mubr.f32.mxu0 0.0
      %902 = vmatmul.mubr.f32.gmra.mrb[0].mxu0 %v814
      %v903 = vpop.f32.mrb[0].mxu0
      %v904 = vadd.f32 0.0, %v903
      %v905 = vpop.f32.mrb[0].mxu0
      %906 = vmatprep.mubr.f32.mxu0 0.0
      %907 = vmatmul.mubr.f32.gmra.mrb[0].mxu0 %v817
      %v908 = vpop.f32.mrb[0].mxu0
      %v909 = vadd.f32 0.0, %v908
      %v910 = vpop.f32.mrb[0].mxu0
      %911 = vmatprep.mubr.f32.mxu0 0.0
      %912 = vmatmul.mubr.f32.gmra.mrb[0].mxu0 %v820
      %v913 = vpop.f32.mrb[0].mxu0
      %v914 = vadd.f32 0.0, %v913
      %v915 = vpop.f32.mrb[0].mxu0
      %916 = vmatprep.mubr.f32.mxu0 0.0
      %917 = vmatmul.mubr.f32.gmra.mrb[0].mxu0 %v823
      %v918 = vpop.f32.mrb[0].mxu0
      %v919 = vadd.f32 0.0, %v918
      %v920 = vpop.f32.mrb[0].mxu0
      %921 = vmatprep.mubr.f32.mxu0 0.0
      %922 = vmatmul.mubr.f32.gmra.mrb[0].mxu0 %v826
      %v923 = vpop.f32.mrb[0].mxu0
      %v924 = vadd.f32 0.0, %v923
      %v925 = vpop.f32.mrb[0].mxu0
      %926 = vmatprep.mubr.f32.mxu0 0.0
      %927 = vmatmul.mubr.f32.gmra.mrb[0].mxu0 %v829
      %v928 = vpop.f32.mrb[0].mxu0
      %v929 = vadd.f32 0.0, %v928
      %v930 = vpop.f32.mrb[0].mxu0
      %931 = vmatprep.mubr.f32.mxu0 0.0
      %932 = vmatmul.mubr.f32.gmra.mrb[0].mxu0 %v832
      %v933 = vpop.f32.mrb[0].mxu0
      %v934 = vadd.f32 0.0, %v933
      %v935 = vpop.f32.mrb[0].mxu0
      %936 = vmatprep.mubr.f32.mxu0 0.0
      %937 = vmatmul.mubr.f32.gmra.mrb[0].mxu0 %v835
      %v938 = vpop.f32.mrb[0].mxu0
      %v939 = vadd.f32 0.0, %v938
      %v940 = vpop.f32.mrb[0].mxu0
      %941 = vdwg.mxu0
      %v942 = vsub.f32 %v712, %v904
      %v943 = vsub.f32 %v713, %v909
      %v944 = vsub.f32 %v714, %v914
      %v945 = vsub.f32 %v715, %v919
      %v946 = vsub.f32 %v716, %v924
      %v947 = vsub.f32 %v717, %v929
      %v948 = vsub.f32 %v718, %v934
      %v949 = vsub.f32 %v719, %v939
      %v950 = vmul.f32 %v942, %v942
      %v951 = vmul.f32 %v943, %v943
      %v952 = vmul.f32 %v944, %v944
      %v953 = vmul.f32 %v945, %v945
      %v954 = vmul.f32 %v946, %v946
      %v955 = vmul.f32 %v947, %v947
      %v956 = vmul.f32 %v948, %v948
      %v957 = vmul.f32 %v949, %v949
      %958 = vmatprep.subr.mxu0 0.0
      %959 = vmatpush1.msra.mxu0 %v950
      %960 = vmatprep.subr.mxu0 0.0
      %961 = vmatpush1.msra.mxu0 %v951
      %962 = vmatprep.subr.mxu0 0.0
      %963 = vmatpush1.msra.mxu0 %v952
      %964 = vmatprep.subr.mxu0 0.0
      %965 = vmatpush1.msra.mxu0 %v953
      %966 = vmatprep.subr.mxu0 0.0
      %967 = vmatpush1.msra.mxu0 %v954
      %968 = vmatprep.subr.mxu0 0.0
      %969 = vmatpush1.msra.mxu0 %v955
      %970 = vmatprep.subr.mxu0 0.0
      %971 = vmatpush1.msra.mxu0 %v956
      %972 = vmatprep.subr.mxu0 0.0
      %973 = vmatpush1.msra.mxu0 %v957
      %974 = vmatprep.subr.mxu0 0.0
      %975 = vmatpush1.msra.mxu0 0.0
      %976 = vmatprep.subr.mxu0 0.0
      %977 = vmatpush1.msra.mxu0 0.0
      %978 = vmatprep.subr.mxu0 0.0
      %979 = vmatpush1.msra.mxu0 0.0
      %980 = vmatprep.subr.mxu0 0.0
      %981 = vmatpush1.msra.mxu0 0.0
      %982 = vmatprep.subr.mxu0 0.0
      %983 = vmatpush1.msra.mxu0 0.0
      %984 = vmatprep.subr.mxu0 0.0
      %985 = vmatpush1.msra.mxu0 0.0
      %986 = vmatprep.subr.mxu0 0.0
      %987 = vmatpush1.msra.mxu0 0.0
      %988 = vmatprep.subr.mxu0 0.0
      %989 = vmatpush1.msra.mxu0 0.0
      %990 = vmatprep.subr.mxu0 0.0
      %991 = vmatpush1.msra.mxu0 0.0
      %992 = vmatprep.subr.mxu0 0.0
      %993 = vmatpush1.msra.mxu0 0.0
      %994 = vmatprep.subr.mxu0 0.0
      %995 = vmatpush1.msra.mxu0 0.0
      %996 = vmatprep.subr.mxu0 0.0
      %997 = vmatpush1.msra.mxu0 0.0
      %998 = vmatprep.subr.mxu0 0.0
      %999 = vmatpush1.msra.mxu0 0.0
      %1000 = vmatprep.subr.mxu0 0.0
      %1001 = vmatpush1.msra.mxu0 0.0
      %1002 = vmatprep.subr.mxu0 0.0
      %1003 = vmatpush1.msra.mxu0 0.0
      %1004 = vmatprep.subr.mxu0 0.0
      %1005 = vmatpush1.msra.mxu0 0.0
      %1006 = vmatprep.subr.mxu0 0.0
      %1007 = vmatpush1.msra.mxu0 0.0
      %1008 = vmatprep.subr.mxu0 0.0
      %1009 = vmatpush1.msra.mxu0 0.0
      %1010 = vmatprep.subr.mxu0 0.0
      %1011 = vmatpush1.msra.mxu0 0.0
      %1012 = vmatprep.subr.mxu0 0.0
      %1013 = vmatpush1.msra.mxu0 0.0
      %1014 = vmatprep.subr.mxu0 0.0
      %1015 = vmatpush1.msra.mxu0 0.0
      %1016 = vmatprep.subr.mxu0 0.0
      %1017 = vmatpush1.msra.mxu0 0.0
      %1018 = vmatprep.subr.mxu0 0.0
      %1019 = vmatpush1.msra.mxu0 0.0
      %1020 = vmatprep.subr.mxu0 0.0
      %1021 = vmatpush1.msra.mxu0 0.0
      %1022 = vmatprep.mubr.f32.mxu0 0.0
      %1023 = vmatmul.mubr.f32.gmra.mrb[0].mxu0 %v724
      %v1024 = vpop.f32.mrb[0].mxu0
      %v1025 = vadd.f32 1e-05, %v1024
      %v1026 = vpop.f32.mrb[0].mxu0
      %1027 = vmatprep.mubr.f32.mxu0 0.0
      %1028 = vmatmul.mubr.f32.gmra.mrb[0].mxu0 %v727
      %v1029 = vpop.f32.mrb[0].mxu0
      %v1030 = vadd.f32 1e-05, %v1029
      %v1031 = vpop.f32.mrb[0].mxu0
      %1032 = vdwg.mxu0
      %v1033 = vrsqrt.pop %v1025
      %v1034 = vrsqrt.pop %v1030
      %1035 = vmatprep.subr.mxu0 0.0
      %1036 = vmatpush1.msra.mxu0 %v1033
      %1037 = vmatprep.subr.mxu0 0.0
      %1038 = vmatpush1.msra.mxu0 %v1034
      %1039 = vmatprep.subr.mxu0 0.0
      %1040 = vmatpush1.msra.mxu0 0.0
      %1041 = vmatprep.subr.mxu0 0.0
      %1042 = vmatpush1.msra.mxu0 0.0
      %1043 = vmatprep.subr.mxu0 0.0
      %1044 = vmatpush1.msra.mxu0 0.0
      %1045 = vmatprep.subr.mxu0 0.0
      %1046 = vmatpush1.msra.mxu0 0.0
      %1047 = vmatprep.subr.mxu0 0.0
      %1048 = vmatpush1.msra.mxu0 0.0
      %1049 = vmatprep.subr.mxu0 0.0
      %1050 = vmatpush1.msra.mxu0 0.0
      %1051 = vmatprep.subr.mxu0 0.0
      %1052 = vmatpush1.msra.mxu0 0.0
      %1053 = vmatprep.subr.mxu0 0.0
      %1054 = vmatpush1.msra.mxu0 0.0
      %1055 = vmatprep.subr.mxu0 0.0
      %1056 = vmatpush1.msra.mxu0 0.0
      %1057 = vmatprep.subr.mxu0 0.0
      %1058 = vmatpush1.msra.mxu0 0.0
      %1059 = vmatprep.subr.mxu0 0.0
      %1060 = vmatpush1.msra.mxu0 0.0
      %1061 = vmatprep.subr.mxu0 0.0
      %1062 = vmatpush1.msra.mxu0 0.0
      %1063 = vmatprep.subr.mxu0 0.0
      %1064 = vmatpush1.msra.mxu0 0.0
      %1065 = vmatprep.subr.mxu0 0.0
      %1066 = vmatpush1.msra.mxu0 0.0
      %1067 = vmatprep.subr.mxu0 0.0
      %1068 = vmatpush1.msra.mxu0 0.0
      %1069 = vmatprep.subr.mxu0 0.0
      %1070 = vmatpush1.msra.mxu0 0.0
      %1071 = vmatprep.subr.mxu0 0.0
      %1072 = vmatpush1.msra.mxu0 0.0
      %1073 = vmatprep.subr.mxu0 0.0
      %1074 = vmatpush1.msra.mxu0 0.0
      %1075 = vmatprep.subr.mxu0 0.0
      %1076 = vmatpush1.msra.mxu0 0.0
      %1077 = vmatprep.subr.mxu0 0.0
      %1078 = vmatpush1.msra.mxu0 0.0
      %1079 = vmatprep.subr.mxu0 0.0
      %1080 = vmatpush1.msra.mxu0 0.0
      %1081 = vmatprep.subr.mxu0 0.0
      %1082 = vmatpush1.msra.mxu0 0.0
      %1083 = vmatprep.subr.mxu0 0.0
      %1084 = vmatpush1.msra.mxu0 0.0
      %1085 = vmatprep.subr.mxu0 0.0
      %1086 = vmatpush1.msra.mxu0 0.0
      %1087 = vmatprep.subr.mxu0 0.0
      %1088 = vmatpush1.msra.mxu0 0.0
      %1089 = vmatprep.subr.mxu0 0.0
      %1090 = vmatpush1.msra.mxu0 0.0
      %1091 = vmatprep.subr.mxu0 0.0
      %1092 = vmatpush1.msra.mxu0 0.0
      %1093 = vmatprep.subr.mxu0 0.0
      %1094 = vmatpush1.msra.mxu0 0.0
      %1095 = vmatprep.subr.mxu0 0.0
      %1096 = vmatpush1.msra.mxu0 0.0
      %1097 = vmatprep.subr.mxu0 0.0
      %1098 = vmatpush1.msra.mxu0 0.0
      %1099 = vmatprep.mubr.f32.mxu0 0.0
      %1100 = vmatmul.mubr.f32.gmra.mrb[0].mxu0 %v814
      %v1101 = vpop.f32.mrb[0].mxu0
      %v1102 = vadd.f32 0.0, %v1101
      %v1103 = vpop.f32.mrb[0].mxu0
      %1104 = vmatprep.mubr.f32.mxu0 0.0
      %1105 = vmatmul.mubr.f32.gmra.mrb[0].mxu0 %v817
      %v1106 = vpop.f32.mrb[0].mxu0
      %v1107 = vadd.f32 0.0, %v1106
      %v1108 = vpop.f32.mrb[0].mxu0
      %1109 = vmatprep.mubr.f32.mxu0 0.0
      %1110 = vmatmul.mubr.f32.gmra.mrb[0].mxu0 %v820
      %v1111 = vpop.f32.mrb[0].mxu0
      %v1112 = vadd.f32 0.0, %v1111
      %v1113 = vpop.f32.mrb[0].mxu0
      %1114 = vmatprep.mubr.f32.mxu0 0.0
      %1115 = vmatmul.mubr.f32.gmra.mrb[0].mxu0 %v823
      %v1116 = vpop.f32.mrb[0].mxu0
      %v1117 = vadd.f32 0.0, %v1116
      %v1118 = vpop.f32.mrb[0].mxu0
      %1119 = vmatprep.mubr.f32.mxu0 0.0
      %1120 = vmatmul.mubr.f32.gmra.mrb[0].mxu0 %v826
      %v1121 = vpop.f32.mrb[0].mxu0
      %v1122 = vadd.f32 0.0, %v1121
      %v1123 = vpop.f32.mrb[0].mxu0
      %1124 = vmatprep.mubr.f32.mxu0 0.0
      %1125 = vmatmul.mubr.f32.gmra.mrb[0].mxu0 %v829
      %v1126 = vpop.f32.mrb[0].mxu0
      %v1127 = vadd.f32 0.0, %v1126
      %v1128 = vpop.f32.mrb[0].mxu0
      %1129 = vmatprep.mubr.f32.mxu0 0.0
      %1130 = vmatmul.mubr.f32.gmra.mrb[0].mxu0 %v832
      %v1131 = vpop.f32.mrb[0].mxu0
      %v1132 = vadd.f32 0.0, %v1131
      %v1133 = vpop.f32.mrb[0].mxu0
      %1134 = vmatprep.mubr.f32.mxu0 0.0
      %1135 = vmatmul.mubr.f32.gmra.mrb[0].mxu0 %v835
      %v1136 = vpop.f32.mrb[0].mxu0
      %v1137 = vadd.f32 0.0, %v1136
      %v1138 = vpop.f32.mrb[0].mxu0
      %1139 = vdwg.mxu0
      %v1140 = vmul.f32 %v942, %v1102
      %v1141 = vmul.f32 %v943, %v1107
      %v1142 = vmul.f32 %v944, %v1112
      %v1143 = vmul.f32 %v945, %v1117
      %v1144 = vmul.f32 %v946, %v1122
      %v1145 = vmul.f32 %v947, %v1127
      %v1146 = vmul.f32 %v948, %v1132
      %v1147 = vmul.f32 %v949, %v1137
      %v1148 = vld [vmem:[%s3] sm:$0xff]
      %v1149 = vld [vmem:[%s3 + $0x8] sm:$0xff]
      %v1150 = vld [vmem:[%s3 + $0x10] sm:$0xff]
      %v1151 = vld [vmem:[%s3 + $0x18] sm:$0xff]
      %v1152 = vld [vmem:[%s3 + $0x20] sm:$0xff]
      %v1153 = vld [vmem:[%s3 + $0x28] sm:$0xff]
      %v1154 = vld [vmem:[%s3 + $0x30] sm:$0xff]
      %v1155 = vld [vmem:[%s3 + $0x38] sm:$0xff]
      %1157 = vset.pattern.permute.xlu0 0
      %1158 = vperm.xlu0 %1157, %v1148
      %v1159 = vpop.permute.xlu0 %1158
      %1162 = vset.pattern.permute.xlu0 0
      %1163 = vperm.xlu0 %1162, %v1149
      %v1164 = vpop.permute.xlu0 %1163
      %1167 = vset.pattern.permute.xlu0 0
      %1168 = vperm.xlu0 %1167, %v1150
      %v1169 = vpop.permute.xlu0 %1168
      %1172 = vset.pattern.permute.xlu0 0
      %1173 = vperm.xlu0 %1172, %v1151
      %v1174 = vpop.permute.xlu0 %1173
      %1177 = vset.pattern.permute.xlu0 0
      %1178 = vperm.xlu0 %1177, %v1152
      %v1179 = vpop.permute.xlu0 %1178
      %1182 = vset.pattern.permute.xlu0 0
      %1183 = vperm.xlu0 %1182, %v1153
      %v1184 = vpop.permute.xlu0 %1183
      %1187 = vset.pattern.permute.xlu0 0
      %1188 = vperm.xlu0 %1187, %v1154
      %v1189 = vpop.permute.xlu0 %1188
      %1192 = vset.pattern.permute.xlu0 0
      %1193 = vperm.xlu0 %1192, %v1155
      %v1194 = vpop.permute.xlu0 %1193
      %v1196 = vmul.f32 %v1140, %v1159
      %v1197 = vmul.f32 %v1141, %v1164
      %v1198 = vmul.f32 %v1142, %v1169
      %v1199 = vmul.f32 %v1143, %v1174
      %v1200 = vmul.f32 %v1144, %v1179
      %v1201 = vmul.f32 %v1145, %v1184
      %v1202 = vmul.f32 %v1146, %v1189
      %v1203 = vmul.f32 %v1147, %v1194
      %v1204 = vld [vmem:[%s4] sm:$0xff]
      %v1205 = vld [vmem:[%s4 + $0x8] sm:$0xff]
      %v1206 = vld [vmem:[%s4 + $0x10] sm:$0xff]
      %v1207 = vld [vmem:[%s4 + $0x18] sm:$0xff]
      %v1208 = vld [vmem:[%s4 + $0x20] sm:$0xff]
      %v1209 = vld [vmem:[%s4 + $0x28] sm:$0xff]
      %v1210 = vld [vmem:[%s4 + $0x30] sm:$0xff]
      %v1211 = vld [vmem:[%s4 + $0x38] sm:$0xff]
      %1213 = vset.pattern.permute.xlu0 0
      %1214 = vperm.xlu0 %1213, %v1204
      %v1215 = vpop.permute.xlu0 %1214
      %1218 = vset.pattern.permute.xlu0 0
      %1219 = vperm.xlu0 %1218, %v1205
      %v1220 = vpop.permute.xlu0 %1219
      %1223 = vset.pattern.permute.xlu0 0
      %1224 = vperm.xlu0 %1223, %v1206
      %v1225 = vpop.permute.xlu0 %1224
      %1228 = vset.pattern.permute.xlu0 0
      %1229 = vperm.xlu0 %1228, %v1207
      %v1230 = vpop.permute.xlu0 %1229
      %1233 = vset.pattern.permute.xlu0 0
      %1234 = vperm.xlu0 %1233, %v1208
      %v1235 = vpop.permute.xlu0 %1234
      %1238 = vset.pattern.permute.xlu0 0
      %1239 = vperm.xlu0 %1238, %v1209
      %v1240 = vpop.permute.xlu0 %1239
      %1243 = vset.pattern.permute.xlu0 0
      %1244 = vperm.xlu0 %1243, %v1210
      %v1245 = vpop.permute.xlu0 %1244
      %1248 = vset.pattern.permute.xlu0 0
      %1249 = vperm.xlu0 %1248, %v1211
      %v1250 = vpop.permute.xlu0 %1249
      %v1252 = vadd.f32 %v1196, %v1215
      %v1253 = vadd.f32 %v1197, %v1220
      %v1254 = vadd.f32 %v1198, %v1225
      %v1255 = vadd.f32 %v1199, %v1230
      %v1256 = vadd.f32 %v1200, %v1235
      %v1257 = vadd.f32 %v1201, %v1240
      %v1258 = vadd.f32 %v1202, %v1245
      %v1259 = vadd.f32 %v1203, %v1250
      %v1260 = vld [vmem:[%s5] sm:$0xf]
      %v1261 = vld [vmem:[%s5 + $0x4] sm:$0xf]
      %v1262 = vld [vmem:[%s5 + $0x8] sm:$0xf]
      %v1263 = vld [vmem:[%s5 + $0xc] sm:$0xf]
      %v1264 = vld [vmem:[%s5 + $0x10] sm:$0xf]
      %v1265 = vld [vmem:[%s5 + $0x14] sm:$0xf]
      %v1266 = vld [vmem:[%s5 + $0x18] sm:$0xf]
      %v1267 = vld [vmem:[%s5 + $0x1c] sm:$0xf]
      %v1268 = vld [vmem:[%s5 + $0x20] sm:$0xf]
      %v1269 = vld [vmem:[%s5 + $0x24] sm:$0xf]
      %v1270 = vld [vmem:[%s5 + $0x28] sm:$0xf]
      %v1271 = vld [vmem:[%s5 + $0x2c] sm:$0xf]
      %v1272 = vld [vmem:[%s5 + $0x30] sm:$0xf]
      %v1273 = vld [vmem:[%s5 + $0x34] sm:$0xf]
      %v1274 = vld [vmem:[%s5 + $0x38] sm:$0xf]
      %v1275 = vld [vmem:[%s5 + $0x3c] sm:$0xf]
      %v1276 = vpack.c.bf16 %v1253, %v1252
      %v1277 = vpack.c.bf16 %v1255, %v1254
      %v1278 = vpack.c.bf16 %v1257, %v1256
      %v1279 = vpack.c.bf16 %v1259, %v1258
      %v1280 = vld [vmem:[%s6] sm:$0xff]
      %v1281 = vld [vmem:[%s6 + $0x8] sm:$0xff]
      %v1282 = vld [vmem:[%s6 + $0x10] sm:$0xff]
      %v1283 = vld [vmem:[%s6 + $0x18] sm:$0xff]
      %v1284 = vld [vmem:[%s6 + $0x20] sm:$0xff]
      %v1285 = vld [vmem:[%s6 + $0x28] sm:$0xff]
      %v1286 = vld [vmem:[%s6 + $0x30] sm:$0xff]
      %v1287 = vld [vmem:[%s6 + $0x38] sm:$0xff]
      %v1288 = vld [vmem:[%s6 + $0x40] sm:$0xff]
      %v1289 = vld [vmem:[%s6 + $0x48] sm:$0xff]
      %v1290 = vld [vmem:[%s6 + $0x50] sm:$0xff]
      %v1291 = vld [vmem:[%s6 + $0x58] sm:$0xff]
      %v1292 = vld [vmem:[%s6 + $0x60] sm:$0xff]
      %v1293 = vld [vmem:[%s6 + $0x68] sm:$0xff]
      %v1294 = vld [vmem:[%s6 + $0x70] sm:$0xff]
      %v1295 = vld [vmem:[%s6 + $0x78] sm:$0xff]
      %1297 = vset.pattern.permute.xlu0 0
      %1298 = vperm.xlu0 %1297, %v1280
      %v1299 = vpop.permute.xlu0 %1298
      %1302 = vset.pattern.permute.xlu0 0
      %1303 = vperm.xlu0 %1302, %v1281
      %v1304 = vpop.permute.xlu0 %1303
      %1307 = vset.pattern.permute.xlu0 0
      %1308 = vperm.xlu0 %1307, %v1282
      %v1309 = vpop.permute.xlu0 %1308
      %1312 = vset.pattern.permute.xlu0 0
      %1313 = vperm.xlu0 %1312, %v1283
      %v1314 = vpop.permute.xlu0 %1313
      %1317 = vset.pattern.permute.xlu0 0
      %1318 = vperm.xlu0 %1317, %v1284
      %v1319 = vpop.permute.xlu0 %1318
      %1322 = vset.pattern.permute.xlu0 0
      %1323 = vperm.xlu0 %1322, %v1285
      %v1324 = vpop.permute.xlu0 %1323
      %1327 = vset.pattern.permute.xlu0 0
      %1328 = vperm.xlu0 %1327, %v1286
      %v1329 = vpop.permute.xlu0 %1328
      %1332 = vset.pattern.permute.xlu0 0
      %1333 = vperm.xlu0 %1332, %v1287
      %v1334 = vpop.permute.xlu0 %1333
      %1337 = vset.pattern.permute.xlu0 0
      %1338 = vperm.xlu0 %1337, %v1288
      %v1339 = vpop.permute.xlu0 %1338
      %1342 = vset.pattern.permute.xlu0 0
      %1343 = vperm.xlu0 %1342, %v1289
      %v1344 = vpop.permute.xlu0 %1343
      %1347 = vset.pattern.permute.xlu0 0
      %1348 = vperm.xlu0 %1347, %v1290
      %v1349 = vpop.permute.xlu0 %1348
      %1352 = vset.pattern.permute.xlu0 0
      %1353 = vperm.xlu0 %1352, %v1291
      %v1354 = vpop.permute.xlu0 %1353
      %1357 = vset.pattern.permute.xlu0 0
      %1358 = vperm.xlu0 %1357, %v1292
      %v1359 = vpop.permute.xlu0 %1358
      %1362 = vset.pattern.permute.xlu0 0
      %1363 = vperm.xlu0 %1362, %v1293
      %v1364 = vpop.permute.xlu0 %1363
      %1367 = vset.pattern.permute.xlu0 0
      %1368 = vperm.xlu0 %1367, %v1294
      %v1369 = vpop.permute.xlu0 %1368
      %1372 = vset.pattern.permute.xlu0 0
      %1373 = vperm.xlu0 %1372, %v1295
      %v1374 = vpop.permute.xlu0 %1373
      %v1392 = vunpack.c.l.b16 %v1260
      %v1393 = vunpack.c.l.b16 %v1261
      %v1394 = vunpack.c.l.b16 %v1262
      %v1395 = vunpack.c.l.b16 %v1263
      %v1396 = vunpack.c.l.b16 %v1264
      %v1397 = vunpack.c.l.b16 %v1265
      %v1398 = vunpack.c.l.b16 %v1266
      %v1399 = vunpack.c.l.b16 %v1267
      %v1400 = vunpack.c.l.b16 %v1268
      %v1401 = vunpack.c.l.b16 %v1269
      %v1402 = vunpack.c.l.b16 %v1270
      %v1403 = vunpack.c.l.b16 %v1271
      %v1404 = vunpack.c.l.b16 %v1272
      %v1405 = vunpack.c.l.b16 %v1273
      %v1406 = vunpack.c.l.b16 %v1274
      %v1407 = vunpack.c.l.b16 %v1275
      %v1408 = vpack.c.b16 %v1393, %v1392
      %v1409 = vpack.c.b16 %v1395, %v1394
      %v1410 = vpack.c.b16 %v1397, %v1396
      %v1411 = vpack.c.b16 %v1399, %v1398
      %v1412 = vpack.c.b16 %v1401, %v1400
      %v1413 = vpack.c.b16 %v1403, %v1402
      %v1414 = vpack.c.b16 %v1405, %v1404
      %v1415 = vpack.c.b16 %v1407, %v1406
      %v1417 = vsel %vm722, %v1408, 0
      %v1420 = vsel %vm722, %v1409, 0
      %v1423 = vsel %vm722, %v1410, 0
      %v1426 = vsel %vm722, %v1411, 0
      %v1429 = vsel %vm722, %v1412, 0
      %v1432 = vsel %vm722, %v1413, 0
      %v1435 = vsel %vm722, %v1414, 0
      %v1438 = vsel %vm722, %v1415, 0
      %1440 = vmatprep.subr.bf16.mxu0 0
      %1441 = vmatpush1.bf16.msra.mxu0 %v1276
      %1442 = vmatprep.subr.bf16.mxu0 0
      %1443 = vmatpush1.bf16.msra.mxu0 %v1277
      %1444 = vmatprep.subr.bf16.mxu0 0
      %1445 = vmatpush1.bf16.msra.mxu0 %v1278
      %1446 = vmatprep.subr.bf16.mxu0 0
      %1447 = vmatpush1.bf16.msra.mxu0 %v1279
      %1448 = vmatprep.subr.bf16.mxu0 0
      %1449 = vmatpush1.bf16.msra.mxu0 0
      %1450 = vmatprep.subr.bf16.mxu0 0
      %1451 = vmatpush1.bf16.msra.mxu0 0
      %1452 = vmatprep.subr.bf16.mxu0 0
      %1453 = vmatpush1.bf16.msra.mxu0 0
      %1454 = vmatprep.subr.bf16.mxu0 0
      %1455 = vmatpush1.bf16.msra.mxu0 0
      %1456 = vmatprep.subr.bf16.mxu0 0
      %1457 = vmatpush1.bf16.msra.mxu0 0
      %1458 = vmatprep.subr.bf16.mxu0 0
      %1459 = vmatpush1.bf16.msra.mxu0 0
      %1460 = vmatprep.subr.bf16.mxu0 0
      %1461 = vmatpush1.bf16.msra.mxu0 0
      %1462 = vmatprep.subr.bf16.mxu0 0
      %1463 = vmatpush1.bf16.msra.mxu0 0
      %1464 = vmatprep.subr.bf16.mxu0 0
      %1465 = vmatpush1.bf16.msra.mxu0 0
      %1466 = vmatprep.subr.bf16.mxu0 0
      %1467 = vmatpush1.bf16.msra.mxu0 0
      %1468 = vmatprep.subr.bf16.mxu0 0
      %1469 = vmatpush1.bf16.msra.mxu0 0
      %1470 = vmatprep.subr.bf16.mxu0 0
      %1471 = vmatpush1.bf16.msra.mxu0 0
      %1472 = vmatprep.mubr.bf16.mxu0 0
      %1473 = vmatmul.mubr.bf16.gmra.mrb[0].mxu0 %v1417
      %v1474 = vpop.f32.mrb[0].mxu0
      %v1475 = vadd.f32 %v1299, %v1474
      %v1476 = vpop.f32.mrb[0].mxu0
      %v1477 = vpop.f32.mrb[0].mxu0
      %v1478 = vadd.f32 %v1304, %v1477
      %v1479 = vpop.f32.mrb[0].mxu0
      %1480 = vmatprep.mubr.bf16.mxu0 0
      %1481 = vmatmul.mubr.bf16.gmra.mrb[0].mxu0 %v1420
      %v1482 = vpop.f32.mrb[0].mxu0
      %v1483 = vadd.f32 %v1309, %v1482
      %v1484 = vpop.f32.mrb[0].mxu0
      %v1485 = vpop.f32.mrb[0].mxu0
      %v1486 = vadd.f32 %v1314, %v1485
      %v1487 = vpop.f32.mrb[0].mxu0
      %1488 = vmatprep.mubr.bf16.mxu0 0
      %1489 = vmatmul.mubr.bf16.gmra.mrb[0].mxu0 %v1423
      %v1490 = vpop.f32.mrb[0].mxu0
      %v1491 = vadd.f32 %v1319, %v1490
      %v1492 = vpop.f32.mrb[0].mxu0
      %v1493 = vpop.f32.mrb[0].mxu0
      %v1494 = vadd.f32 %v1324, %v1493
      %v1495 = vpop.f32.mrb[0].mxu0
      %1496 = vmatprep.mubr.bf16.mxu0 0
      %1497 = vmatmul.mubr.bf16.gmra.mrb[0].mxu0 %v1426
      %v1498 = vpop.f32.mrb[0].mxu0
      %v1499 = vadd.f32 %v1329, %v1498
      %v1500 = vpop.f32.mrb[0].mxu0
      %v1501 = vpop.f32.mrb[0].mxu0
      %v1502 = vadd.f32 %v1334, %v1501
      %v1503 = vpop.f32.mrb[0].mxu0
      %1504 = vmatprep.mubr.bf16.mxu0 0
      %1505 = vmatmul.mubr.bf16.gmra.mrb[0].mxu0 %v1429
      %v1506 = vpop.f32.mrb[0].mxu0
      %v1507 = vadd.f32 %v1339, %v1506
      %v1508 = vpop.f32.mrb[0].mxu0
      %v1509 = vpop.f32.mrb[0].mxu0
      %v1510 = vadd.f32 %v1344, %v1509
      %v1511 = vpop.f32.mrb[0].mxu0
      %1512 = vmatprep.mubr.bf16.mxu0 0
      %1513 = vmatmul.mubr.bf16.gmra.mrb[0].mxu0 %v1432
      %v1514 = vpop.f32.mrb[0].mxu0
      %v1515 = vadd.f32 %v1349, %v1514
      %v1516 = vpop.f32.mrb[0].mxu0
      %v1517 = vpop.f32.mrb[0].mxu0
      %v1518 = vadd.f32 %v1354, %v1517
      %v1519 = vpop.f32.mrb[0].mxu0
      %1520 = vmatprep.mubr.bf16.mxu0 0
      %1521 = vmatmul.mubr.bf16.gmra.mrb[0].mxu0 %v1435
      %v1522 = vpop.f32.mrb[0].mxu0
      %v1523 = vadd.f32 %v1359, %v1522
      %v1524 = vpop.f32.mrb[0].mxu0
      %v1525 = vpop.f32.mrb[0].mxu0
      %v1526 = vadd.f32 %v1364, %v1525
      %v1527 = vpop.f32.mrb[0].mxu0
      %1528 = vmatprep.mubr.bf16.mxu0 0
      %1529 = vmatmul.mubr.bf16.gmra.mrb[0].mxu0 %v1438
      %v1530 = vpop.f32.mrb[0].mxu0
      %v1531 = vadd.f32 %v1369, %v1530
      %v1532 = vpop.f32.mrb[0].mxu0
      %v1533 = vpop.f32.mrb[0].mxu0
      %v1534 = vadd.f32 %v1374, %v1533
      %v1535 = vpop.f32.mrb[0].mxu0
      %1536 = vdwg.mxu0
      %v1537 = vmax.f32 %v1475, 0.0
      %v1538 = vmax.f32 %v1478, 0.0
      %v1539 = vmax.f32 %v1483, 0.0
      %v1540 = vmax.f32 %v1486, 0.0
      %v1541 = vmax.f32 %v1491, 0.0
      %v1542 = vmax.f32 %v1494, 0.0
      %v1543 = vmax.f32 %v1499, 0.0
      %v1544 = vmax.f32 %v1502, 0.0
      %v1545 = vmax.f32 %v1507, 0.0
      %v1546 = vmax.f32 %v1510, 0.0
      %v1547 = vmax.f32 %v1515, 0.0
      %v1548 = vmax.f32 %v1518, 0.0
      %v1549 = vmax.f32 %v1523, 0.0
      %v1550 = vmax.f32 %v1526, 0.0
      %v1551 = vmax.f32 %v1531, 0.0
      %v1552 = vmax.f32 %v1534, 0.0
      %v1553 = vld [vmem:[%s7] sm:$0xf]
      %v1554 = vld [vmem:[%s7 + $0x4] sm:$0xf]
      %v1555 = vld [vmem:[%s7 + $0x8] sm:$0xf]
      %v1556 = vld [vmem:[%s7 + $0xc] sm:$0xf]
      %v1557 = vld [vmem:[%s7 + $0x10] sm:$0xf]
      %v1558 = vld [vmem:[%s7 + $0x14] sm:$0xf]
      %v1559 = vld [vmem:[%s7 + $0x18] sm:$0xf]
      %v1560 = vld [vmem:[%s7 + $0x1c] sm:$0xf]
      %v1561 = vpack.c.bf16 %v1538, %v1537
      %v1562 = vpack.c.bf16 %v1540, %v1539
      %v1563 = vpack.c.bf16 %v1542, %v1541
      %v1564 = vpack.c.bf16 %v1544, %v1543
      %v1565 = vpack.c.bf16 %v1546, %v1545
      %v1566 = vpack.c.bf16 %v1548, %v1547
      %v1567 = vpack.c.bf16 %v1550, %v1549
      %v1568 = vpack.c.bf16 %v1552, %v1551
      %v1577 = vunpack.c.l.b16 %v1553
      %v1578 = vunpack.c.l.b16 %v1554
      %v1579 = vunpack.c.l.b16 %v1555
      %v1580 = vunpack.c.l.b16 %v1556
      %v1581 = vunpack.c.l.b16 %v1557
      %v1582 = vunpack.c.l.b16 %v1558
      %v1583 = vunpack.c.l.b16 %v1559
      %v1584 = vunpack.c.l.b16 %v1560
      %v1585 = vpack.c.b16 %v1578, %v1577
      %v1586 = vpack.c.b16 %v1580, %v1579
      %v1587 = vpack.c.b16 %v1582, %v1581
      %v1588 = vpack.c.b16 %v1584, %v1583
      %1593 = vmatprep.subr.bf16.mxu0 0
      %1594 = vmatpush1.bf16.msra.mxu0 %v1561
      %1595 = vmatprep.subr.bf16.mxu0 0
      %1596 = vmatpush1.bf16.msra.mxu0 %v1562
      %1597 = vmatprep.subr.bf16.mxu0 0
      %1598 = vmatpush1.bf16.msra.mxu0 %v1563
      %1599 = vmatprep.subr.bf16.mxu0 0
      %1600 = vmatpush1.bf16.msra.mxu0 %v1564
      %1601 = vmatprep.subr.bf16.mxu0 0
      %1602 = vmatpush1.bf16.msra.mxu0 %v1565
      %1603 = vmatprep.subr.bf16.mxu0 0
      %1604 = vmatpush1.bf16.msra.mxu0 %v1566
      %1605 = vmatprep.subr.bf16.mxu0 0
      %1606 = vmatpush1.bf16.msra.mxu0 %v1567
      %1607 = vmatprep.subr.bf16.mxu0 0
      %1608 = vmatpush1.bf16.msra.mxu0 %v1568
      %1609 = vmatprep.subr.bf16.mxu0 0
      %1610 = vmatpush1.bf16.msra.mxu0 0
      %1611 = vmatprep.subr.bf16.mxu0 0
      %1612 = vmatpush1.bf16.msra.mxu0 0
      %1613 = vmatprep.subr.bf16.mxu0 0
      %1614 = vmatpush1.bf16.msra.mxu0 0
      %1615 = vmatprep.subr.bf16.mxu0 0
      %1616 = vmatpush1.bf16.msra.mxu0 0
      %1617 = vmatprep.subr.bf16.mxu0 0
      %1618 = vmatpush1.bf16.msra.mxu0 0
      %1619 = vmatprep.subr.bf16.mxu0 0
      %1620 = vmatpush1.bf16.msra.mxu0 0
      %1621 = vmatprep.subr.bf16.mxu0 0
      %1622 = vmatpush1.bf16.msra.mxu0 0
      %1623 = vmatprep.subr.bf16.mxu0 0
      %1624 = vmatpush1.bf16.msra.mxu0 0
      %1625 = vmatprep.mubr.bf16.mxu0 0
      %1626 = vmatmul.mubr.bf16.gmra.mrb[0].mxu0 %v1585
      %v1627 = vpop.f32.mrb[0].mxu0
      %v1628 = vadd.f32 0.0, %v1627
      %v1629 = vpop.f32.mrb[0].mxu0
      %v1630 = vpop.f32.mrb[0].mxu0
      %v1631 = vadd.f32 0.0, %v1630
      %v1632 = vpop.f32.mrb[0].mxu0
      %1633 = vmatprep.mubr.bf16.mxu0 0
      %1634 = vmatmul.mubr.bf16.gmra.mrb[0].mxu0 %v1586
      %v1635 = vpop.f32.mrb[0].mxu0
      %v1636 = vadd.f32 0.0, %v1635
      %v1637 = vpop.f32.mrb[0].mxu0
      %v1638 = vpop.f32.mrb[0].mxu0
      %v1639 = vadd.f32 0.0, %v1638
      %v1640 = vpop.f32.mrb[0].mxu0
      %1641 = vmatprep.mubr.bf16.mxu0 0
      %1642 = vmatmul.mubr.bf16.gmra.mrb[0].mxu0 %v1587
      %v1643 = vpop.f32.mrb[0].mxu0
      %v1644 = vadd.f32 0.0, %v1643
      %v1645 = vpop.f32.mrb[0].mxu0
      %v1646 = vpop.f32.mrb[0].mxu0
      %v1647 = vadd.f32 0.0, %v1646
      %v1648 = vpop.f32.mrb[0].mxu0
      %1649 = vmatprep.mubr.bf16.mxu0 0
      %1650 = vmatmul.mubr.bf16.gmra.mrb[0].mxu0 %v1588
      %v1651 = vpop.f32.mrb[0].mxu0
      %v1652 = vadd.f32 0.0, %v1651
      %v1653 = vpop.f32.mrb[0].mxu0
      %v1654 = vpop.f32.mrb[0].mxu0
      %v1655 = vadd.f32 0.0, %v1654
      %v1656 = vpop.f32.mrb[0].mxu0
      %1657 = vdwg.mxu0
      %v1658 = vadd.f32 %v712, %v1628
      %v1659 = vadd.f32 %v713, %v1631
      %v1660 = vadd.f32 %v714, %v1636
      %v1661 = vadd.f32 %v715, %v1639
      %v1662 = vadd.f32 %v716, %v1644
      %v1663 = vadd.f32 %v717, %v1647
      %v1664 = vadd.f32 %v718, %v1652
      %v1665 = vadd.f32 %v719, %v1655
      %v1666 = vld [vmem:[%s8] sm:$0xff]
      %v1667 = vld [vmem:[%s8 + $0x8] sm:$0xff]
      %v1668 = vld [vmem:[%s8 + $0x10] sm:$0xff]
      %v1669 = vld [vmem:[%s8 + $0x18] sm:$0xff]
      %v1670 = vld [vmem:[%s8 + $0x20] sm:$0xff]
      %v1671 = vld [vmem:[%s8 + $0x28] sm:$0xff]
      %v1672 = vld [vmem:[%s8 + $0x30] sm:$0xff]
      %v1673 = vld [vmem:[%s8 + $0x38] sm:$0xff]
      %1675 = vset.pattern.permute.xlu0 0
      %1676 = vperm.xlu0 %1675, %v1666
      %v1677 = vpop.permute.xlu0 %1676
      %1680 = vset.pattern.permute.xlu0 0
      %1681 = vperm.xlu0 %1680, %v1667
      %v1682 = vpop.permute.xlu0 %1681
      %1685 = vset.pattern.permute.xlu0 0
      %1686 = vperm.xlu0 %1685, %v1668
      %v1687 = vpop.permute.xlu0 %1686
      %1690 = vset.pattern.permute.xlu0 0
      %1691 = vperm.xlu0 %1690, %v1669
      %v1692 = vpop.permute.xlu0 %1691
      %1695 = vset.pattern.permute.xlu0 0
      %1696 = vperm.xlu0 %1695, %v1670
      %v1697 = vpop.permute.xlu0 %1696
      %1700 = vset.pattern.permute.xlu0 0
      %1701 = vperm.xlu0 %1700, %v1671
      %v1702 = vpop.permute.xlu0 %1701
      %1705 = vset.pattern.permute.xlu0 0
      %1706 = vperm.xlu0 %1705, %v1672
      %v1707 = vpop.permute.xlu0 %1706
      %1710 = vset.pattern.permute.xlu0 0
      %1711 = vperm.xlu0 %1710, %v1673
      %v1712 = vpop.permute.xlu0 %1711
      %v1714 = vadd.f32 %v1658, %v1677
      %v1715 = vadd.f32 %v1659, %v1682
      %v1716 = vadd.f32 %v1660, %v1687
      %v1717 = vadd.f32 %v1661, %v1692
      %v1718 = vadd.f32 %v1662, %v1697
      %v1719 = vadd.f32 %v1663, %v1702
      %v1720 = vadd.f32 %v1664, %v1707
      %v1721 = vadd.f32 %v1665, %v1712
      %v1722 = vld [vmem:[%s9] sm:$0xf]
      %v1724 = vsel %vm722, %v1722, 0
      %1726 = vmatprep.subr.mxu0 0.0
      %1727 = vmatpush1.msra.mxu0 %v1714
      %1728 = vmatprep.subr.mxu0 0.0
      %1729 = vmatpush1.msra.mxu0 %v1715
      %1730 = vmatprep.subr.mxu0 0.0
      %1731 = vmatpush1.msra.mxu0 %v1716
      %1732 = vmatprep.subr.mxu0 0.0
      %1733 = vmatpush1.msra.mxu0 %v1717
      %1734 = vmatprep.subr.mxu0 0.0
      %1735 = vmatpush1.msra.mxu0 %v1718
      %1736 = vmatprep.subr.mxu0 0.0
      %1737 = vmatpush1.msra.mxu0 %v1719
      %1738 = vmatprep.subr.mxu0 0.0
      %1739 = vmatpush1.msra.mxu0 %v1720
      %1740 = vmatprep.subr.mxu0 0.0
      %1741 = vmatpush1.msra.mxu0 %v1721
      %1742 = vmatprep.subr.mxu0 0.0
      %1743 = vmatpush1.msra.mxu0 0.0
      %1744 = vmatprep.subr.mxu0 0.0
      %1745 = vmatpush1.msra.mxu0 0.0
      %1746 = vmatprep.subr.mxu0 0.0
      %1747 = vmatpush1.msra.mxu0 0.0
      %1748 = vmatprep.subr.mxu0 0.0
      %1749 = vmatpush1.msra.mxu0 0.0
      %1750 = vmatprep.subr.mxu0 0.0
      %1751 = vmatpush1.msra.mxu0 0.0
      %1752 = vmatprep.subr.mxu0 0.0
      %1753 = vmatpush1.msra.mxu0 0.0
      %1754 = vmatprep.subr.mxu0 0.0
      %1755 = vmatpush1.msra.mxu0 0.0
      %1756 = vmatprep.subr.mxu0 0.0
      %1757 = vmatpush1.msra.mxu0 0.0
      %1758 = vmatprep.subr.mxu0 0.0
      %1759 = vmatpush1.msra.mxu0 0.0
      %1760 = vmatprep.subr.mxu0 0.0
      %1761 = vmatpush1.msra.mxu0 0.0
      %1762 = vmatprep.subr.mxu0 0.0
      %1763 = vmatpush1.msra.mxu0 0.0
      %1764 = vmatprep.subr.mxu0 0.0
      %1765 = vmatpush1.msra.mxu0 0.0
      %1766 = vmatprep.subr.mxu0 0.0
      %1767 = vmatpush1.msra.mxu0 0.0
      %1768 = vmatprep.subr.mxu0 0.0
      %1769 = vmatpush1.msra.mxu0 0.0
      %1770 = vmatprep.subr.mxu0 0.0
      %1771 = vmatpush1.msra.mxu0 0.0
      %1772 = vmatprep.subr.mxu0 0.0
      %1773 = vmatpush1.msra.mxu0 0.0
      %1774 = vmatprep.subr.mxu0 0.0
      %1775 = vmatpush1.msra.mxu0 0.0
      %1776 = vmatprep.subr.mxu0 0.0
      %1777 = vmatpush1.msra.mxu0 0.0
      %1778 = vmatprep.subr.mxu0 0.0
      %1779 = vmatpush1.msra.mxu0 0.0
      %1780 = vmatprep.subr.mxu0 0.0
      %1781 = vmatpush1.msra.mxu0 0.0
      %1782 = vmatprep.subr.mxu0 0.0
      %1783 = vmatpush1.msra.mxu0 0.0
      %1784 = vmatprep.subr.mxu0 0.0
      %1785 = vmatpush1.msra.mxu0 0.0
      %1786 = vmatprep.subr.mxu0 0.0
      %1787 = vmatpush1.msra.mxu0 0.0
      %1788 = vmatprep.subr.mxu0 0.0
      %1789 = vmatpush1.msra.mxu0 0.0
      %1790 = vmatprep.mubr.f32.mxu0 0.0
      %1791 = vmatmul.mubr.f32.gmra.mrb[0].mxu0 %v1724
      %v1792 = vpop.f32.mrb[0].mxu0
      %v1793 = vadd.f32 0.0, %v1792
      %v1794 = vpop.f32.mrb[0].mxu0
      %1795 = vdwg.mxu0
      %v1796 = vld [vmem:[%s10] sm:$0xff]
      %v1797 = vld [vmem:[%s10 + $0x8] sm:$0xff]
      %v1798 = vld [vmem:[%s10 + $0x10] sm:$0xff]
      %v1799 = vld [vmem:[%s10 + $0x18] sm:$0xff]
      %v1800 = vld [vmem:[%s10 + $0x20] sm:$0xff]
      %v1801 = vld [vmem:[%s10 + $0x28] sm:$0xff]
      %v1802 = vld [vmem:[%s10 + $0x30] sm:$0xff]
      %v1803 = vld [vmem:[%s10 + $0x38] sm:$0xff]
      %vm1804 = vcmask 31744
      %v1806 = vsel %vm1804, %v1796, 0
      %v1809 = vsel %vm1804, %v1797, 0
      %v1812 = vsel %vm1804, %v1798, 0
      %v1815 = vsel %vm1804, %v1799, 0
      %v1818 = vsel %vm1804, %v1800, 0
      %v1821 = vsel %vm1804, %v1801, 0
      %v1824 = vsel %vm1804, %v1802, 0
      %v1827 = vsel %vm1804, %v1803, 0
      %vm1829 = vcmask 1043456
      %v1831 = vsel %vm1829, %v1793, 0
      %1833 = vmatprep.subr.mxu0 0.0
      %1834 = vmatpush1.msra.mxu0 %v1831
      %1835 = vmatprep.subr.mxu0 0.0
      %1836 = vmatpush1.msra.mxu0 0.0
      %1837 = vmatprep.subr.mxu0 0.0
      %1838 = vmatpush1.msra.mxu0 0.0
      %1839 = vmatprep.subr.mxu0 0.0
      %1840 = vmatpush1.msra.mxu0 0.0
      %1841 = vmatprep.subr.mxu0 0.0
      %1842 = vmatpush1.msra.mxu0 0.0
      %1843 = vmatprep.subr.mxu0 0.0
      %1844 = vmatpush1.msra.mxu0 0.0
      %1845 = vmatprep.subr.mxu0 0.0
      %1846 = vmatpush1.msra.mxu0 0.0
      %1847 = vmatprep.subr.mxu0 0.0
      %1848 = vmatpush1.msra.mxu0 0.0
      %1849 = vmatprep.subr.mxu0 0.0
      %1850 = vmatpush1.msra.mxu0 0.0
      %1851 = vmatprep.subr.mxu0 0.0
      %1852 = vmatpush1.msra.mxu0 0.0
      %1853 = vmatprep.subr.mxu0 0.0
      %1854 = vmatpush1.msra.mxu0 0.0
      %1855 = vmatprep.subr.mxu0 0.0
      %1856 = vmatpush1.msra.mxu0 0.0
      %1857 = vmatprep.subr.mxu0 0.0
      %1858 = vmatpush1.msra.mxu0 0.0
      %1859 = vmatprep.subr.mxu0 0.0
      %1860 = vmatpush1.msra.mxu0 0.0
      %1861 = vmatprep.subr.mxu0 0.0
      %1862 = vmatpush1.msra.mxu0 0.0
      %1863 = vmatprep.subr.mxu0 0.0
      %1864 = vmatpush1.msra.mxu0 0.0
      %1865 = vmatprep.subr.mxu0 0.0
      %1866 = vmatpush1.msra.mxu0 0.0
      %1867 = vmatprep.subr.mxu0 0.0
      %1868 = vmatpush1.msra.mxu0 0.0
      %1869 = vmatprep.subr.mxu0 0.0
      %1870 = vmatpush1.msra.mxu0 0.0
      %1871 = vmatprep.subr.mxu0 0.0
      %1872 = vmatpush1.msra.mxu0 0.0
      %1873 = vmatprep.subr.mxu0 0.0
      %1874 = vmatpush1.msra.mxu0 0.0
      %1875 = vmatprep.subr.mxu0 0.0
      %1876 = vmatpush1.msra.mxu0 0.0
      %1877 = vmatprep.subr.mxu0 0.0
      %1878 = vmatpush1.msra.mxu0 0.0
      %1879 = vmatprep.subr.mxu0 0.0
      %1880 = vmatpush1.msra.mxu0 0.0
      %1881 = vmatprep.subr.mxu0 0.0
      %1882 = vmatpush1.msra.mxu0 0.0
      %1883 = vmatprep.subr.mxu0 0.0
      %1884 = vmatpush1.msra.mxu0 0.0
      %1885 = vmatprep.subr.mxu0 0.0
      %1886 = vmatpush1.msra.mxu0 0.0
      %1887 = vmatprep.subr.mxu0 0.0
      %1888 = vmatpush1.msra.mxu0 0.0
      %1889 = vmatprep.subr.mxu0 0.0
      %1890 = vmatpush1.msra.mxu0 0.0
      %1891 = vmatprep.subr.mxu0 0.0
      %1892 = vmatpush1.msra.mxu0 0.0
      %1893 = vmatprep.subr.mxu0 0.0
      %1894 = vmatpush1.msra.mxu0 0.0
      %1895 = vmatprep.subr.mxu0 0.0
      %1896 = vmatpush1.msra.mxu0 0.0
      %1897 = vmatprep.mubr.f32.mxu0 0.0
      %1898 = vmatmul.mubr.f32.gmra.mrb[0].mxu0 %v1806
      %v1899 = vpop.f32.mrb[0].mxu0
      %v1900 = vadd.f32 0.0, %v1899
      %v1901 = vpop.f32.mrb[0].mxu0
      %1902 = vmatprep.mubr.f32.mxu0 0.0
      %1903 = vmatmul.mubr.f32.gmra.mrb[0].mxu0 %v1809
      %v1904 = vpop.f32.mrb[0].mxu0
      %v1905 = vadd.f32 0.0, %v1904
      %v1906 = vpop.f32.mrb[0].mxu0
      %1907 = vmatprep.mubr.f32.mxu0 0.0
      %1908 = vmatmul.mubr.f32.gmra.mrb[0].mxu0 %v1812
      %v1909 = vpop.f32.mrb[0].mxu0
      %v1910 = vadd.f32 0.0, %v1909
      %v1911 = vpop.f32.mrb[0].mxu0
      %1912 = vmatprep.mubr.f32.mxu0 0.0
      %1913 = vmatmul.mubr.f32.gmra.mrb[0].mxu0 %v1815
      %v1914 = vpop.f32.mrb[0].mxu0
      %v1915 = vadd.f32 0.0, %v1914
      %v1916 = vpop.f32.mrb[0].mxu0
      %1917 = vmatprep.mubr.f32.mxu0 0.0
      %1918 = vmatmul.mubr.f32.gmra.mrb[0].mxu0 %v1818
      %v1919 = vpop.f32.mrb[0].mxu0
      %v1920 = vadd.f32 0.0, %v1919
      %v1921 = vpop.f32.mrb[0].mxu0
      %1922 = vmatprep.mubr.f32.mxu0 0.0
      %1923 = vmatmul.mubr.f32.gmra.mrb[0].mxu0 %v1821
      %v1924 = vpop.f32.mrb[0].mxu0
      %v1925 = vadd.f32 0.0, %v1924
      %v1926 = vpop.f32.mrb[0].mxu0
      %1927 = vmatprep.mubr.f32.mxu0 0.0
      %1928 = vmatmul.mubr.f32.gmra.mrb[0].mxu0 %v1824
      %v1929 = vpop.f32.mrb[0].mxu0
      %v1930 = vadd.f32 0.0, %v1929
      %v1931 = vpop.f32.mrb[0].mxu0
      %1932 = vmatprep.mubr.f32.mxu0 0.0
      %1933 = vmatmul.mubr.f32.gmra.mrb[0].mxu0 %v1827
      %v1934 = vpop.f32.mrb[0].mxu0
      %v1935 = vadd.f32 0.0, %v1934
      %v1936 = vpop.f32.mrb[0].mxu0
      %1937 = vdwg.mxu0
      %v1938 = vsub.f32 %v1714, %v1900
      %v1939 = vsub.f32 %v1715, %v1905
      %v1940 = vsub.f32 %v1716, %v1910
      %v1941 = vsub.f32 %v1717, %v1915
      %v1942 = vsub.f32 %v1718, %v1920
      %v1943 = vsub.f32 %v1719, %v1925
      %v1944 = vsub.f32 %v1720, %v1930
      %v1945 = vsub.f32 %v1721, %v1935
      %v1946 = vmul.f32 %v1938, %v1938
      %v1947 = vmul.f32 %v1939, %v1939
      %v1948 = vmul.f32 %v1940, %v1940
      %v1949 = vmul.f32 %v1941, %v1941
      %v1950 = vmul.f32 %v1942, %v1942
      %v1951 = vmul.f32 %v1943, %v1943
      %v1952 = vmul.f32 %v1944, %v1944
      %v1953 = vmul.f32 %v1945, %v1945
      %1954 = vmatprep.subr.mxu0 0.0
      %1955 = vmatpush1.msra.mxu0 %v1946
      %1956 = vmatprep.subr.mxu0 0.0
      %1957 = vmatpush1.msra.mxu0 %v1947
      %1958 = vmatprep.subr.mxu0 0.0
      %1959 = vmatpush1.msra.mxu0 %v1948
      %1960 = vmatprep.subr.mxu0 0.0
      %1961 = vmatpush1.msra.mxu0 %v1949
      %1962 = vmatprep.subr.mxu0 0.0
      %1963 = vmatpush1.msra.mxu0 %v1950
      %1964 = vmatprep.subr.mxu0 0.0
      %1965 = vmatpush1.msra.mxu0 %v1951
      %1966 = vmatprep.subr.mxu0 0.0
      %1967 = vmatpush1.msra.mxu0 %v1952
      %1968 = vmatprep.subr.mxu0 0.0
      %1969 = vmatpush1.msra.mxu0 %v1953
      %1970 = vmatprep.subr.mxu0 0.0
      %1971 = vmatpush1.msra.mxu0 0.0
      %1972 = vmatprep.subr.mxu0 0.0
      %1973 = vmatpush1.msra.mxu0 0.0
      %1974 = vmatprep.subr.mxu0 0.0
      %1975 = vmatpush1.msra.mxu0 0.0
      %1976 = vmatprep.subr.mxu0 0.0
      %1977 = vmatpush1.msra.mxu0 0.0
      %1978 = vmatprep.subr.mxu0 0.0
      %1979 = vmatpush1.msra.mxu0 0.0
      %1980 = vmatprep.subr.mxu0 0.0
      %1981 = vmatpush1.msra.mxu0 0.0
      %1982 = vmatprep.subr.mxu0 0.0
      %1983 = vmatpush1.msra.mxu0 0.0
      %1984 = vmatprep.subr.mxu0 0.0
      %1985 = vmatpush1.msra.mxu0 0.0
      %1986 = vmatprep.subr.mxu0 0.0
      %1987 = vmatpush1.msra.mxu0 0.0
      %1988 = vmatprep.subr.mxu0 0.0
      %1989 = vmatpush1.msra.mxu0 0.0
      %1990 = vmatprep.subr.mxu0 0.0
      %1991 = vmatpush1.msra.mxu0 0.0
      %1992 = vmatprep.subr.mxu0 0.0
      %1993 = vmatpush1.msra.mxu0 0.0
      %1994 = vmatprep.subr.mxu0 0.0
      %1995 = vmatpush1.msra.mxu0 0.0
      %1996 = vmatprep.subr.mxu0 0.0
      %1997 = vmatpush1.msra.mxu0 0.0
      %1998 = vmatprep.subr.mxu0 0.0
      %1999 = vmatpush1.msra.mxu0 0.0
      %2000 = vmatprep.subr.mxu0 0.0
      %2001 = vmatpush1.msra.mxu0 0.0
      %2002 = vmatprep.subr.mxu0 0.0
      %2003 = vmatpush1.msra.mxu0 0.0
      %2004 = vmatprep.subr.mxu0 0.0
      %2005 = vmatpush1.msra.mxu0 0.0
      %2006 = vmatprep.subr.mxu0 0.0
      %2007 = vmatpush1.msra.mxu0 0.0
      %2008 = vmatprep.subr.mxu0 0.0
      %2009 = vmatpush1.msra.mxu0 0.0
      %2010 = vmatprep.subr.mxu0 0.0
      %2011 = vmatpush1.msra.mxu0 0.0
      %2012 = vmatprep.subr.mxu0 0.0
      %2013 = vmatpush1.msra.mxu0 0.0
      %2014 = vmatprep.subr.mxu0 0.0
      %2015 = vmatpush1.msra.mxu0 0.0
      %2016 = vmatprep.subr.mxu0 0.0
      %2017 = vmatpush1.msra.mxu0 0.0
      %2018 = vmatprep.mubr.f32.mxu0 0.0
      %2019 = vmatmul.mubr.f32.gmra.mrb[0].mxu0 %v1724
      %v2020 = vpop.f32.mrb[0].mxu0
      %v2021 = vadd.f32 1e-05, %v2020
      %v2022 = vpop.f32.mrb[0].mxu0
      %2023 = vdwg.mxu0
      %v2024 = vrsqrt.pop %v2021
      %v2026 = vsel %vm1829, %v2024, 0
      %2028 = vmatprep.subr.mxu0 0.0
      %2029 = vmatpush1.msra.mxu0 %v2026
      %2030 = vmatprep.subr.mxu0 0.0
      %2031 = vmatpush1.msra.mxu0 0.0
      %2032 = vmatprep.subr.mxu0 0.0
      %2033 = vmatpush1.msra.mxu0 0.0
      %2034 = vmatprep.subr.mxu0 0.0
      %2035 = vmatpush1.msra.mxu0 0.0
      %2036 = vmatprep.subr.mxu0 0.0
      %2037 = vmatpush1.msra.mxu0 0.0
      %2038 = vmatprep.subr.mxu0 0.0
      %2039 = vmatpush1.msra.mxu0 0.0
      %2040 = vmatprep.subr.mxu0 0.0
      %2041 = vmatpush1.msra.mxu0 0.0
      %2042 = vmatprep.subr.mxu0 0.0
      %2043 = vmatpush1.msra.mxu0 0.0
      %2044 = vmatprep.subr.mxu0 0.0
      %2045 = vmatpush1.msra.mxu0 0.0
      %2046 = vmatprep.subr.mxu0 0.0
      %2047 = vmatpush1.msra.mxu0 0.0
      %2048 = vmatprep.subr.mxu0 0.0
      %2049 = vmatpush1.msra.mxu0 0.0
      %2050 = vmatprep.subr.mxu0 0.0
      %2051 = vmatpush1.msra.mxu0 0.0
      %2052 = vmatprep.subr.mxu0 0.0
      %2053 = vmatpush1.msra.mxu0 0.0
      %2054 = vmatprep.subr.mxu0 0.0
      %2055 = vmatpush1.msra.mxu0 0.0
      %2056 = vmatprep.subr.mxu0 0.0
      %2057 = vmatpush1.msra.mxu0 0.0
      %2058 = vmatprep.subr.mxu0 0.0
      %2059 = vmatpush1.msra.mxu0 0.0
      %2060 = vmatprep.subr.mxu0 0.0
      %2061 = vmatpush1.msra.mxu0 0.0
      %2062 = vmatprep.subr.mxu0 0.0
      %2063 = vmatpush1.msra.mxu0 0.0
      %2064 = vmatprep.subr.mxu0 0.0
      %2065 = vmatpush1.msra.mxu0 0.0
      %2066 = vmatprep.subr.mxu0 0.0
      %2067 = vmatpush1.msra.mxu0 0.0
      %2068 = vmatprep.subr.mxu0 0.0
      %2069 = vmatpush1.msra.mxu0 0.0
      %2070 = vmatprep.subr.mxu0 0.0
      %2071 = vmatpush1.msra.mxu0 0.0
      %2072 = vmatprep.subr.mxu0 0.0
      %2073 = vmatpush1.msra.mxu0 0.0
      %2074 = vmatprep.subr.mxu0 0.0
      %2075 = vmatpush1.msra.mxu0 0.0
      %2076 = vmatprep.subr.mxu0 0.0
      %2077 = vmatpush1.msra.mxu0 0.0
      %2078 = vmatprep.subr.mxu0 0.0
      %2079 = vmatpush1.msra.mxu0 0.0
      %2080 = vmatprep.subr.mxu0 0.0
      %2081 = vmatpush1.msra.mxu0 0.0
      %2082 = vmatprep.subr.mxu0 0.0
      %2083 = vmatpush1.msra.mxu0 0.0
      %2084 = vmatprep.subr.mxu0 0.0
      %2085 = vmatpush1.msra.mxu0 0.0
      %2086 = vmatprep.subr.mxu0 0.0
      %2087 = vmatpush1.msra.mxu0 0.0
      %2088 = vmatprep.subr.mxu0 0.0
      %2089 = vmatpush1.msra.mxu0 0.0
      %2090 = vmatprep.subr.mxu0 0.0
      %2091 = vmatpush1.msra.mxu0 0.0
      %2092 = vmatprep.mubr.f32.mxu0 0.0
      %2093 = vmatmul.mubr.f32.gmra.mrb[0].mxu0 %v1806
      %v2094 = vpop.f32.mrb[0].mxu0
      %v2095 = vadd.f32 0.0, %v2094
      %v2096 = vpop.f32.mrb[0].mxu0
      %2097 = vmatprep.mubr.f32.mxu0 0.0
      %2098 = vmatmul.mubr.f32.gmra.mrb[0].mxu0 %v1809
      %v2099 = vpop.f32.mrb[0].mxu0
      %v2100 = vadd.f32 0.0, %v2099
      %v2101 = vpop.f32.mrb[0].mxu0
      %2102 = vmatprep.mubr.f32.mxu0 0.0
      %2103 = vmatmul.mubr.f32.gmra.mrb[0].mxu0 %v1812
      %v2104 = vpop.f32.mrb[0].mxu0
      %v2105 = vadd.f32 0.0, %v2104
      %v2106 = vpop.f32.mrb[0].mxu0
      %2107 = vmatprep.mubr.f32.mxu0 0.0
      %2108 = vmatmul.mubr.f32.gmra.mrb[0].mxu0 %v1815
      %v2109 = vpop.f32.mrb[0].mxu0
      %v2110 = vadd.f32 0.0, %v2109
      %v2111 = vpop.f32.mrb[0].mxu0
      %2112 = vmatprep.mubr.f32.mxu0 0.0
      %2113 = vmatmul.mubr.f32.gmra.mrb[0].mxu0 %v1818
      %v2114 = vpop.f32.mrb[0].mxu0
      %v2115 = vadd.f32 0.0, %v2114
      %v2116 = vpop.f32.mrb[0].mxu0
      %2117 = vmatprep.mubr.f32.mxu0 0.0
      %2118 = vmatmul.mubr.f32.gmra.mrb[0].mxu0 %v1821
      %v2119 = vpop.f32.mrb[0].mxu0
      %v2120 = vadd.f32 0.0, %v2119
      %v2121 = vpop.f32.mrb[0].mxu0
      %2122 = vmatprep.mubr.f32.mxu0 0.0
      %2123 = vmatmul.mubr.f32.gmra.mrb[0].mxu0 %v1824
      %v2124 = vpop.f32.mrb[0].mxu0
      %v2125 = vadd.f32 0.0, %v2124
      %v2126 = vpop.f32.mrb[0].mxu0
      %2127 = vmatprep.mubr.f32.mxu0 0.0
      %2128 = vmatmul.mubr.f32.gmra.mrb[0].mxu0 %v1827
      %v2129 = vpop.f32.mrb[0].mxu0
      %v2130 = vadd.f32 0.0, %v2129
      %v2131 = vpop.f32.mrb[0].mxu0
      %2132 = vdwg.mxu0
      %v2133 = vmul.f32 %v1938, %v2095
      %v2134 = vmul.f32 %v1939, %v2100
      %v2135 = vmul.f32 %v1940, %v2105
      %v2136 = vmul.f32 %v1941, %v2110
      %v2137 = vmul.f32 %v1942, %v2115
      %v2138 = vmul.f32 %v1943, %v2120
      %v2139 = vmul.f32 %v1944, %v2125
      %v2140 = vmul.f32 %v1945, %v2130
      %v2141 = vld [vmem:[%s11] sm:$0xff]
      %v2142 = vld [vmem:[%s11 + $0x8] sm:$0xff]
      %v2143 = vld [vmem:[%s11 + $0x10] sm:$0xff]
      %v2144 = vld [vmem:[%s11 + $0x18] sm:$0xff]
      %v2145 = vld [vmem:[%s11 + $0x20] sm:$0xff]
      %v2146 = vld [vmem:[%s11 + $0x28] sm:$0xff]
      %v2147 = vld [vmem:[%s11 + $0x30] sm:$0xff]
      %v2148 = vld [vmem:[%s11 + $0x38] sm:$0xff]
      %2150 = vset.pattern.permute.xlu0 0
      %2151 = vperm.xlu0 %2150, %v2141
      %v2152 = vpop.permute.xlu0 %2151
      %2155 = vset.pattern.permute.xlu0 0
      %2156 = vperm.xlu0 %2155, %v2142
      %v2157 = vpop.permute.xlu0 %2156
      %2160 = vset.pattern.permute.xlu0 0
      %2161 = vperm.xlu0 %2160, %v2143
      %v2162 = vpop.permute.xlu0 %2161
      %2165 = vset.pattern.permute.xlu0 0
      %2166 = vperm.xlu0 %2165, %v2144
      %v2167 = vpop.permute.xlu0 %2166
      %2170 = vset.pattern.permute.xlu0 0
      %2171 = vperm.xlu0 %2170, %v2145
      %v2172 = vpop.permute.xlu0 %2171
      %2175 = vset.pattern.permute.xlu0 0
      %2176 = vperm.xlu0 %2175, %v2146
      %v2177 = vpop.permute.xlu0 %2176
      %2180 = vset.pattern.permute.xlu0 0
      %2181 = vperm.xlu0 %2180, %v2147
      %v2182 = vpop.permute.xlu0 %2181
      %2185 = vset.pattern.permute.xlu0 0
      %2186 = vperm.xlu0 %2185, %v2148
      %v2187 = vpop.permute.xlu0 %2186
      %v2189 = vmul.f32 %v2133, %v2152
      %v2190 = vmul.f32 %v2134, %v2157
      %v2191 = vmul.f32 %v2135, %v2162
      %v2192 = vmul.f32 %v2136, %v2167
      %v2193 = vmul.f32 %v2137, %v2172
      %v2194 = vmul.f32 %v2138, %v2177
      %v2195 = vmul.f32 %v2139, %v2182
      %v2196 = vmul.f32 %v2140, %v2187
      %v2197 = vld [vmem:[%s12] sm:$0xff]
      %v2198 = vld [vmem:[%s12 + $0x8] sm:$0xff]
      %v2199 = vld [vmem:[%s12 + $0x10] sm:$0xff]
      %v2200 = vld [vmem:[%s12 + $0x18] sm:$0xff]
      %v2201 = vld [vmem:[%s12 + $0x20] sm:$0xff]
      %v2202 = vld [vmem:[%s12 + $0x28] sm:$0xff]
      %v2203 = vld [vmem:[%s12 + $0x30] sm:$0xff]
      %v2204 = vld [vmem:[%s12 + $0x38] sm:$0xff]
      %2206 = vset.pattern.permute.xlu0 0
      %2207 = vperm.xlu0 %2206, %v2197
      %v2208 = vpop.permute.xlu0 %2207
      %2211 = vset.pattern.permute.xlu0 0
      %2212 = vperm.xlu0 %2211, %v2198
      %v2213 = vpop.permute.xlu0 %2212
      %2216 = vset.pattern.permute.xlu0 0
      %2217 = vperm.xlu0 %2216, %v2199
      %v2218 = vpop.permute.xlu0 %2217
      %2221 = vset.pattern.permute.xlu0 0
      %2222 = vperm.xlu0 %2221, %v2200
      %v2223 = vpop.permute.xlu0 %2222
      %2226 = vset.pattern.permute.xlu0 0
      %2227 = vperm.xlu0 %2226, %v2201
      %v2228 = vpop.permute.xlu0 %2227
      %2231 = vset.pattern.permute.xlu0 0
      %2232 = vperm.xlu0 %2231, %v2202
      %v2233 = vpop.permute.xlu0 %2232
      %2236 = vset.pattern.permute.xlu0 0
      %2237 = vperm.xlu0 %2236, %v2203
      %v2238 = vpop.permute.xlu0 %2237
      %2241 = vset.pattern.permute.xlu0 0
      %2242 = vperm.xlu0 %2241, %v2204
      %v2243 = vpop.permute.xlu0 %2242
      %v2245 = vadd.f32 %v2189, %v2208
      %v2246 = vadd.f32 %v2190, %v2213
      %v2247 = vadd.f32 %v2191, %v2218
      %v2248 = vadd.f32 %v2192, %v2223
      %v2249 = vadd.f32 %v2193, %v2228
      %v2250 = vadd.f32 %v2194, %v2233
      %v2251 = vadd.f32 %v2195, %v2238
      %v2252 = vadd.f32 %v2196, %v2243
      %v2253 = vld [vmem:[%s13] sm:$0xf]
      %v2254 = vld [vmem:[%s13 + $0x4] sm:$0xf]
      %v2255 = vld [vmem:[%s13 + $0x8] sm:$0xf]
      %v2256 = vld [vmem:[%s13 + $0xc] sm:$0xf]
      %v2257 = vld [vmem:[%s13 + $0x10] sm:$0xf]
      %v2258 = vld [vmem:[%s13 + $0x14] sm:$0xf]
      %v2259 = vld [vmem:[%s13 + $0x18] sm:$0xf]
      %v2260 = vld [vmem:[%s13 + $0x1c] sm:$0xf]
      %v2261 = vld [vmem:[%s13 + $0x20] sm:$0xf]
      %v2262 = vld [vmem:[%s13 + $0x24] sm:$0xf]
      %v2263 = vld [vmem:[%s13 + $0x28] sm:$0xf]
      %v2264 = vld [vmem:[%s13 + $0x2c] sm:$0xf]
      %v2265 = vld [vmem:[%s13 + $0x30] sm:$0xf]
      %v2266 = vld [vmem:[%s13 + $0x34] sm:$0xf]
      %v2267 = vld [vmem:[%s13 + $0x38] sm:$0xf]
      %v2268 = vld [vmem:[%s13 + $0x3c] sm:$0xf]
      %v2269 = vpack.c.bf16 %v2246, %v2245
      %v2270 = vpack.c.bf16 %v2248, %v2247
      %v2271 = vpack.c.bf16 %v2250, %v2249
      %v2272 = vpack.c.bf16 %v2252, %v2251
      %v2273 = vld [vmem:[%s14] sm:$0xff]
      %v2274 = vld [vmem:[%s14 + $0x8] sm:$0xff]
      %v2275 = vld [vmem:[%s14 + $0x10] sm:$0xff]
      %v2276 = vld [vmem:[%s14 + $0x18] sm:$0xff]
      %v2277 = vld [vmem:[%s14 + $0x20] sm:$0xff]
      %v2278 = vld [vmem:[%s14 + $0x28] sm:$0xff]
      %v2279 = vld [vmem:[%s14 + $0x30] sm:$0xff]
      %v2280 = vld [vmem:[%s14 + $0x38] sm:$0xff]
      %v2281 = vld [vmem:[%s14 + $0x40] sm:$0xff]
      %v2282 = vld [vmem:[%s14 + $0x48] sm:$0xff]
      %v2283 = vld [vmem:[%s14 + $0x50] sm:$0xff]
      %v2284 = vld [vmem:[%s14 + $0x58] sm:$0xff]
      %v2285 = vld [vmem:[%s14 + $0x60] sm:$0xff]
      %v2286 = vld [vmem:[%s14 + $0x68] sm:$0xff]
      %v2287 = vld [vmem:[%s14 + $0x70] sm:$0xff]
      %v2288 = vld [vmem:[%s14 + $0x78] sm:$0xff]
      %2290 = vset.pattern.permute.xlu0 0
      %2291 = vperm.xlu0 %2290, %v2273
      %v2292 = vpop.permute.xlu0 %2291
      %2295 = vset.pattern.permute.xlu0 0
      %2296 = vperm.xlu0 %2295, %v2274
      %v2297 = vpop.permute.xlu0 %2296
      %2300 = vset.pattern.permute.xlu0 0
      %2301 = vperm.xlu0 %2300, %v2275
      %v2302 = vpop.permute.xlu0 %2301
      %2305 = vset.pattern.permute.xlu0 0
      %2306 = vperm.xlu0 %2305, %v2276
      %v2307 = vpop.permute.xlu0 %2306
      %2310 = vset.pattern.permute.xlu0 0
      %2311 = vperm.xlu0 %2310, %v2277
      %v2312 = vpop.permute.xlu0 %2311
      %2315 = vset.pattern.permute.xlu0 0
      %2316 = vperm.xlu0 %2315, %v2278
      %v2317 = vpop.permute.xlu0 %2316
      %2320 = vset.pattern.permute.xlu0 0
      %2321 = vperm.xlu0 %2320, %v2279
      %v2322 = vpop.permute.xlu0 %2321
      %2325 = vset.pattern.permute.xlu0 0
      %2326 = vperm.xlu0 %2325, %v2280
      %v2327 = vpop.permute.xlu0 %2326
      %2330 = vset.pattern.permute.xlu0 0
      %2331 = vperm.xlu0 %2330, %v2281
      %v2332 = vpop.permute.xlu0 %2331
      %2335 = vset.pattern.permute.xlu0 0
      %2336 = vperm.xlu0 %2335, %v2282
      %v2337 = vpop.permute.xlu0 %2336
      %2340 = vset.pattern.permute.xlu0 0
      %2341 = vperm.xlu0 %2340, %v2283
      %v2342 = vpop.permute.xlu0 %2341
      %2345 = vset.pattern.permute.xlu0 0
      %2346 = vperm.xlu0 %2345, %v2284
      %v2347 = vpop.permute.xlu0 %2346
      %2350 = vset.pattern.permute.xlu0 0
      %2351 = vperm.xlu0 %2350, %v2285
      %v2352 = vpop.permute.xlu0 %2351
      %2355 = vset.pattern.permute.xlu0 0
      %2356 = vperm.xlu0 %2355, %v2286
      %v2357 = vpop.permute.xlu0 %2356
      %2360 = vset.pattern.permute.xlu0 0
      %2361 = vperm.xlu0 %2360, %v2287
      %v2362 = vpop.permute.xlu0 %2361
      %2365 = vset.pattern.permute.xlu0 0
      %2366 = vperm.xlu0 %2365, %v2288
      %v2367 = vpop.permute.xlu0 %2366
      %v2385 = vunpack.c.l.b16 %v2253
      %v2386 = vunpack.c.l.b16 %v2254
      %v2387 = vunpack.c.l.b16 %v2255
      %v2388 = vunpack.c.l.b16 %v2256
      %v2389 = vunpack.c.l.b16 %v2257
      %v2390 = vunpack.c.l.b16 %v2258
      %v2391 = vunpack.c.l.b16 %v2259
      %v2392 = vunpack.c.l.b16 %v2260
      %v2393 = vunpack.c.l.b16 %v2261
      %v2394 = vunpack.c.l.b16 %v2262
      %v2395 = vunpack.c.l.b16 %v2263
      %v2396 = vunpack.c.l.b16 %v2264
      %v2397 = vunpack.c.l.b16 %v2265
      %v2398 = vunpack.c.l.b16 %v2266
      %v2399 = vunpack.c.l.b16 %v2267
      %v2400 = vunpack.c.l.b16 %v2268
      %v2401 = vpack.c.b16 %v2386, %v2385
      %v2402 = vpack.c.b16 %v2388, %v2387
      %v2403 = vpack.c.b16 %v2390, %v2389
      %v2404 = vpack.c.b16 %v2392, %v2391
      %v2405 = vpack.c.b16 %v2394, %v2393
      %v2406 = vpack.c.b16 %v2396, %v2395
      %v2407 = vpack.c.b16 %v2398, %v2397
      %v2408 = vpack.c.b16 %v2400, %v2399
      %v2410 = vsel %vm722, %v2401, 0
      %v2413 = vsel %vm722, %v2402, 0
      %v2416 = vsel %vm722, %v2403, 0
      %v2419 = vsel %vm722, %v2404, 0
      %v2422 = vsel %vm722, %v2405, 0
      %v2425 = vsel %vm722, %v2406, 0
      %v2428 = vsel %vm722, %v2407, 0
      %v2431 = vsel %vm722, %v2408, 0
      %2433 = vmatprep.subr.bf16.mxu0 0
      %2434 = vmatpush1.bf16.msra.mxu0 %v2269
      %2435 = vmatprep.subr.bf16.mxu0 0
      %2436 = vmatpush1.bf16.msra.mxu0 %v2270
      %2437 = vmatprep.subr.bf16.mxu0 0
      %2438 = vmatpush1.bf16.msra.mxu0 %v2271
      %2439 = vmatprep.subr.bf16.mxu0 0
      %2440 = vmatpush1.bf16.msra.mxu0 %v2272
      %2441 = vmatprep.subr.bf16.mxu0 0
      %2442 = vmatpush1.bf16.msra.mxu0 0
      %2443 = vmatprep.subr.bf16.mxu0 0
      %2444 = vmatpush1.bf16.msra.mxu0 0
      %2445 = vmatprep.subr.bf16.mxu0 0
      %2446 = vmatpush1.bf16.msra.mxu0 0
      %2447 = vmatprep.subr.bf16.mxu0 0
      %2448 = vmatpush1.bf16.msra.mxu0 0
      %2449 = vmatprep.subr.bf16.mxu0 0
      %2450 = vmatpush1.bf16.msra.mxu0 0
      %2451 = vmatprep.subr.bf16.mxu0 0
      %2452 = vmatpush1.bf16.msra.mxu0 0
      %2453 = vmatprep.subr.bf16.mxu0 0
      %2454 = vmatpush1.bf16.msra.mxu0 0
      %2455 = vmatprep.subr.bf16.mxu0 0
      %2456 = vmatpush1.bf16.msra.mxu0 0
      %2457 = vmatprep.subr.bf16.mxu0 0
      %2458 = vmatpush1.bf16.msra.mxu0 0
      %2459 = vmatprep.subr.bf16.mxu0 0
      %2460 = vmatpush1.bf16.msra.mxu0 0
      %2461 = vmatprep.subr.bf16.mxu0 0
      %2462 = vmatpush1.bf16.msra.mxu0 0
      %2463 = vmatprep.subr.bf16.mxu0 0
      %2464 = vmatpush1.bf16.msra.mxu0 0
      %2465 = vmatprep.mubr.bf16.mxu0 0
      %2466 = vmatmul.mubr.bf16.gmra.mrb[0].mxu0 %v2410
      %v2467 = vpop.f32.mrb[0].mxu0
      %v2468 = vadd.f32 %v2292, %v2467
      %v2469 = vpop.f32.mrb[0].mxu0
      %v2470 = vpop.f32.mrb[0].mxu0
      %v2471 = vadd.f32 %v2297, %v2470
      %v2472 = vpop.f32.mrb[0].mxu0
      %2473 = vmatprep.mubr.bf16.mxu0 0
      %2474 = vmatmul.mubr.bf16.gmra.mrb[0].mxu0 %v2413
      %v2475 = vpop.f32.mrb[0].mxu0
      %v2476 = vadd.f32 %v2302, %v2475
      %v2477 = vpop.f32.mrb[0].mxu0
      %v2478 = vpop.f32.mrb[0].mxu0
      %v2479 = vadd.f32 %v2307, %v2478
      %v2480 = vpop.f32.mrb[0].mxu0
      %2481 = vmatprep.mubr.bf16.mxu0 0
      %2482 = vmatmul.mubr.bf16.gmra.mrb[0].mxu0 %v2416
      %v2483 = vpop.f32.mrb[0].mxu0
      %v2484 = vadd.f32 %v2312, %v2483
      %v2485 = vpop.f32.mrb[0].mxu0
      %v2486 = vpop.f32.mrb[0].mxu0
      %v2487 = vadd.f32 %v2317, %v2486
      %v2488 = vpop.f32.mrb[0].mxu0
      %2489 = vmatprep.mubr.bf16.mxu0 0
      %2490 = vmatmul.mubr.bf16.gmra.mrb[0].mxu0 %v2419
      %v2491 = vpop.f32.mrb[0].mxu0
      %v2492 = vadd.f32 %v2322, %v2491
      %v2493 = vpop.f32.mrb[0].mxu0
      %v2494 = vpop.f32.mrb[0].mxu0
      %v2495 = vadd.f32 %v2327, %v2494
      %v2496 = vpop.f32.mrb[0].mxu0
      %2497 = vmatprep.mubr.bf16.mxu0 0
      %2498 = vmatmul.mubr.bf16.gmra.mrb[0].mxu0 %v2422
      %v2499 = vpop.f32.mrb[0].mxu0
      %v2500 = vadd.f32 %v2332, %v2499
      %v2501 = vpop.f32.mrb[0].mxu0
      %v2502 = vpop.f32.mrb[0].mxu0
      %v2503 = vadd.f32 %v2337, %v2502
      %v2504 = vpop.f32.mrb[0].mxu0
      %2505 = vmatprep.mubr.bf16.mxu0 0
      %2506 = vmatmul.mubr.bf16.gmra.mrb[0].mxu0 %v2425
      %v2507 = vpop.f32.mrb[0].mxu0
      %v2508 = vadd.f32 %v2342, %v2507
      %v2509 = vpop.f32.mrb[0].mxu0
      %v2510 = vpop.f32.mrb[0].mxu0
      %v2511 = vadd.f32 %v2347, %v2510
      %v2512 = vpop.f32.mrb[0].mxu0
      %2513 = vmatprep.mubr.bf16.mxu0 0
      %2514 = vmatmul.mubr.bf16.gmra.mrb[0].mxu0 %v2428
      %v2515 = vpop.f32.mrb[0].mxu0
      %v2516 = vadd.f32 %v2352, %v2515
      %v2517 = vpop.f32.mrb[0].mxu0
      %v2518 = vpop.f32.mrb[0].mxu0
      %v2519 = vadd.f32 %v2357, %v2518
      %v2520 = vpop.f32.mrb[0].mxu0
      %2521 = vmatprep.mubr.bf16.mxu0 0
      %2522 = vmatmul.mubr.bf16.gmra.mrb[0].mxu0 %v2431
      %v2523 = vpop.f32.mrb[0].mxu0
      %v2524 = vadd.f32 %v2362, %v2523
      %v2525 = vpop.f32.mrb[0].mxu0
      %v2526 = vpop.f32.mrb[0].mxu0
      %v2527 = vadd.f32 %v2367, %v2526
      %v2528 = vpop.f32.mrb[0].mxu0
      %2529 = vdwg.mxu0
      %v2530 = vmax.f32 %v2468, 0.0
      %v2531 = vmax.f32 %v2471, 0.0
      %v2532 = vmax.f32 %v2476, 0.0
      %v2533 = vmax.f32 %v2479, 0.0
      %v2534 = vmax.f32 %v2484, 0.0
      %v2535 = vmax.f32 %v2487, 0.0
      %v2536 = vmax.f32 %v2492, 0.0
      %v2537 = vmax.f32 %v2495, 0.0
      %v2538 = vmax.f32 %v2500, 0.0
      %v2539 = vmax.f32 %v2503, 0.0
      %v2540 = vmax.f32 %v2508, 0.0
      %v2541 = vmax.f32 %v2511, 0.0
      %v2542 = vmax.f32 %v2516, 0.0
      %v2543 = vmax.f32 %v2519, 0.0
      %v2544 = vmax.f32 %v2524, 0.0
      %v2545 = vmax.f32 %v2527, 0.0
      %v2546 = vld [vmem:[%s15] sm:$0xf]
      %v2547 = vld [vmem:[%s15 + $0x4] sm:$0xf]
      %v2548 = vld [vmem:[%s15 + $0x8] sm:$0xf]
      %v2549 = vld [vmem:[%s15 + $0xc] sm:$0xf]
      %v2550 = vld [vmem:[%s15 + $0x10] sm:$0xf]
      %v2551 = vld [vmem:[%s15 + $0x14] sm:$0xf]
      %v2552 = vld [vmem:[%s15 + $0x18] sm:$0xf]
      %v2553 = vld [vmem:[%s15 + $0x1c] sm:$0xf]
      %v2554 = vpack.c.bf16 %v2531, %v2530
      %v2555 = vpack.c.bf16 %v2533, %v2532
      %v2556 = vpack.c.bf16 %v2535, %v2534
      %v2557 = vpack.c.bf16 %v2537, %v2536
      %v2558 = vpack.c.bf16 %v2539, %v2538
      %v2559 = vpack.c.bf16 %v2541, %v2540
      %v2560 = vpack.c.bf16 %v2543, %v2542
      %v2561 = vpack.c.bf16 %v2545, %v2544
      %v2570 = vunpack.c.l.b16 %v2546
      %v2571 = vunpack.c.l.b16 %v2547
      %v2572 = vunpack.c.l.b16 %v2548
      %v2573 = vunpack.c.l.b16 %v2549
      %v2574 = vunpack.c.l.b16 %v2550
      %v2575 = vunpack.c.l.b16 %v2551
      %v2576 = vunpack.c.l.b16 %v2552
      %v2577 = vunpack.c.l.b16 %v2553
      %v2578 = vpack.c.b16 %v2571, %v2570
      %v2579 = vpack.c.b16 %v2573, %v2572
      %v2580 = vpack.c.b16 %v2575, %v2574
      %v2581 = vpack.c.b16 %v2577, %v2576
      %2586 = vmatprep.subr.bf16.mxu0 0
      %2587 = vmatpush1.bf16.msra.mxu0 %v2554
      %2588 = vmatprep.subr.bf16.mxu0 0
      %2589 = vmatpush1.bf16.msra.mxu0 %v2555
      %2590 = vmatprep.subr.bf16.mxu0 0
      %2591 = vmatpush1.bf16.msra.mxu0 %v2556
      %2592 = vmatprep.subr.bf16.mxu0 0
      %2593 = vmatpush1.bf16.msra.mxu0 %v2557
      %2594 = vmatprep.subr.bf16.mxu0 0
      %2595 = vmatpush1.bf16.msra.mxu0 %v2558
      %2596 = vmatprep.subr.bf16.mxu0 0
      %2597 = vmatpush1.bf16.msra.mxu0 %v2559
      %2598 = vmatprep.subr.bf16.mxu0 0
      %2599 = vmatpush1.bf16.msra.mxu0 %v2560
      %2600 = vmatprep.subr.bf16.mxu0 0
      %2601 = vmatpush1.bf16.msra.mxu0 %v2561
      %2602 = vmatprep.subr.bf16.mxu0 0
      %2603 = vmatpush1.bf16.msra.mxu0 0
      %2604 = vmatprep.subr.bf16.mxu0 0
      %2605 = vmatpush1.bf16.msra.mxu0 0
      %2606 = vmatprep.subr.bf16.mxu0 0
      %2607 = vmatpush1.bf16.msra.mxu0 0
      %2608 = vmatprep.subr.bf16.mxu0 0
      %2609 = vmatpush1.bf16.msra.mxu0 0
      %2610 = vmatprep.subr.bf16.mxu0 0
      %2611 = vmatpush1.bf16.msra.mxu0 0
      %2612 = vmatprep.subr.bf16.mxu0 0
      %2613 = vmatpush1.bf16.msra.mxu0 0
      %2614 = vmatprep.subr.bf16.mxu0 0
      %2615 = vmatpush1.bf16.msra.mxu0 0
      %2616 = vmatprep.subr.bf16.mxu0 0
      %2617 = vmatpush1.bf16.msra.mxu0 0
      %2618 = vmatprep.mubr.bf16.mxu0 0
      %2619 = vmatmul.mubr.bf16.gmra.mrb[0].mxu0 %v2578
      %v2620 = vpop.f32.mrb[0].mxu0
      %v2621 = vadd.f32 0.0, %v2620
      %v2622 = vpop.f32.mrb[0].mxu0
      %v2623 = vpop.f32.mrb[0].mxu0
      %v2624 = vadd.f32 0.0, %v2623
      %v2625 = vpop.f32.mrb[0].mxu0
      %2626 = vmatprep.mubr.bf16.mxu0 0
      %2627 = vmatmul.mubr.bf16.gmra.mrb[0].mxu0 %v2579
      %v2628 = vpop.f32.mrb[0].mxu0
      %v2629 = vadd.f32 0.0, %v2628
      %v2630 = vpop.f32.mrb[0].mxu0
      %v2631 = vpop.f32.mrb[0].mxu0
      %v2632 = vadd.f32 0.0, %v2631
      %v2633 = vpop.f32.mrb[0].mxu0
      %2634 = vmatprep.mubr.bf16.mxu0 0
      %2635 = vmatmul.mubr.bf16.gmra.mrb[0].mxu0 %v2580
      %v2636 = vpop.f32.mrb[0].mxu0
      %v2637 = vadd.f32 0.0, %v2636
      %v2638 = vpop.f32.mrb[0].mxu0
      %v2639 = vpop.f32.mrb[0].mxu0
      %v2640 = vadd.f32 0.0, %v2639
      %v2641 = vpop.f32.mrb[0].mxu0
      %2642 = vmatprep.mubr.bf16.mxu0 0
      %2643 = vmatmul.mubr.bf16.gmra.mrb[0].mxu0 %v2581
      %v2644 = vpop.f32.mrb[0].mxu0
      %v2645 = vadd.f32 0.0, %v2644
      %v2646 = vpop.f32.mrb[0].mxu0
      %v2647 = vpop.f32.mrb[0].mxu0
      %v2648 = vadd.f32 0.0, %v2647
      %v2649 = vpop.f32.mrb[0].mxu0
      %2650 = vdwg.mxu0
      %v2651 = vadd.f32 %v1714, %v2621
      %v2652 = vadd.f32 %v1715, %v2624
      %v2653 = vadd.f32 %v1716, %v2629
      %v2654 = vadd.f32 %v1717, %v2632
      %v2655 = vadd.f32 %v1718, %v2637
      %v2656 = vadd.f32 %v1719, %v2640
      %v2657 = vadd.f32 %v1720, %v2645
      %v2658 = vadd.f32 %v1721, %v2648
      %v2659 = vld [vmem:[%s16] sm:$0xff]
      %v2660 = vld [vmem:[%s16 + $0x8] sm:$0xff]
      %v2661 = vld [vmem:[%s16 + $0x10] sm:$0xff]
      %v2662 = vld [vmem:[%s16 + $0x18] sm:$0xff]
      %v2663 = vld [vmem:[%s16 + $0x20] sm:$0xff]
      %v2664 = vld [vmem:[%s16 + $0x28] sm:$0xff]
      %v2665 = vld [vmem:[%s16 + $0x30] sm:$0xff]
      %v2666 = vld [vmem:[%s16 + $0x38] sm:$0xff]
      %2668 = vset.pattern.permute.xlu0 0
      %2669 = vperm.xlu0 %2668, %v2659
      %v2670 = vpop.permute.xlu0 %2669
      %2673 = vset.pattern.permute.xlu0 0
      %2674 = vperm.xlu0 %2673, %v2660
      %v2675 = vpop.permute.xlu0 %2674
      %2678 = vset.pattern.permute.xlu0 0
      %2679 = vperm.xlu0 %2678, %v2661
      %v2680 = vpop.permute.xlu0 %2679
      %2683 = vset.pattern.permute.xlu0 0
      %2684 = vperm.xlu0 %2683, %v2662
      %v2685 = vpop.permute.xlu0 %2684
      %2688 = vset.pattern.permute.xlu0 0
      %2689 = vperm.xlu0 %2688, %v2663
      %v2690 = vpop.permute.xlu0 %2689
      %2693 = vset.pattern.permute.xlu0 0
      %2694 = vperm.xlu0 %2693, %v2664
      %v2695 = vpop.permute.xlu0 %2694
      %2698 = vset.pattern.permute.xlu0 0
      %2699 = vperm.xlu0 %2698, %v2665
      %v2700 = vpop.permute.xlu0 %2699
      %2703 = vset.pattern.permute.xlu0 0
      %2704 = vperm.xlu0 %2703, %v2666
      %v2705 = vpop.permute.xlu0 %2704
      %v2707 = vadd.f32 %v2651, %v2670
      %v2708 = vadd.f32 %v2652, %v2675
      %v2709 = vadd.f32 %v2653, %v2680
      %v2710 = vadd.f32 %v2654, %v2685
      %v2711 = vadd.f32 %v2655, %v2690
      %v2712 = vadd.f32 %v2656, %v2695
      %v2713 = vadd.f32 %v2657, %v2700
      %v2714 = vadd.f32 %v2658, %v2705
      %v2715 = vsel %vm812, %v2707, 0.0
      %2716 = vadd.xlane.f32.xlu0 %v2715
      %v2717 = vpop.xlane.xlu0 %2716
      %v2718 = vsel %vm812, %v2708, 0.0
      %2719 = vadd.xlane.f32.xlu0 %v2718
      %v2720 = vpop.xlane.xlu0 %2719
      %v2721 = vsel %vm812, %v2709, 0.0
      %2722 = vadd.xlane.f32.xlu0 %v2721
      %v2723 = vpop.xlane.xlu0 %2722
      %v2724 = vsel %vm812, %v2710, 0.0
      %2725 = vadd.xlane.f32.xlu0 %v2724
      %v2726 = vpop.xlane.xlu0 %2725
      %v2727 = vsel %vm812, %v2711, 0.0
      %2728 = vadd.xlane.f32.xlu0 %v2727
      %v2729 = vpop.xlane.xlu0 %2728
      %v2730 = vsel %vm812, %v2712, 0.0
      %2731 = vadd.xlane.f32.xlu0 %v2730
      %v2732 = vpop.xlane.xlu0 %2731
      %v2733 = vsel %vm812, %v2713, 0.0
      %2734 = vadd.xlane.f32.xlu0 %v2733
      %v2735 = vpop.xlane.xlu0 %2734
      %v2736 = vsel %vm812, %v2714, 0.0
      %2737 = vadd.xlane.f32.xlu0 %v2736
      %v2738 = vpop.xlane.xlu0 %2737
      %v2739 = vrcp.pop 16.0
      %v2740 = vmul.f32 %v2717, %v2739
      %v2741 = vmul.f32 %v2720, %v2739
      %v2742 = vmul.f32 %v2723, %v2739
      %v2743 = vmul.f32 %v2726, %v2739
      %v2744 = vmul.f32 %v2729, %v2739
      %v2745 = vmul.f32 %v2732, %v2739
      %v2746 = vmul.f32 %v2735, %v2739
      %v2747 = vmul.f32 %v2738, %v2739
      %v2748 = vsub.f32 %v2707, %v2740
      %v2749 = vsub.f32 %v2708, %v2741
      %v2750 = vsub.f32 %v2709, %v2742
      %v2751 = vsub.f32 %v2710, %v2743
      %v2752 = vsub.f32 %v2711, %v2744
      %v2753 = vsub.f32 %v2712, %v2745
      %v2754 = vsub.f32 %v2713, %v2746
      %v2755 = vsub.f32 %v2714, %v2747
      %v2756 = vmul.f32 %v2748, %v2748
      %v2757 = vmul.f32 %v2749, %v2749
      %v2758 = vmul.f32 %v2750, %v2750
      %v2759 = vmul.f32 %v2751, %v2751
      %v2760 = vmul.f32 %v2752, %v2752
      %v2761 = vmul.f32 %v2753, %v2753
      %v2762 = vmul.f32 %v2754, %v2754
      %v2763 = vmul.f32 %v2755, %v2755
      %v2764 = vsel %vm812, %v2756, 0.0
      %2765 = vadd.xlane.f32.xlu0 %v2764
      %v2766 = vpop.xlane.xlu0 %2765
      %v2767 = vsel %vm812, %v2757, 0.0
      %2768 = vadd.xlane.f32.xlu0 %v2767
      %v2769 = vpop.xlane.xlu0 %2768
      %v2770 = vsel %vm812, %v2758, 0.0
      %2771 = vadd.xlane.f32.xlu0 %v2770
      %v2772 = vpop.xlane.xlu0 %2771
      %v2773 = vsel %vm812, %v2759, 0.0
      %2774 = vadd.xlane.f32.xlu0 %v2773
      %v2775 = vpop.xlane.xlu0 %2774
      %v2776 = vsel %vm812, %v2760, 0.0
      %2777 = vadd.xlane.f32.xlu0 %v2776
      %v2778 = vpop.xlane.xlu0 %2777
      %v2779 = vsel %vm812, %v2761, 0.0
      %2780 = vadd.xlane.f32.xlu0 %v2779
      %v2781 = vpop.xlane.xlu0 %2780
      %v2782 = vsel %vm812, %v2762, 0.0
      %2783 = vadd.xlane.f32.xlu0 %v2782
      %v2784 = vpop.xlane.xlu0 %2783
      %v2785 = vsel %vm812, %v2763, 0.0
      %2786 = vadd.xlane.f32.xlu0 %v2785
      %v2787 = vpop.xlane.xlu0 %2786
      %v2788 = vmul.f32 %v2766, %v2739
      %v2789 = vmul.f32 %v2769, %v2739
      %v2790 = vmul.f32 %v2772, %v2739
      %v2791 = vmul.f32 %v2775, %v2739
      %v2792 = vmul.f32 %v2778, %v2739
      %v2793 = vmul.f32 %v2781, %v2739
      %v2794 = vmul.f32 %v2784, %v2739
      %v2795 = vmul.f32 %v2787, %v2739
      %v2796 = vadd.f32 %v2788, 1e-05
      %v2797 = vadd.f32 %v2789, 1e-05
      %v2798 = vadd.f32 %v2790, 1e-05
      %v2799 = vadd.f32 %v2791, 1e-05
      %v2800 = vadd.f32 %v2792, 1e-05
      %v2801 = vadd.f32 %v2793, 1e-05
      %v2802 = vadd.f32 %v2794, 1e-05
      %v2803 = vadd.f32 %v2795, 1e-05
      %v2804 = vrsqrt.pop %v2796
      %v2805 = vrsqrt.pop %v2797
      %v2806 = vrsqrt.pop %v2798
      %v2807 = vrsqrt.pop %v2799
      %v2808 = vrsqrt.pop %v2800
      %v2809 = vrsqrt.pop %v2801
      %v2810 = vrsqrt.pop %v2802
      %v2811 = vrsqrt.pop %v2803
      %v2812 = vmul.f32 %v2748, %v2804
      %v2813 = vmul.f32 %v2749, %v2805
      %v2814 = vmul.f32 %v2750, %v2806
      %v2815 = vmul.f32 %v2751, %v2807
      %v2816 = vmul.f32 %v2752, %v2808
      %v2817 = vmul.f32 %v2753, %v2809
      %v2818 = vmul.f32 %v2754, %v2810
      %v2819 = vmul.f32 %v2755, %v2811
      %v2820 = vld [vmem:[%s17] sm:$0x1]
      %v2822 = vlaneseq
      %v2823 = vshrl.u32 %v2822, 7
      %v2824 = vsub.s32 0, %v2823
      %v2825 = vrot.slane %v2820, %v2824
      %v2827 = vmul.f32 %v2812, %v2825
      %v2828 = vmul.f32 %v2813, %v2825
      %v2829 = vmul.f32 %v2814, %v2825
      %v2830 = vmul.f32 %v2815, %v2825
      %v2831 = vmul.f32 %v2816, %v2825
      %v2832 = vmul.f32 %v2817, %v2825
      %v2833 = vmul.f32 %v2818, %v2825
      %v2834 = vmul.f32 %v2819, %v2825
      %v2835 = vld [vmem:[%s18] sm:$0x1]
      %v2837 = vlaneseq
      %v2838 = vshrl.u32 %v2837, 7
      %v2839 = vsub.s32 0, %v2838
      %v2840 = vrot.slane %v2835, %v2839
      %v2842 = vadd.f32 %v2827, %v2840
      %v2843 = vadd.f32 %v2828, %v2840
      %v2844 = vadd.f32 %v2829, %v2840
      %v2845 = vadd.f32 %v2830, %v2840
      %v2846 = vadd.f32 %v2831, %v2840
      %v2847 = vadd.f32 %v2832, %v2840
      %v2848 = vadd.f32 %v2833, %v2840
      %v2849 = vadd.f32 %v2834, %v2840
      %v2850 = vpack.c.bf16 %v2843, %v2842
      %v2851 = vpack.c.bf16 %v2845, %v2844
      %v2852 = vpack.c.bf16 %v2847, %v2846
      %v2853 = vpack.c.bf16 %v2849, %v2848
      %v2854 = vld [vmem:[%s19] sm:$0xf]
      %v2855 = vld [vmem:[%s19 + $0x4] sm:$0xf]
      %v2856 = vld [vmem:[%s20] sm:$0x1]
      %v2858 = vlaneseq
      %v2859 = vshrl.u32 %v2858, 7
      %v2860 = vsub.s32 0, %v2859
      %v2861 = vrot.slane %v2856, %v2860
      %v2865 = vunpack.c.l.b16 %v2854
      %v2866 = vunpack.c.l.b16 %v2855
      %v2867 = vpack.c.b16 %v2866, %v2865
      %v2870 = vsel %vm812, %v2850, 0
      %v2873 = vsel %vm812, %v2851, 0
      %v2876 = vsel %vm812, %v2852, 0
      %v2879 = vsel %vm812, %v2853, 0
      %2881 = vmatprep.subr.bf16.mxu0 0
      %2882 = vmatpush1.bf16.msra.mxu0 %v2867
      %2883 = vmatprep.subr.bf16.mxu0 0
      %2884 = vmatpush1.bf16.msra.mxu0 0
      %2885 = vmatprep.subr.bf16.mxu0 0
      %2886 = vmatpush1.bf16.msra.mxu0 0
      %2887 = vmatprep.subr.bf16.mxu0 0
      %2888 = vmatpush1.bf16.msra.mxu0 0
      %2889 = vmatprep.subr.bf16.mxu0 0
      %2890 = vmatpush1.bf16.msra.mxu0 0
      %2891 = vmatprep.subr.bf16.mxu0 0
      %2892 = vmatpush1.bf16.msra.mxu0 0
      %2893 = vmatprep.subr.bf16.mxu0 0
      %2894 = vmatpush1.bf16.msra.mxu0 0
      %2895 = vmatprep.subr.bf16.mxu0 0
      %2896 = vmatpush1.bf16.msra.mxu0 0
      %2897 = vmatprep.subr.bf16.mxu0 0
      %2898 = vmatpush1.bf16.msra.mxu0 0
      %2899 = vmatprep.subr.bf16.mxu0 0
      %2900 = vmatpush1.bf16.msra.mxu0 0
      %2901 = vmatprep.subr.bf16.mxu0 0
      %2902 = vmatpush1.bf16.msra.mxu0 0
      %2903 = vmatprep.subr.bf16.mxu0 0
      %2904 = vmatpush1.bf16.msra.mxu0 0
      %2905 = vmatprep.subr.bf16.mxu0 0
      %2906 = vmatpush1.bf16.msra.mxu0 0
      %2907 = vmatprep.subr.bf16.mxu0 0
      %2908 = vmatpush1.bf16.msra.mxu0 0
      %2909 = vmatprep.subr.bf16.mxu0 0
      %2910 = vmatpush1.bf16.msra.mxu0 0
      %2911 = vmatprep.subr.bf16.mxu0 0
      %2912 = vmatpush1.bf16.msra.mxu0 0
      %2913 = vmatprep.mubr.bf16.mxu0 0
      %2914 = vmatmul.mubr.bf16.gmra.mrb[0].mxu0 %v2870
      %v2915 = vpop.f32.mrb[0].mxu0
      %v2916 = vadd.f32 %v2861, %v2915
      %v2917 = vpop.f32.mrb[0].mxu0
      %v2918 = vpop.f32.mrb[0].mxu0
      %v2919 = vadd.f32 %v2861, %v2918
      %v2920 = vpop.f32.mrb[0].mxu0
      %2921 = vmatprep.mubr.bf16.mxu0 0
      %2922 = vmatmul.mubr.bf16.gmra.mrb[0].mxu0 %v2873
      %v2923 = vpop.f32.mrb[0].mxu0
      %v2924 = vadd.f32 %v2861, %v2923
      %v2925 = vpop.f32.mrb[0].mxu0
      %v2926 = vpop.f32.mrb[0].mxu0
      %v2927 = vadd.f32 %v2861, %v2926
      %v2928 = vpop.f32.mrb[0].mxu0
      %2929 = vmatprep.mubr.bf16.mxu0 0
      %2930 = vmatmul.mubr.bf16.gmra.mrb[0].mxu0 %v2876
      %v2931 = vpop.f32.mrb[0].mxu0
      %v2932 = vadd.f32 %v2861, %v2931
      %v2933 = vpop.f32.mrb[0].mxu0
      %v2934 = vpop.f32.mrb[0].mxu0
      %v2935 = vadd.f32 %v2861, %v2934
      %v2936 = vpop.f32.mrb[0].mxu0
      %2937 = vmatprep.mubr.bf16.mxu0 0
      %2938 = vmatmul.mubr.bf16.gmra.mrb[0].mxu0 %v2879
      %v2939 = vpop.f32.mrb[0].mxu0
      %v2940 = vadd.f32 %v2861, %v2939
      %v2941 = vpop.f32.mrb[0].mxu0
      %v2942 = vpop.f32.mrb[0].mxu0
      %v2943 = vadd.f32 %v2861, %v2942
      %v2944 = vpop.f32.mrb[0].mxu0
      %2945 = vdwg.mxu0
      %v2946 = vmax.f32 %v2916, 0.0
      %v2947 = vmax.f32 %v2919, 0.0
      %v2948 = vmax.f32 %v2924, 0.0
      %v2949 = vmax.f32 %v2927, 0.0
      %v2950 = vmax.f32 %v2932, 0.0
      %v2951 = vmax.f32 %v2935, 0.0
      %v2952 = vmax.f32 %v2940, 0.0
      %v2953 = vmax.f32 %v2943, 0.0
      %v2954 = vpack.c.bf16 %v2947, %v2946
      %v2955 = vpack.c.bf16 %v2949, %v2948
      %v2956 = vpack.c.bf16 %v2951, %v2950
      %v2957 = vpack.c.bf16 %v2953, %v2952
      %v2958 = vld [vmem:[%s21] sm:$0xf]
      %v2959 = vld [vmem:[%s21 + $0x4] sm:$0xf]
      %v2960 = vld [vmem:[%s21 + $0x8] sm:$0xf]
      %v2961 = vld [vmem:[%s21 + $0xc] sm:$0xf]
      %v2966 = vunpack.c.l.b16 %v2958
      %v2967 = vunpack.c.l.b16 %v2959
      %v2968 = vunpack.c.l.b16 %v2960
      %v2969 = vunpack.c.l.b16 %v2961
      %v2970 = vpack.c.b16 %v2967, %v2966
      %v2971 = vpack.c.b16 %v2969, %v2968
      %vm2974 = vcmask 261120
      %v2976 = vsel %vm2974, %v2954, 0
      %v2979 = vsel %vm2974, %v2955, 0
      %v2982 = vsel %vm2974, %v2956, 0
      %v2985 = vsel %vm2974, %v2957, 0
      %2987 = vmatprep.subr.bf16.mxu0 0
      %2988 = vmatpush1.bf16.msra.mxu0 %v2970
      %2989 = vmatprep.subr.bf16.mxu0 0
      %2990 = vmatpush1.bf16.msra.mxu0 %v2971
      %2991 = vmatprep.subr.bf16.mxu0 0
      %2992 = vmatpush1.bf16.msra.mxu0 0
      %2993 = vmatprep.subr.bf16.mxu0 0
      %2994 = vmatpush1.bf16.msra.mxu0 0
      %2995 = vmatprep.subr.bf16.mxu0 0
      %2996 = vmatpush1.bf16.msra.mxu0 0
      %2997 = vmatprep.subr.bf16.mxu0 0
      %2998 = vmatpush1.bf16.msra.mxu0 0
      %2999 = vmatprep.subr.bf16.mxu0 0
      %3000 = vmatpush1.bf16.msra.mxu0 0
      %3001 = vmatprep.subr.bf16.mxu0 0
      %3002 = vmatpush1.bf16.msra.mxu0 0
      %3003 = vmatprep.subr.bf16.mxu0 0
      %3004 = vmatpush1.bf16.msra.mxu0 0
      %3005 = vmatprep.subr.bf16.mxu0 0
      %3006 = vmatpush1.bf16.msra.mxu0 0
      %3007 = vmatprep.subr.bf16.mxu0 0
      %3008 = vmatpush1.bf16.msra.mxu0 0
      %3009 = vmatprep.subr.bf16.mxu0 0
      %3010 = vmatpush1.bf16.msra.mxu0 0
      %3011 = vmatprep.subr.bf16.mxu0 0
      %3012 = vmatpush1.bf16.msra.mxu0 0
      %3013 = vmatprep.subr.bf16.mxu0 0
      %3014 = vmatpush1.bf16.msra.mxu0 0
      %3015 = vmatprep.subr.bf16.mxu0 0
      %3016 = vmatpush1.bf16.msra.mxu0 0
      %3017 = vmatprep.subr.bf16.mxu0 0
      %3018 = vmatpush1.bf16.msra.mxu0 0
      %3019 = vmatprep.mubr.bf16.mxu0 0
      %3020 = vmatmul.mubr.bf16.gmra.mrb[0].mxu0 %v2976
      %v3021 = vpop.f32.mrb[0].mxu0
      %v3022 = vadd.f32 0.0, %v3021
      %v3023 = vpop.f32.mrb[0].mxu0
      %v3024 = vpop.f32.mrb[0].mxu0
      %v3025 = vadd.f32 0.0, %v3024
      %v3026 = vpop.f32.mrb[0].mxu0
      %3027 = vmatprep.mubr.bf16.mxu0 0
      %3028 = vmatmul.mubr.bf16.gmra.mrb[0].mxu0 %v2979
      %v3029 = vpop.f32.mrb[0].mxu0
      %v3030 = vadd.f32 0.0, %v3029
      %v3031 = vpop.f32.mrb[0].mxu0
      %v3032 = vpop.f32.mrb[0].mxu0
      %v3033 = vadd.f32 0.0, %v3032
      %v3034 = vpop.f32.mrb[0].mxu0
      %3035 = vmatprep.mubr.bf16.mxu0 0
      %3036 = vmatmul.mubr.bf16.gmra.mrb[0].mxu0 %v2982
      %v3037 = vpop.f32.mrb[0].mxu0
      %v3038 = vadd.f32 0.0, %v3037
      %v3039 = vpop.f32.mrb[0].mxu0
      %v3040 = vpop.f32.mrb[0].mxu0
      %v3041 = vadd.f32 0.0, %v3040
      %v3042 = vpop.f32.mrb[0].mxu0
      %3043 = vmatprep.mubr.bf16.mxu0 0
      %3044 = vmatmul.mubr.bf16.gmra.mrb[0].mxu0 %v2985
      %v3045 = vpop.f32.mrb[0].mxu0
      %v3046 = vadd.f32 0.0, %v3045
      %v3047 = vpop.f32.mrb[0].mxu0
      %v3048 = vpop.f32.mrb[0].mxu0
      %v3049 = vadd.f32 0.0, %v3048
      %v3050 = vpop.f32.mrb[0].mxu0
      %3051 = vdwg.mxu0
      %v3052 = vadd.f32 %v2707, %v3022
      %v3053 = vadd.f32 %v2708, %v3025
      %v3054 = vadd.f32 %v2709, %v3030
      %v3055 = vadd.f32 %v2710, %v3033
      %v3056 = vadd.f32 %v2711, %v3038
      %v3057 = vadd.f32 %v2712, %v3041
      %v3058 = vadd.f32 %v2713, %v3046
      %v3059 = vadd.f32 %v2714, %v3049
      %v3060 = vld [vmem:[%s22] sm:$0x1]
      %v3062 = vlaneseq
      %v3063 = vshrl.u32 %v3062, 7
      %v3064 = vsub.s32 0, %v3063
      %v3065 = vrot.slane %v3060, %v3064
      %v3067 = vadd.f32 %v3052, %v3065
      %v3068 = vadd.f32 %v3053, %v3065
      %v3069 = vadd.f32 %v3054, %v3065
      %v3070 = vadd.f32 %v3055, %v3065
      %v3071 = vadd.f32 %v3056, %v3065
      %v3072 = vadd.f32 %v3057, %v3065
      %v3073 = vadd.f32 %v3058, %v3065
      %v3074 = vadd.f32 %v3059, %v3065
      %3075 = vst.msk [vmem:[%s710] sm:$0xff] %vm812, %v3067
      %3076 = vst.msk [vmem:[%s710 + $0x8] sm:$0xff] %vm812, %v3068
      %3077 = vst.msk [vmem:[%s710 + $0x10] sm:$0xff] %vm812, %v3069
      %3078 = vst.msk [vmem:[%s710 + $0x18] sm:$0xff] %vm812, %v3070
      %3079 = vst.msk [vmem:[%s710 + $0x20] sm:$0xff] %vm812, %v3071
      %3080 = vst.msk [vmem:[%s710 + $0x28] sm:$0xff] %vm812, %v3072
      %3081 = vst.msk [vmem:[%s710 + $0x30] sm:$0xff] %vm812, %v3073
      %3082 = vst.msk [vmem:[%s710 + $0x38] sm:$0xff] %vm812, %v3074
      %p3083 = scmp.lt.s32.totalorder %s34, 1
      %s3084 = scalar_select %p3083, %s34, 1
      %s3085 = smul.addr %s3084, 8
      %s3086 = smul.addr %s3085, 8
      %s3087 = scalar_lea.vmem %s23, %s3086
      // Predicated region
      $region113: #{a_call__.1} parent=111 // pred_check
        %p3088 = pneg %p540
      $region114: #{a_call__.1} parent=111 // pred_check_branch
        %3090 = sbr.rel (%p3088) target = $region116
      $region115: #{a_call__.1} parent=111 // pred_region
        _
      $region116: #{a_call__.1} parent=111 // pred_fallthru
        _
    $region112: #{a_call__.1} parent=5 // pred_fallthru
      _
    %p3091 = scmp.le.s32.totalorder 2, %s29
    // Predicated region
    $region117: #{a_call__.1} parent=5 // pred_check
      %p3092 = pneg %p3091
    $region118: #{a_call__.1} parent=5 // pred_check_branch
      %3094 = sbr.rel (%p3092) target = $region120
    $region119: #{a_call__.1} parent=5 // pred_region
      %s3095 = ssub.s32 %s29, 2
      // Predicated region
      $region121: #{a_call__.1} parent=119 // pred_check
        %p3096 = pneg %p546
      $region122: #{a_call__.1} parent=119 // pred_check_branch
        %3098 = sbr.rel (%p3096) target = $region124
      $region123: #{a_call__.1} parent=119 // pred_region
        %p3099 = scmp.lt.s32.totalorder %s35, 1
        %s3100 = scalar_select %p3099, %s35, 1
        %s3101 = smul.addr %s3100, 8
        %s3102 = smul.addr %s3101, 8
        %s3103 = scalar_lea.vmem %s23, %s3102
      $region124: #{a_call__.1} parent=119 // pred_fallthru
        _
    $region120: #{a_call__.1} parent=5 // pred_fallthru
      _
  $region6: #{a_call__.1} parent=0 // loop_footer
    %s33 = sadd.s32 1, %s29
  $region7: #{a_call__.1} parent=0 // loop_footer_branch
    %28 = sbr.rel target = $region3
  $region8: #{a_call__.1} parent=0 // loop_exit
    _

</llo_original>
